<compile_context>
chip_gen: v7x
topology: tpu7x:2x2x1
jax: 0.10.0
libtpu: 0.0.40
codegen_flags: <defaults>
</compile_context>

<pallas_src>
import functools
import math

import jax
import jax.numpy as jnp
from jax import lax
from jax.experimental import pallas as pl
from jax.experimental.pallas import tpu as pltpu


def _vmem_limit_bytes():
    """Per-generation scoped-VMEM budget: ~75% of physical, capped at 100 MiB.

    v5e/v6e (128 MiB physical) -> 96 MiB; v7x (64 MiB physical) -> 48 MiB.
    Falls back to a 48 MiB budget that is safe on every generation.
    """
    try:
        cap = int(pltpu.get_tpu_info().vmem_capacity_bytes)
    except Exception:
        cap = 64 * 1024 * 1024
    return int(min(cap * 3 // 4, 100 * 1024 * 1024))


def _conv_stats_kernel(x_ref, w_ref, conv_ref, stats_ref, *scratch,
                       k, th, wo, cin, ho, fuse_k):
    """One stride-1 conv tile + per-tile BN partial sums.

    x_ref:     (1, 1, th_in, wq, cin)  halo'd row block, bf16
    w_ref:     fuse_k: (k*k*cin, Cout_p) bf16   else: (k*k, cin, Cout_p) bf16
    conv_ref:  (th*wo, Cout_p) bf16 conv output tile
    stats_ref: (1, 2, Cout_p)  f32; row 0 = sum, row 1 = sum of squares
    scratch:   fuse_k: [VMEM (th, wo, k*k*cin) bf16 patch buffer]
    """
    tile_rows = th * wo
    cout_p = conv_ref.shape[-1]

    if fuse_k:
        # Small Cin: build the im2col patch in VMEM at static lane offsets
        # (no lane-axis vreg concat), then ONE deep-K MXU matmul.
        patch_ref = scratch[0]
        for kh in range(k):
            for kw in range(k):
                off = (kh * k + kw) * cin
                patch_ref[:, :, off:off + cin] = x_ref[0, 0, kh:kh + th, kw:kw + wo, :]
        patch = patch_ref[...].reshape(tile_rows, k * k * cin)
        acc = jnp.dot(patch, w_ref[...], preferred_element_type=jnp.float32)
    else:
        # Large Cin: k*k accumulating dots (K = Cin each), no patch assembly.
        acc = jnp.zeros((tile_rows, cout_p), jnp.float32)
        for kh in range(k):
            for kw in range(k):
                tap = x_ref[0, 0, kh:kh + th, kw:kw + wo, :].reshape(tile_rows, cin)
                acc = acc + jnp.dot(tap, w_ref[kh * k + kw],
                                    preferred_element_type=jnp.float32)

    # Mask output rows that only exist because of bottom row-block padding:
    # they must not contribute to the BN batch statistics (and are cropped
    # from the final output anyway).
    row0 = pl.program_id(1) * th
    limit = (ho - row0) * wo                       # first `limit` flat rows are real
    r = lax.broadcasted_iota(jnp.int32, (tile_rows, 1), 0)
    acc = jnp.where(r < limit, acc, 0.0)

    conv_ref[...] = acc.astype(conv_ref.dtype)     # bf16 writeback (half the bytes)
    s = jnp.sum(acc, axis=0, keepdims=True)        # (1, Cout_p) f32
    sq = jnp.sum(acc * acc, axis=0, keepdims=True)
    stats_ref[...] = jnp.concatenate([s, sq], axis=0)[None]


def _bn_relu_kernel(conv_ref, scale_ref, shift_ref, o_ref):
    """y = relu(conv * scale + shift); per-channel scale/shift, f32 math."""
    y = conv_ref[...].astype(jnp.float32) * scale_ref[...] + shift_ref[...]
    o_ref[...] = jnp.maximum(y, 0.0)


def convblock_forward(x_nchw, weight, gamma, beta, *, stride, padding, eps=1e-5):
    """relu(batchnorm(conv(x))), conv bias=False, BN uses current-batch statistics."""
    n, cin, h, w = x_nchw.shape
    cout, cin_w, k, k2 = weight.shape
    assert cin == cin_w and k == k2

    s = int(stride)
    p = int(padding)
    ho = (h + 2 * p - k) // s + 1
    wo = (w + 2 * p - k) // s + 1
    assert ho > 0 and wo > 0

    # Fold the stride into channels (space-to-depth) so the kernel is always a
    # stride-1 conv with contiguous taps (identity transform when s == 1).
    k_eff = -(-k // s)
    cin_eff = s * s * cin

    # Row-block size: target ~512 matmul rows per tile, th*wo a multiple of 8.
    step = 8 // math.gcd(wo, 8)
    th = max(step, (max(1, 512 // wo) // step) * step)
    th = min(th, -(-ho // step) * step)
    nb = -(-ho // th)
    tile_rows = th * wo
    th_in = th + k_eff - 1

    hq = nb * th + k_eff - 1        # stride-1 input rows needed (post-fold)
    wq = wo + k_eff - 1             # stride-1 input cols needed (post-fold)

    cout_p = -(-cout // 128) * 128  # lane-dense channel dim
    m_p = n * nb * tile_rows        # padded flat row count
    m_true = n * ho * wo            # true BN population size

    # NCHW -> NHWC, conv zero-padding (+ extra so every row block is in range).
    # TODO(synk): these full-tensor layout passes (transpose/pad/cast, and the
    # final NHWC->NCHW) are extra HBM round trips; accept/emit NHWC if the
    # surrounding model allows.
    x_nhwc = jnp.transpose(x_nchw, (0, 2, 3, 1))
    rows_needed = hq * s
    cols_needed = wq * s
    xp = jnp.pad(x_nhwc, ((0, 0),
                          (p, max(0, rows_needed - h - p)),
                          (p, max(0, cols_needed - w - p)),
                          (0, 0)))
    xp = xp[:, :rows_needed, :cols_needed, :]
    xs = xp.reshape(n, hq, s, wq, s, cin).transpose(0, 1, 3, 2, 4, 5)
    xs = xs.reshape(n, hq, wq, cin_eff)

    # Halo'd row blocks (N, nb, th_in, wq, cin_eff): per-step VMEM input is
    # proportional to th (not the whole image) and still pipelines via BlockSpec.
    row_idx = (jnp.arange(nb) * th)[:, None] + jnp.arange(th_in)[None, :]
    x_blocks = xs[:, row_idx].astype(jnp.bfloat16)

    # (Cout,Cin,kh,kw) -> (kh,kw,Cin,Cout), fold stride, pad Cout to 128.
    w_hwio = jnp.transpose(weight, (2, 3, 1, 0))
    ks = k_eff * s
    w_hwio = jnp.pad(w_hwio, ((0, ks - k), (0, ks - k), (0, 0), (0, 0)))
    w_hwio = w_hwio.reshape(k_eff, s, k_eff, s, cin, cout)
    w_hwio = w_hwio.transpose(0, 2, 1, 3, 4, 5).reshape(k_eff, k_eff, cin_eff, cout)
    w_hwio = jnp.pad(w_hwio, ((0, 0), (0, 0), (0, 0), (0, cout_p - cout)))

    fuse_k = cin_eff < 128
    if fuse_k:
        w_arg = w_hwio.reshape(k_eff * k_eff * cin_eff, cout_p).astype(jnp.bfloat16)
        w_spec = pl.BlockSpec((k_eff * k_eff * cin_eff, cout_p), lambda ni, bi: (0, 0))
        scratch = [pltpu.VMEM((th, wo, k_eff * k_eff * cin_eff), jnp.bfloat16)]
    else:
        w_arg = w_hwio.reshape(k_eff * k_eff, cin_eff, cout_p).astype(jnp.bfloat16)
        w_spec = pl.BlockSpec((k_eff * k_eff, cin_eff, cout_p), lambda ni, bi: (0, 0, 0))
        scratch = []

    vlim = _vmem_limit_bytes()

    kernel1 = functools.partial(_conv_stats_kernel, k=k_eff, th=th, wo=wo,
                                cin=cin_eff, ho=ho, fuse_k=fuse_k)
    conv_out, stats = pl.pallas_call(
        kernel1,
        out_shape=(jax.ShapeDtypeStruct((m_p, cout_p), jnp.bfloat16),
                   jax.ShapeDtypeStruct((n * nb, 2, cout_p), jnp.float32)),
        grid=(n, nb),
        in_specs=[
            pl.BlockSpec((1, 1, th_in, wq, cin_eff), lambda ni, bi: (ni, bi, 0, 0, 0)),
            w_spec,
        ],
        out_specs=(
            pl.BlockSpec((tile_rows, cout_p), lambda ni, bi: (ni * nb + bi, 0)),
            pl.BlockSpec((1, 2, cout_p), lambda ni, bi: (ni * nb + bi, 0, 0)),
        ),
        scratch_shapes=scratch,
        compiler_params=pltpu.CompilerParams(
            dimension_semantics=("parallel", "parallel"),
            vmem_limit_bytes=vlim),
    )(x_blocks, w_arg)

    # Tiny Cout-length fold of the per-tile partial stats -> BN affine, so pass 2
    # is a single fused multiply-add + ReLU per element.
    # (E[x^2]-E[x]^2 in f32: adequate for the bf16 regime; Welford if tighter
    # accuracy is ever needed.)
    ssum = jnp.sum(stats[:, 0, :], axis=0)
    ssq = jnp.sum(stats[:, 1, :], axis=0)
    mean = ssum / m_true
    var = jnp.maximum(ssq / m_true - mean * mean, 0.0)
    inv = lax.rsqrt(var + eps)
    gamma_p = jnp.pad(gamma.astype(jnp.float32), (0, cout_p - cout), constant_values=1.0)
    beta_p = jnp.pad(beta.astype(jnp.float32), (0, cout_p - cout))
    scale = (gamma_p * inv).reshape(1, cout_p)
    shift = (beta_p - mean * gamma_p * inv).reshape(1, cout_p)

    # TODO(synk): BatchNorm2d running_mean/running_var buffer updates (training-time
    # side effect) are not emitted; they do not affect the forward output.

    # Pass 2: stream bf16 conv -> f32 BN+ReLU; group row-blocks up to ~2048 rows/step.
    groups = n * nb
    g = max(1, min(groups, max(1, 2048 // tile_rows)))
    while groups % g:
        g -= 1
    block_rows2 = g * tile_rows

    out_flat = pl.pallas_call(
        _bn_relu_kernel,
        out_shape=jax.ShapeDtypeStruct((m_p, cout_p), jnp.float32),
        grid=(groups // g,),
        in_specs=[
            pl.BlockSpec((block_rows2, cout_p), lambda i: (i, 0)),
            pl.BlockSpec((1, cout_p), lambda i: (0, 0)),   # resident, not re-DMA'd
            pl.BlockSpec((1, cout_p), lambda i: (0, 0)),
        ],
        out_specs=pl.BlockSpec((block_rows2, cout_p), lambda i: (i, 0)),
        compiler_params=pltpu.CompilerParams(
            dimension_semantics=("parallel",),
            vmem_limit_bytes=vlim),
    )(conv_out, scale, shift)

    # (M_p, Cout_p) -> (N, nb*th, Wo, Cout_p) -> crop row/channel padding -> NCHW
    out = out_flat.reshape(n, nb * th, wo, cout_p)[:, :ho, :, :cout]
    return jnp.transpose(out, (0, 3, 1, 2))


if __name__ == "__main__":
    key = jax.random.PRNGKey(0)
    k_x, k_w = jax.random.split(key)

    # convblock(in_ch=4, out_ch=8, k=3, s=1, p=1) on x: (2, 4, 16, 16)
    N, Cin, H, W = 2, 4, 16, 16
    Cout, K, S, P = 8, 3, 1, 1
    EPS = 1e-5

    x = jax.random.normal(k_x, (N, Cin, H, W), dtype=jnp.float32)
    weight = jax.random.normal(k_w, (Cout, Cin, K, K), dtype=jnp.float32) * 0.1
    gamma = jnp.ones((Cout,), dtype=jnp.float32)   # BatchNorm2d default init
    beta = jnp.zeros((Cout,), dtype=jnp.float32)

    def reference(x, weight, gamma, beta, s, p, eps):
        conv = lax.conv_general_dilated(
            x, weight, window_strides=(s, s), padding=[(p, p), (p, p)],
            dimension_numbers=("NCHW", "OIHW", "NCHW"))
        mu = jnp.mean(conv, axis=(0, 2, 3), keepdims=True)
        va = jnp.var(conv, axis=(0, 2, 3), keepdims=True)
        co = weight.shape[0]
        return jnp.maximum((conv - mu) * lax.rsqrt(va + eps)
                           * gamma.reshape(1, co, 1, 1) + beta.reshape(1, co, 1, 1), 0.0)

    # Spec configuration (stride 1).
    out = convblock_forward(x, weight, gamma, beta, stride=S, padding=P, eps=EPS)
    out = jax.block_until_ready(out)
    assert out.shape == (N, Cout, H, W), out.shape
    assert bool(jnp.all(out >= 0.0))               # ReLU
    assert bool(jnp.all(jnp.isfinite(out)))
    ref = reference(x, weight, gamma, beta, S, P, EPS)
    assert bool(jnp.allclose(out, ref, atol=1e-1, rtol=1e-1))

    # Stride-2 configuration exercises the space-to-depth (stride-folding) path.
    out2 = convblock_forward(x, weight, gamma, beta, stride=2, padding=1, eps=EPS)
    out2 = jax.block_until_ready(out2)
    ref2 = reference(x, weight, gamma, beta, 2, 1, EPS)
    assert out2.shape == ref2.shape, (out2.shape, ref2.shape)
    assert bool(jnp.all(jnp.isfinite(out2)))
    assert bool(jnp.allclose(out2, ref2, atol=1e-1, rtol=1e-1))

    print("KERNEL_OK")
</pallas_src>

<mosaic_0001>
module attributes {stable_mosaic.version = 11 : i64} {
  func.func @_conv_stats_kernel(%arg0: i32, %arg1: i32, %arg2: memref<1x1x18x18x4xbf16, #tpu.memory_space<vmem>>, %arg3: memref<36x128xbf16, #tpu.memory_space<vmem>>, %arg4: memref<256x128xbf16, #tpu.memory_space<vmem>>, %arg5: memref<1x2x128xf32, #tpu.memory_space<vmem>>, %arg6: memref<16x16x36xbf16, #tpu.memory_space<vmem>>) attributes {dimension_semantics = [#tpu.dimension_semantics<parallel>, #tpu.dimension_semantics<parallel>], iteration_bounds = array<i64: 2, 1>, scalar_prefetch = 0 : i64, scratch_operands = 1 : i64, tpu.core_type = #tpu.core_type<tc>, window_params = [{transform_indices = @transform_0, window_bounds = array<i64: 1, 1, 18, 18, 4>}, {pipeline_mode = #tpu.pipeline_mode<synchronous>, transform_indices = @transform_1, window_bounds = array<i64: 36, 128>}, {transform_indices = @transform_2, window_bounds = array<i64: 256, 128>}, {transform_indices = @transform_3, window_bounds = array<i64: 1, 2, 128>}]} {
    %c0 = arith.constant 0 : index
    %c0_0 = arith.constant 0 : index
    %c0_1 = arith.constant 0 : index
    %c0_2 = arith.constant 0 : index
    %c0_3 = arith.constant 0 : index
    %0 = vector.load %arg2[%c0, %c0_0, %c0_1, %c0_2, %c0_3] : memref<1x1x18x18x4xbf16, #tpu.memory_space<vmem>>, vector<1x1x16x16x4xbf16>
    %1 = vector.shape_cast %0 : vector<1x1x16x16x4xbf16> to vector<16x16x4xbf16>
    %c0_4 = arith.constant 0 : index
    %c0_5 = arith.constant 0 : index
    %c0_6 = arith.constant 0 : index
    %2 = vector.load %arg6[%c0_4, %c0_5, %c0_6] : memref<16x16x36xbf16, #tpu.memory_space<vmem>>, vector<16x16x4xbf16>
    tpu.vector_store %arg6[%c0_4, %c0_5, %c0_6], %1 {strides = array<i32>} : memref<16x16x36xbf16, #tpu.memory_space<vmem>>, vector<16x16x4xbf16>,
    %c0_7 = arith.constant 0 : index
    %c0_8 = arith.constant 0 : index
    %c0_9 = arith.constant 0 : index
    %c1 = arith.constant 1 : index
    %c0_10 = arith.constant 0 : index
    %3 = vector.load %arg2[%c0_7, %c0_8, %c0_9, %c1, %c0_10] : memref<1x1x18x18x4xbf16, #tpu.memory_space<vmem>>, vector<1x1x16x16x4xbf16>
    %4 = vector.shape_cast %3 : vector<1x1x16x16x4xbf16> to vector<16x16x4xbf16>
    %c0_11 = arith.constant 0 : index
    %c0_12 = arith.constant 0 : index
    %c4 = arith.constant 4 : index
    %5 = vector.load %arg6[%c0_11, %c0_12, %c4] : memref<16x16x36xbf16, #tpu.memory_space<vmem>>, vector<16x16x4xbf16>
    tpu.vector_store %arg6[%c0_11, %c0_12, %c4], %4 {strides = array<i32>} : memref<16x16x36xbf16, #tpu.memory_space<vmem>>, vector<16x16x4xbf16>,
    %c0_13 = arith.constant 0 : index
    %c0_14 = arith.constant 0 : index
    %c0_15 = arith.constant 0 : index
    %c2 = arith.constant 2 : index
    %c0_16 = arith.constant 0 : index
    %6 = vector.load %arg2[%c0_13, %c0_14, %c0_15, %c2, %c0_16] : memref<1x1x18x18x4xbf16, #tpu.memory_space<vmem>>, vector<1x1x16x16x4xbf16>
    %7 = vector.shape_cast %6 : vector<1x1x16x16x4xbf16> to vector<16x16x4xbf16>
    %c0_17 = arith.constant 0 : index
    %c0_18 = arith.constant 0 : index
    %c8 = arith.constant 8 : index
    %8 = vector.load %arg6[%c0_17, %c0_18, %c8] : memref<16x16x36xbf16, #tpu.memory_space<vmem>>, vector<16x16x4xbf16>
    tpu.vector_store %arg6[%c0_17, %c0_18, %c8], %7 {strides = array<i32>} : memref<16x16x36xbf16, #tpu.memory_space<vmem>>, vector<16x16x4xbf16>,
    %c0_19 = arith.constant 0 : index
    %c0_20 = arith.constant 0 : index
    %c1_21 = arith.constant 1 : index
    %c0_22 = arith.constant 0 : index
    %c0_23 = arith.constant 0 : index
    %9 = vector.load %arg2[%c0_19, %c0_20, %c1_21, %c0_22, %c0_23] : memref<1x1x18x18x4xbf16, #tpu.memory_space<vmem>>, vector<1x1x16x16x4xbf16>
    %10 = vector.shape_cast %9 : vector<1x1x16x16x4xbf16> to vector<16x16x4xbf16>
    %c0_24 = arith.constant 0 : index
    %c0_25 = arith.constant 0 : index
    %c12 = arith.constant 12 : index
    %11 = vector.load %arg6[%c0_24, %c0_25, %c12] : memref<16x16x36xbf16, #tpu.memory_space<vmem>>, vector<16x16x4xbf16>
    tpu.vector_store %arg6[%c0_24, %c0_25, %c12], %10 {strides = array<i32>} : memref<16x16x36xbf16, #tpu.memory_space<vmem>>, vector<16x16x4xbf16>,
    %c0_26 = arith.constant 0 : index
    %c0_27 = arith.constant 0 : index
    %c1_28 = arith.constant 1 : index
    %c1_29 = arith.constant 1 : index
    %c0_30 = arith.constant 0 : index
    %12 = vector.load %arg2[%c0_26, %c0_27, %c1_28, %c1_29, %c0_30] : memref<1x1x18x18x4xbf16, #tpu.memory_space<vmem>>, vector<1x1x16x16x4xbf16>
    %13 = vector.shape_cast %12 : vector<1x1x16x16x4xbf16> to vector<16x16x4xbf16>
    %c0_31 = arith.constant 0 : index
    %c0_32 = arith.constant 0 : index
    %c16 = arith.constant 16 : index
    %14 = vector.load %arg6[%c0_31, %c0_32, %c16] : memref<16x16x36xbf16, #tpu.memory_space<vmem>>, vector<16x16x4xbf16>
    tpu.vector_store %arg6[%c0_31, %c0_32, %c16], %13 {strides = array<i32>} : memref<16x16x36xbf16, #tpu.memory_space<vmem>>, vector<16x16x4xbf16>,
    %c0_33 = arith.constant 0 : index
    %c0_34 = arith.constant 0 : index
    %c1_35 = arith.constant 1 : index
    %c2_36 = arith.constant 2 : index
    %c0_37 = arith.constant 0 : index
    %15 = vector.load %arg2[%c0_33, %c0_34, %c1_35, %c2_36, %c0_37] : memref<1x1x18x18x4xbf16, #tpu.memory_space<vmem>>, vector<1x1x16x16x4xbf16>
    %16 = vector.shape_cast %15 : vector<1x1x16x16x4xbf16> to vector<16x16x4xbf16>
    %c0_38 = arith.constant 0 : index
    %c0_39 = arith.constant 0 : index
    %c20 = arith.constant 20 : index
    %17 = vector.load %arg6[%c0_38, %c0_39, %c20] : memref<16x16x36xbf16, #tpu.memory_space<vmem>>, vector<16x16x4xbf16>
    tpu.vector_store %arg6[%c0_38, %c0_39, %c20], %16 {strides = array<i32>} : memref<16x16x36xbf16, #tpu.memory_space<vmem>>, vector<16x16x4xbf16>,
    %c0_40 = arith.constant 0 : index
    %c0_41 = arith.constant 0 : index
    %c2_42 = arith.constant 2 : index
    %c0_43 = arith.constant 0 : index
    %c0_44 = arith.constant 0 : index
    %18 = vector.load %arg2[%c0_40, %c0_41, %c2_42, %c0_43, %c0_44] : memref<1x1x18x18x4xbf16, #tpu.memory_space<vmem>>, vector<1x1x16x16x4xbf16>
    %19 = vector.shape_cast %18 : vector<1x1x16x16x4xbf16> to vector<16x16x4xbf16>
    %c0_45 = arith.constant 0 : index
    %c0_46 = arith.constant 0 : index
    %c24 = arith.constant 24 : index
    %20 = vector.load %arg6[%c0_45, %c0_46, %c24] : memref<16x16x36xbf16, #tpu.memory_space<vmem>>, vector<16x16x4xbf16>
    tpu.vector_store %arg6[%c0_45, %c0_46, %c24], %19 {strides = array<i32>} : memref<16x16x36xbf16, #tpu.memory_space<vmem>>, vector<16x16x4xbf16>,
    %c0_47 = arith.constant 0 : index
    %c0_48 = arith.constant 0 : index
    %c2_49 = arith.constant 2 : index
    %c1_50 = arith.constant 1 : index
    %c0_51 = arith.constant 0 : index
    %21 = vector.load %arg2[%c0_47, %c0_48, %c2_49, %c1_50, %c0_51] : memref<1x1x18x18x4xbf16, #tpu.memory_space<vmem>>, vector<1x1x16x16x4xbf16>
    %22 = vector.shape_cast %21 : vector<1x1x16x16x4xbf16> to vector<16x16x4xbf16>
    %c0_52 = arith.constant 0 : index
    %c0_53 = arith.constant 0 : index
    %c28 = arith.constant 28 : index
    %23 = vector.load %arg6[%c0_52, %c0_53, %c28] : memref<16x16x36xbf16, #tpu.memory_space<vmem>>, vector<16x16x4xbf16>
    tpu.vector_store %arg6[%c0_52, %c0_53, %c28], %22 {strides = array<i32>} : memref<16x16x36xbf16, #tpu.memory_space<vmem>>, vector<16x16x4xbf16>,
    %c0_54 = arith.constant 0 : index
    %c0_55 = arith.constant 0 : index
    %c2_56 = arith.constant 2 : index
    %c2_57 = arith.constant 2 : index
    %c0_58 = arith.constant 0 : index
    %24 = vector.load %arg2[%c0_54, %c0_55, %c2_56, %c2_57, %c0_58] : memref<1x1x18x18x4xbf16, #tpu.memory_space<vmem>>, vector<1x1x16x16x4xbf16>
    %25 = vector.shape_cast %24 : vector<1x1x16x16x4xbf16> to vector<16x16x4xbf16>
    %c0_59 = arith.constant 0 : index
    %c0_60 = arith.constant 0 : index
    %c32 = arith.constant 32 : index
    %26 = vector.load %arg6[%c0_59, %c0_60, %c32] : memref<16x16x36xbf16, #tpu.memory_space<vmem>>, vector<16x16x4xbf16>
    tpu.vector_store %arg6[%c0_59, %c0_60, %c32], %25 {strides = array<i32>} : memref<16x16x36xbf16, #tpu.memory_space<vmem>>, vector<16x16x4xbf16>,
    %c0_61 = arith.constant 0 : index
    %c0_62 = arith.constant 0 : index
    %c0_63 = arith.constant 0 : index
    %27 = vector.load %arg6[%c0_61, %c0_62, %c0_63] : memref<16x16x36xbf16, #tpu.memory_space<vmem>>, vector<16x16x36xbf16>
    %28 = vector.shape_cast %27 : vector<16x16x36xbf16> to vector<256x36xbf16>
    %c0_64 = arith.constant 0 : index
    %c0_65 = arith.constant 0 : index
    %29 = vector.load %arg3[%c0_64, %c0_65] : memref<36x128xbf16, #tpu.memory_space<vmem>>, vector<36x128xbf16>
    %cst = arith.constant dense<0.000000e+00> : vector<256x128xf32>
    %30 = tpu.matmul %28, %29, %cst {dimension_numbers = #tpu.dot_dimension_numbers<[1], [0], [0], [1], [0, 0, 1, 1], [], []>} : vector<256x36xbf16>, vector<36x128xbf16>, vector<256x128xf32> -> vector<256x128xf32>
    %c16_i32 = arith.constant 16 : i32
    %31 = arith.muli %arg1, %c16_i32 : i32
    %c16_i32_66 = arith.constant 16 : i32
    %32 = arith.subi %c16_i32_66, %31 : i32
    %c16_i32_67 = arith.constant 16 : i32
    %33 = arith.muli %32, %c16_i32_67 : i32
    %34 = tpu.iota {dimensions = array<i32: 0>} : vector<256x1xi32>
    %35 = vector.broadcast %33 : i32 to vector<256x1xi32>
    %36 = arith.cmpi slt, %34, %35 : vector<256x1xi32>
    %cst_68 = arith.constant 0.000000e+00 : f32
    %37 = vector.shape_cast %36 : vector<256x1xi1> to vector<256x1xi1>
    %38 = vector.broadcast %37 : vector<256x1xi1> to vector<256x128xi1>
    %39 = vector.broadcast %cst_68 : f32 to vector<256x128xf32>
    %40 = arith.select %38, %30, %39 : vector<256x128xi1>, vector<256x128xf32>
    %41 = arith.truncf %40 : vector<256x128xf32> to vector<256x128xbf16>
    %c0_69 = arith.constant 0 : index
    %c0_70 = arith.constant 0 : index
    %42 = vector.load %arg4[%c0_69, %c0_70] : memref<256x128xbf16, #tpu.memory_space<vmem>>, vector<256x128xbf16>
    tpu.vector_store %arg4[%c0_69, %c0_70], %41 {strides = array<i32>} : memref<256x128xbf16, #tpu.memory_space<vmem>>, vector<256x128xbf16>,
    %cst_71 = arith.constant dense<0.000000e+00> : vector<128xf32>
    %43 = vector.multi_reduction <add>, %40, %cst_71 [0] : vector<256x128xf32> to vector<128xf32>
    %44 = vector.shape_cast %43 : vector<128xf32> to vector<1x128xf32>
    %45 = arith.mulf %40, %40 : vector<256x128xf32>
    %cst_72 = arith.constant dense<0.000000e+00> : vector<128xf32>
    %46 = vector.multi_reduction <add>, %45, %cst_72 [0] : vector<256x128xf32> to vector<128xf32>
    %47 = vector.shape_cast %46 : vector<128xf32> to vector<1x128xf32>
    %48 = tpu.concatenate %44, %47 in 0 : vector<1x128xf32>, vector<1x128xf32> -> vector<2x128xf32>
    %49 = vector.shape_cast %48 : vector<2x128xf32> to vector<1x2x128xf32>
    %c0_73 = arith.constant 0 : index
    %c0_74 = arith.constant 0 : index
    %c0_75 = arith.constant 0 : index
    %50 = vector.load %arg5[%c0_73, %c0_74, %c0_75] : memref<1x2x128xf32, #tpu.memory_space<vmem>>, vector<1x2x128xf32>
    tpu.vector_store %arg5[%c0_73, %c0_74, %c0_75], %49 {strides = array<i32>} : memref<1x2x128xf32, #tpu.memory_space<vmem>>, vector<1x2x128xf32>,
    return
  }
  func.func @transform_0(%arg0: i32, %arg1: i32) -> (i32, i32, i32, i32, i32) {
    %c0_i32 = arith.constant 0 : i32
    %c0_i32_0 = arith.constant 0 : i32
    %c0_i32_1 = arith.constant 0 : i32
    %c0_i32_2 = arith.constant 0 : i32
    return %arg0, %arg1, %c0_i32, %c0_i32_0, %c0_i32_1 : i32, i32, i32, i32, i32
  }
  func.func @transform_1(%arg0: i32, %arg1: i32) -> (i32, i32) {
    %c0_i32 = arith.constant 0 : i32
    %c0_i32_0 = arith.constant 0 : i32
    %c0_i32_1 = arith.constant 0 : i32
    return %c0_i32, %c0_i32_0 : i32, i32
  }
  func.func @transform_2(%arg0: i32, %arg1: i32) -> (i32, i32) {
    %c1_i32 = arith.constant 1 : i32
    %0 = arith.muli %arg0, %c1_i32 : i32
    %1 = arith.addi %0, %arg1 : i32
    %c0_i32 = arith.constant 0 : i32
    %c0_i32_0 = arith.constant 0 : i32
    return %1, %c0_i32 : i32, i32
  }
  func.func @transform_3(%arg0: i32, %arg1: i32) -> (i32, i32, i32) {
    %c1_i32 = arith.constant 1 : i32
    %0 = arith.muli %arg0, %c1_i32 : i32
    %1 = arith.addi %0, %arg1 : i32
    %c0_i32 = arith.constant 0 : i32
    %c0_i32_0 = arith.constant 0 : i32
    %c0_i32_1 = arith.constant 0 : i32
    return %1, %c0_i32, %c0_i32_0 : i32, i32, i32
  }
}

</mosaic_0001>

<llo_original>
// kernel: tpu_custom_call.1
$region0: #{tpu_custom_call.1}
  #allocation0 [shape = 'u32[]', space=smem, size = 0x4, offset = 0x4, fixed_abs, tag = 'smem constant byte address 0x4 - core index']
  #allocation1 [shape = 'u32[144,128]{1,0:T(1,128)}', space=vmem, size = 0x12000, scoped, tag = 'internal scratch']
  #allocation2 [shape = 'bf16[16,16,36]{2,1,0:T(16,128)(2,1)}', space=vmem, size = 0x10000, scoped, tag = 'scratch operand']
  %s0 = inlined_call_operand.vmem [shape: bf16[2,1,18,18,4], index: 0, kind: input, shape index: {}]
  %s1 = inlined_call_operand.vmem [shape: bf16[36,128], index: 1, kind: input, shape index: {}]
  %s2 = inlined_call_operand.hbm [shape: bf16[512,128], index: 2, kind: output, shape index: {0}]
  %s3 = inlined_call_operand.hbm [shape: f32[2,2,128], index: 3, kind: output, shape index: {1}]
  %4 = xla_tuple %s2, %s3
  %s5 = sld [smem:[#allocation0]]
  $region49: #{tpu_custom_call.1} parent=0
    _
  %s7 = ssub.s32 1, %s5
  %s8 = scalar_select 0, %s7, %s5
  $region1: #{tpu_custom_call.1} parent=0
    #allocation3 [shape = 'u8[131072]{0}', space=vmem, size = 0x20000, scoped, tag = 'output window, operand 0']
    #allocation4 [shape = 's32[2]{0}', space=sflag, size = 0x8, scoped, tag = 'scoped memory for tpu_custom_call.1']
    #allocation5 [shape = 'u8[2048]{0}', space=vmem, size = 0x800, scoped, tag = 'output window, operand 1']
    #allocation6 [shape = 's32[2]{0}', space=sflag, size = 0x8, scoped, tag = 'scoped memory for tpu_custom_call.1']
    %9 = vsyncpa [#allocation4], 0
    %s10 = scalar_lea.sflag [#allocation4], 1
    %11 = vsyncpa %s10, 0
    %12 = vsyncpa [#allocation6], 0
    %s13 = scalar_lea.sflag [#allocation6], 1
    %14 = vsyncpa %s13, 0
    loop: start=0, step=1, limit=4
    $region2: #{tpu_custom_call.1} parent=1 // loop_pre_header
      _
    $region3: #{tpu_custom_call.1} parent=1 // loop_header
      %s16 = sphi 0, %s20
      %p17 = scmp.ge.s32.totalorder %s16, 4
      %s23 = sphi 0, %s35
      %s24 = sphi 0, %s31
      %s25 = sphi 0, %s23
      %s26 = sphi 0, %s24
      %s27 = sphi 0, %s25
      %s28 = sphi 0, %s26
      %s40 = sphi 0, %s42
      %s43 = sphi 0, %s40
      %s44 = sphi 0, %s43
      %s60 = sphi 0, %s44
      %s64 = sphi 0, %s64
      %s66 = sphi 0, %s64
      %s67 = sphi 0, %s66
      %s81 = sphi 0, %s67
      %s89 = sphi 0, %s91
      %s92 = sphi 0, %s89
      %s93 = sphi 0, %s92
      %s109 = sphi 0, %s93
      %s117 = sphi 0, %s119
      %s120 = sphi 0, %s117
      %s121 = sphi 0, %s120
      %s137 = sphi 0, %s121
    $region4: #{tpu_custom_call.1} parent=1 // loop_header_branch
      %19 = sbr.rel (%p17) target = $region8
    $region5: #{tpu_custom_call.1} parent=1 // loop_body
      %s21 = ssub.s32 %s16, 1
      %s22 = ssub.s32 %s16, 2
      %s29 = sadd.s32 1, %s24
      %p30 = scmp.ge.s32.totalorder %s29, 1
      %s31 = scalar_select %p30, 0, %s29
      %s32 = sadd.s32 1, %s23
      %s33 = scalar_select %p30, %s32, %s23
      %p34 = scmp.ge.s32.totalorder %s33, 2
      %s35 = scalar_select %p34, 0, %s33
      %s36 = ssub.s32 %s23, %s35
      %s37 = ssub.s32 %s24, %s31
      %s38 = sor.u32 %s36, %s37
      %p39 = scmp.eq.s32.totalorder %s38, 0
      %s41 = sadd.s32 %s40, 1
      %s42 = scalar_select %p39, %s40, %s41
      %p45 = pneg %p39
      %p46 = scmp.eq.s32.totalorder %s16, 1
      %p47 = por %p45, %p46
      %p48 = scmp.ne.s32.totalorder %s40, %s43
      %p49 = scmp.eq.s32.totalorder %s16, 0
      %p50 = por %p48, %p49
      %p51 = scmp.ne.s32.totalorder %s40, %s43
      %p52 = scmp.eq.s32.totalorder %s21, 1
      %p53 = por %p51, %p52
      %p54 = scmp.ne.s32.totalorder %s43, %s44
      %p55 = scmp.eq.s32.totalorder %s21, 0
      %p56 = por %p54, %p55
      %p57 = scmp.ne.s32.totalorder %s43, %s44
      %p58 = scmp.eq.s32.totalorder %s22, 1
      %p59 = por %p57, %p58
      %p61 = scmp.ne.s32.totalorder %s44, %s60
      %p62 = scmp.eq.s32.totalorder %s22, 0
      %p63 = por %p61, %p62
      %s65 = sadd.s32 %s64, 1
      %p68 = scmp.eq.s32.totalorder %s16, 1
      %p69 = scmp.ne.s32.totalorder %s64, %s66
      %p70 = scmp.eq.s32.totalorder %s16, 0
      %p71 = por %p69, %p70
      %p72 = scmp.ne.s32.totalorder %s64, %s66
      %p73 = scmp.eq.s32.totalorder %s21, 1
      %p74 = por %p72, %p73
      %p75 = scmp.ne.s32.totalorder %s66, %s67
      %p76 = scmp.eq.s32.totalorder %s21, 0
      %p77 = por %p75, %p76
      %p78 = scmp.ne.s32.totalorder %s66, %s67
      %p79 = scmp.eq.s32.totalorder %s22, 1
      %p80 = por %p78, %p79
      %p82 = scmp.ne.s32.totalorder %s67, %s81
      %p83 = scmp.eq.s32.totalorder %s22, 0
      %p84 = por %p82, %p83
      %s85 = sadd.s32 %s23, %s24
      %s86 = sadd.s32 %s35, %s31
      %s87 = ssub.s32 %s85, %s86
      %p88 = scmp.eq.s32.totalorder %s87, 0
      %s90 = sadd.s32 %s89, 1
      %s91 = scalar_select %p88, %s89, %s90
      %p94 = pneg %p88
      %p95 = scmp.eq.s32.totalorder %s16, 1
      %p96 = por %p94, %p95
      %p97 = scmp.ne.s32.totalorder %s89, %s92
      %p98 = scmp.eq.s32.totalorder %s16, 0
      %p99 = por %p97, %p98
      %p100 = scmp.ne.s32.totalorder %s89, %s92
      %p101 = scmp.eq.s32.totalorder %s21, 1
      %p102 = por %p100, %p101
      %p103 = scmp.ne.s32.totalorder %s92, %s93
      %p104 = scmp.eq.s32.totalorder %s21, 0
      %p105 = por %p103, %p104
      %p106 = scmp.ne.s32.totalorder %s92, %s93
      %p107 = scmp.eq.s32.totalorder %s22, 1
      %p108 = por %p106, %p107
      %p110 = scmp.ne.s32.totalorder %s93, %s109
      %p111 = scmp.eq.s32.totalorder %s22, 0
      %p112 = por %p110, %p111
      %s113 = sadd.s32 %s23, %s24
      %s114 = sadd.s32 %s35, %s31
      %s115 = ssub.s32 %s113, %s114
      %p116 = scmp.eq.s32.totalorder %s115, 0
      %s118 = sadd.s32 %s117, 1
      %s119 = scalar_select %p116, %s117, %s118
      %p122 = pneg %p116
      %p123 = scmp.eq.s32.totalorder %s16, 1
      %p124 = por %p122, %p123
      %p125 = scmp.ne.s32.totalorder %s117, %s120
      %p126 = scmp.eq.s32.totalorder %s16, 0
      %p127 = por %p125, %p126
      %p128 = scmp.ne.s32.totalorder %s117, %s120
      %p129 = scmp.eq.s32.totalorder %s21, 1
      %p130 = por %p128, %p129
      %p131 = scmp.ne.s32.totalorder %s120, %s121
      %p132 = scmp.eq.s32.totalorder %s21, 0
      %p133 = por %p131, %p132
      %p134 = scmp.ne.s32.totalorder %s120, %s121
      %p135 = scmp.eq.s32.totalorder %s22, 1
      %p136 = por %p134, %p135
      %p138 = scmp.ne.s32.totalorder %s121, %s137
      %p139 = scmp.eq.s32.totalorder %s22, 0
      %p140 = por %p138, %p139
      %p141 = scmp.le.s32.totalorder 1, %s16
      %p142 = scmp.lt.s32.totalorder %s16, 3
      %p143 = pnand %p141, %p142
      %p144 = pneg %p143
      // Predicated region
      $region9: #{tpu_custom_call.1} parent=5 // pred_check
        _
      $region10: #{tpu_custom_call.1} parent=5 // pred_check_branch
        %146 = sbr.rel (%p143) target = $region12
      $region11: #{tpu_custom_call.1} parent=5 // pred_region
        %s147 = ssub.s32 %s16, 1
        // Predicated region
        $region13: #{tpu_custom_call.1} parent=11 // pred_check
          %p148 = pneg %p77
        $region14: #{tpu_custom_call.1} parent=11 // pred_check_branch
          %150 = sbr.rel (%p148) target = $region16
        $region15: #{tpu_custom_call.1} parent=11 // pred_region
          _
        $region16: #{tpu_custom_call.1} parent=11 // pred_fallthru
          _
      $region12: #{tpu_custom_call.1} parent=5 // pred_fallthru
        _
      %p151 = scmp.lt.s32.totalorder %s16, 2
      // Predicated region
      $region17: #{tpu_custom_call.1} parent=5 // pred_check
        %p152 = pneg %p151
      $region18: #{tpu_custom_call.1} parent=5 // pred_check_branch
        %154 = sbr.rel (%p152) target = $region20
      $region19: #{tpu_custom_call.1} parent=5 // pred_region
        // Predicated region
        $region21: #{tpu_custom_call.1} parent=19 // pred_check
          %p155 = pneg %p50
        $region22: #{tpu_custom_call.1} parent=19 // pred_check_branch
          %157 = sbr.rel (%p155) target = $region24
        $region23: #{tpu_custom_call.1} parent=19 // pred_region
          %p158 = scmp.lt.s32.totalorder %s23, 1
          %s159 = scalar_select %p158, %s23, 1
          %p160 = scmp.lt.s32.totalorder %s24, 0
          %s161 = scalar_select %p160, %s24, 0
          %s162 = smul.addr %s161, 54
          %s163 = smul.addr %s159, 54
          %s164 = sadd.s32 %s162, %s163
          %s165 = smul.addr %s164, 4
          %s166 = scalar_lea.vmem %s0, %s165
        $region24: #{tpu_custom_call.1} parent=19 // pred_fallthru
          _
      $region20: #{tpu_custom_call.1} parent=5 // pred_fallthru
        _
      %p167 = scmp.le.s32.totalorder 1, %s16
      %p168 = scmp.lt.s32.totalorder %s16, 3
      %p169 = pnand %p167, %p168
      %p170 = pneg %p169
      // Predicated region
      $region25: #{tpu_custom_call.1} parent=5 // pred_check
        _
      $region26: #{tpu_custom_call.1} parent=5 // pred_check_branch
        %172 = sbr.rel (%p169) target = $region28
      $region27: #{tpu_custom_call.1} parent=5 // pred_region
        %s173 = ssub.s32 %s16, 1
        %p174 = scmp.lt.s32.totalorder %s25, 1
        %s175 = scalar_select %p174, %s25, 1
        %p176 = scmp.lt.s32.totalorder %s26, 0
        %s177 = scalar_select %p176, %s26, 0
        %s178 = smul.addr %s177, 54
        %s179 = smul.addr %s175, 54
        %s180 = sadd.s32 %s178, %s179
        %s181 = smul.addr %s180, 4
        %s182 = scalar_lea.vmem %s0, %s181
        %p183 = pneg %p56
        %p184 = pneg %p53
        %p185 = pneg %p77
        %p186 = pneg %p74
        %p187 = pneg %p105
        %p188 = pneg %p102
        %s189 = sand.u32 %s92, 1
        %s190 = scalar_lea.sflag [#allocation4], %s189
        %s191 = sand.u32 %s92, 1
        %s192 = smul.addr %s191, 128
        %s193 = scalar_lea.vmem [#allocation3], %s192
        %p194 = pneg %p133
        %p195 = pneg %p130
        %s196 = sand.u32 %s120, 1
        %s197 = scalar_lea.sflag [#allocation6], %s196
        %s198 = sand.u32 %s120, 1
        %s199 = smul.addr %s198, 2
        %s200 = scalar_lea.vmem [#allocation5], %s199
        %p201 = scmp.lt.s32.totalorder %s25, 1
        %s202 = scalar_select %p201, %s25, 1
        %p203 = scmp.lt.s32.totalorder %s26, 0
        %s204 = scalar_select %p203, %s26, 0
        %s205 = smul.addr %s204, 54
        %s206 = smul.addr %s202, 54
        %s207 = sadd.s32 %s205, %s206
        %s208 = smul.addr %s207, 4
        %s209 = scalar_lea.vmem %s0, %s208
        %s210 = sadd.s32 %s25, %s26
        %s211 = smul.u32 32, %s210
        %s212 = sadd.s32 %s25, %s26
        %v214 = vld [vmem:[%s209] sm:$0xf]
        %v215 = vld [vmem:[%s209 + $0x4] sm:$0xf]
        %v216 = vld [vmem:[%s209 + $0xc] sm:$0xf]
        %v217 = vld [vmem:[%s209 + $0x10] sm:$0xf]
        %v218 = vld [vmem:[%s209 + $0x18] sm:$0xf]
        %v219 = vld [vmem:[%s209 + $0x1c] sm:$0xf]
        %v220 = vld [vmem:[%s209 + $0x24] sm:$0xf]
        %v221 = vld [vmem:[%s209 + $0x28] sm:$0xf]
        %v222 = vld [vmem:[%s209 + $0x30] sm:$0xf]
        %v223 = vld [vmem:[%s209 + $0x34] sm:$0xf]
        %v224 = vld [vmem:[%s209 + $0x3c] sm:$0xf]
        %v225 = vld [vmem:[%s209 + $0x40] sm:$0xf]
        %v226 = vld [vmem:[%s209 + $0x48] sm:$0xf]
        %v227 = vld [vmem:[%s209 + $0x4c] sm:$0xf]
        %v228 = vld [vmem:[%s209 + $0x54] sm:$0xf]
        %v229 = vld [vmem:[%s209 + $0x58] sm:$0xf]
        %v230 = vld [vmem:[%s209 + $0x60] sm:$0xf]
        %v231 = vld [vmem:[%s209 + $0x64] sm:$0xf]
        %v232 = vld [vmem:[%s209 + $0x6c] sm:$0xf]
        %v233 = vld [vmem:[%s209 + $0x70] sm:$0xf]
        %v234 = vld [vmem:[%s209 + $0x78] sm:$0xf]
        %v235 = vld [vmem:[%s209 + $0x7c] sm:$0xf]
        %v236 = vld [vmem:[%s209 + $0x84] sm:$0xf]
        %v237 = vld [vmem:[%s209 + $0x88] sm:$0xf]
        %v238 = vld [vmem:[%s209 + $0x90] sm:$0xf]
        %v239 = vld [vmem:[%s209 + $0x94] sm:$0xf]
        %v240 = vld [vmem:[%s209 + $0x9c] sm:$0xf]
        %v241 = vld [vmem:[%s209 + $0xa0] sm:$0xf]
        %v242 = vld [vmem:[%s209 + $0xa8] sm:$0xf]
        %v243 = vld [vmem:[%s209 + $0xac] sm:$0xf]
        %v244 = vld [vmem:[%s209 + $0xb4] sm:$0xf]
        %v245 = vld [vmem:[%s209 + $0xb8] sm:$0xf]
        %v278 = vunpack.c.l.b16 %v214
        %v279 = vunpack.c.l.b16 %v215
        %v280 = vunpack.c.l.b16 %v216
        %v281 = vunpack.c.l.b16 %v217
        %v282 = vunpack.c.l.b16 %v218
        %v283 = vunpack.c.l.b16 %v219
        %v284 = vunpack.c.l.b16 %v220
        %v285 = vunpack.c.l.b16 %v221
        %v286 = vunpack.c.l.b16 %v222
        %v287 = vunpack.c.l.b16 %v223
        %v288 = vunpack.c.l.b16 %v224
        %v289 = vunpack.c.l.b16 %v225
        %v290 = vunpack.c.l.b16 %v226
        %v291 = vunpack.c.l.b16 %v227
        %v292 = vunpack.c.l.b16 %v228
        %v293 = vunpack.c.l.b16 %v229
        %v294 = vunpack.c.l.b16 %v230
        %v295 = vunpack.c.l.b16 %v231
        %v296 = vunpack.c.l.b16 %v232
        %v297 = vunpack.c.l.b16 %v233
        %v298 = vunpack.c.l.b16 %v234
        %v299 = vunpack.c.l.b16 %v235
        %v300 = vunpack.c.l.b16 %v236
        %v301 = vunpack.c.l.b16 %v237
        %v302 = vunpack.c.l.b16 %v238
        %v303 = vunpack.c.l.b16 %v239
        %v304 = vunpack.c.l.b16 %v240
        %v305 = vunpack.c.l.b16 %v241
        %v306 = vunpack.c.l.b16 %v242
        %v307 = vunpack.c.l.b16 %v243
        %v308 = vunpack.c.l.b16 %v244
        %v309 = vunpack.c.l.b16 %v245
        %v310 = vpack.c.b16 %v279, %v278
        %v311 = vpack.c.b16 %v281, %v280
        %v312 = vpack.c.b16 %v283, %v282
        %v313 = vpack.c.b16 %v285, %v284
        %v314 = vpack.c.b16 %v287, %v286
        %v315 = vpack.c.b16 %v289, %v288
        %v316 = vpack.c.b16 %v291, %v290
        %v317 = vpack.c.b16 %v293, %v292
        %v318 = vpack.c.b16 %v295, %v294
        %v319 = vpack.c.b16 %v297, %v296
        %v320 = vpack.c.b16 %v299, %v298
        %v321 = vpack.c.b16 %v301, %v300
        %v322 = vpack.c.b16 %v303, %v302
        %v323 = vpack.c.b16 %v305, %v304
        %v324 = vpack.c.b16 %v307, %v306
        %v325 = vpack.c.b16 %v309, %v308
        %vm342 = vcmask 31744
        %343 = vst.msk [vmem:[#allocation2] sm:$0xff] %vm342, %v310
        %344 = vst.msk [vmem:[#allocation2 + $0x8] sm:$0xff] %vm342, %v311
        %345 = vst.msk [vmem:[#allocation2 + $0x10] sm:$0xff] %vm342, %v312
        %346 = vst.msk [vmem:[#allocation2 + $0x18] sm:$0xff] %vm342, %v313
        %347 = vst.msk [vmem:[#allocation2 + $0x20] sm:$0xff] %vm342, %v314
        %348 = vst.msk [vmem:[#allocation2 + $0x28] sm:$0xff] %vm342, %v315
        %349 = vst.msk [vmem:[#allocation2 + $0x30] sm:$0xff] %vm342, %v316
        %350 = vst.msk [vmem:[#allocation2 + $0x38] sm:$0xff] %vm342, %v317
        %351 = vst.msk [vmem:[#allocation2 + $0x40] sm:$0xff] %vm342, %v318
        %352 = vst.msk [vmem:[#allocation2 + $0x48] sm:$0xff] %vm342, %v319
        %353 = vst.msk [vmem:[#allocation2 + $0x50] sm:$0xff] %vm342, %v320
        %354 = vst.msk [vmem:[#allocation2 + $0x58] sm:$0xff] %vm342, %v321
        %355 = vst.msk [vmem:[#allocation2 + $0x60] sm:$0xff] %vm342, %v322
        %356 = vst.msk [vmem:[#allocation2 + $0x68] sm:$0xff] %vm342, %v323
        %357 = vst.msk [vmem:[#allocation2 + $0x70] sm:$0xff] %vm342, %v324
        %358 = vst.msk [vmem:[#allocation2 + $0x78] sm:$0xff] %vm342, %v325
        %v359 = vld [vmem:[%s209] sm:$0xf]
        %v360 = vld [vmem:[%s209 + $0x4] sm:$0xf]
        %v361 = vld [vmem:[%s209 + $0x8] sm:$0x1]
        %v362 = vld [vmem:[%s209 + $0xc] sm:$0xf]
        %v363 = vld [vmem:[%s209 + $0x10] sm:$0xf]
        %v364 = vld [vmem:[%s209 + $0x14] sm:$0x1]
        %v365 = vld [vmem:[%s209 + $0x18] sm:$0xf]
        %v366 = vld [vmem:[%s209 + $0x1c] sm:$0xf]
        %v367 = vld [vmem:[%s209 + $0x20] sm:$0x1]
        %v368 = vld [vmem:[%s209 + $0x24] sm:$0xf]
        %v369 = vld [vmem:[%s209 + $0x28] sm:$0xf]
        %v370 = vld [vmem:[%s209 + $0x2c] sm:$0x1]
        %v371 = vld [vmem:[%s209 + $0x30] sm:$0xf]
        %v372 = vld [vmem:[%s209 + $0x34] sm:$0xf]
        %v373 = vld [vmem:[%s209 + $0x38] sm:$0x1]
        %v374 = vld [vmem:[%s209 + $0x3c] sm:$0xf]
        %v375 = vld [vmem:[%s209 + $0x40] sm:$0xf]
        %v376 = vld [vmem:[%s209 + $0x44] sm:$0x1]
        %v377 = vld [vmem:[%s209 + $0x48] sm:$0xf]
        %v378 = vld [vmem:[%s209 + $0x4c] sm:$0xf]
        %v379 = vld [vmem:[%s209 + $0x50] sm:$0x1]
        %v380 = vld [vmem:[%s209 + $0x54] sm:$0xf]
        %v381 = vld [vmem:[%s209 + $0x58] sm:$0xf]
        %v382 = vld [vmem:[%s209 + $0x5c] sm:$0x1]
        %v383 = vld [vmem:[%s209 + $0x60] sm:$0xf]
        %v384 = vld [vmem:[%s209 + $0x64] sm:$0xf]
        %v385 = vld [vmem:[%s209 + $0x68] sm:$0x1]
        %v386 = vld [vmem:[%s209 + $0x6c] sm:$0xf]
        %v387 = vld [vmem:[%s209 + $0x70] sm:$0xf]
        %v388 = vld [vmem:[%s209 + $0x74] sm:$0x1]
        %v389 = vld [vmem:[%s209 + $0x78] sm:$0xf]
        %v390 = vld [vmem:[%s209 + $0x7c] sm:$0xf]
        %v391 = vld [vmem:[%s209 + $0x80] sm:$0x1]
        %v392 = vld [vmem:[%s209 + $0x84] sm:$0xf]
        %v393 = vld [vmem:[%s209 + $0x88] sm:$0xf]
        %v394 = vld [vmem:[%s209 + $0x8c] sm:$0x1]
        %v395 = vld [vmem:[%s209 + $0x90] sm:$0xf]
        %v396 = vld [vmem:[%s209 + $0x94] sm:$0xf]
        %v397 = vld [vmem:[%s209 + $0x98] sm:$0x1]
        %v398 = vld [vmem:[%s209 + $0x9c] sm:$0xf]
        %v399 = vld [vmem:[%s209 + $0xa0] sm:$0xf]
        %v400 = vld [vmem:[%s209 + $0xa4] sm:$0x1]
        %v401 = vld [vmem:[%s209 + $0xa8] sm:$0xf]
        %v402 = vld [vmem:[%s209 + $0xac] sm:$0xf]
        %v403 = vld [vmem:[%s209 + $0xb0] sm:$0x1]
        %v404 = vld [vmem:[%s209 + $0xb4] sm:$0xf]
        %v405 = vld [vmem:[%s209 + $0xb8] sm:$0xf]
        %v406 = vld [vmem:[%s209 + $0xbc] sm:$0x1]
        %v455 = vunpack.c.l.b16 %v359
        %v456 = vunpack.c.l.b16 %v360
        %v457 = vunpack.c.l.b16 %v361
        %v458 = vunpack.c.l.b16 %v362
        %v459 = vunpack.c.l.b16 %v363
        %v460 = vunpack.c.l.b16 %v364
        %v461 = vunpack.c.l.b16 %v365
        %v462 = vunpack.c.l.b16 %v366
        %v463 = vunpack.c.l.b16 %v367
        %v464 = vunpack.c.l.b16 %v368
        %v465 = vunpack.c.l.b16 %v369
        %v466 = vunpack.c.l.b16 %v370
        %v467 = vunpack.c.l.b16 %v371
        %v468 = vunpack.c.l.b16 %v372
        %v469 = vunpack.c.l.b16 %v373
        %v470 = vunpack.c.l.b16 %v374
        %v471 = vunpack.c.l.b16 %v375
        %v472 = vunpack.c.l.b16 %v376
        %v473 = vunpack.c.l.b16 %v377
        %v474 = vunpack.c.l.b16 %v378
        %v475 = vunpack.c.l.b16 %v379
        %v476 = vunpack.c.l.b16 %v380
        %v477 = vunpack.c.l.b16 %v381
        %v478 = vunpack.c.l.b16 %v382
        %v479 = vunpack.c.l.b16 %v383
        %v480 = vunpack.c.l.b16 %v384
        %v481 = vunpack.c.l.b16 %v385
        %v482 = vunpack.c.l.b16 %v386
        %v483 = vunpack.c.l.b16 %v387
        %v484 = vunpack.c.l.b16 %v388
        %v485 = vunpack.c.l.b16 %v389
        %v486 = vunpack.c.l.b16 %v390
        %v487 = vunpack.c.l.b16 %v391
        %v488 = vunpack.c.l.b16 %v392
        %v489 = vunpack.c.l.b16 %v393
        %v490 = vunpack.c.l.b16 %v394
        %v491 = vunpack.c.l.b16 %v395
        %v492 = vunpack.c.l.b16 %v396
        %v493 = vunpack.c.l.b16 %v397
        %v494 = vunpack.c.l.b16 %v398
        %v495 = vunpack.c.l.b16 %v399
        %v496 = vunpack.c.l.b16 %v400
        %v497 = vunpack.c.l.b16 %v401
        %v498 = vunpack.c.l.b16 %v402
        %v499 = vunpack.c.l.b16 %v403
        %v500 = vunpack.c.l.b16 %v404
        %v501 = vunpack.c.l.b16 %v405
        %v502 = vunpack.c.l.b16 %v406
        %v503 = vpack.c.b16 %v456, %v455
        %v504 = vpack.c.b16 %v457, %v457
        %v505 = vpack.c.b16 %v459, %v458
        %v506 = vpack.c.b16 %v460, %v460
        %v507 = vpack.c.b16 %v462, %v461
        %v508 = vpack.c.b16 %v463, %v463
        %v509 = vpack.c.b16 %v465, %v464
        %v510 = vpack.c.b16 %v466, %v466
        %v511 = vpack.c.b16 %v468, %v467
        %v512 = vpack.c.b16 %v469, %v469
        %v513 = vpack.c.b16 %v471, %v470
        %v514 = vpack.c.b16 %v472, %v472
        %v515 = vpack.c.b16 %v474, %v473
        %v516 = vpack.c.b16 %v475, %v475
        %v517 = vpack.c.b16 %v477, %v476
        %v518 = vpack.c.b16 %v478, %v478
        %v519 = vpack.c.b16 %v480, %v479
        %v520 = vpack.c.b16 %v481, %v481
        %v521 = vpack.c.b16 %v483, %v482
        %v522 = vpack.c.b16 %v484, %v484
        %v523 = vpack.c.b16 %v486, %v485
        %v524 = vpack.c.b16 %v487, %v487
        %v525 = vpack.c.b16 %v489, %v488
        %v526 = vpack.c.b16 %v490, %v490
        %v527 = vpack.c.b16 %v492, %v491
        %v528 = vpack.c.b16 %v493, %v493
        %v529 = vpack.c.b16 %v495, %v494
        %v530 = vpack.c.b16 %v496, %v496
        %v531 = vpack.c.b16 %v498, %v497
        %v532 = vpack.c.b16 %v499, %v499
        %v533 = vpack.c.b16 %v501, %v500
        %v534 = vpack.c.b16 %v502, %v502
        %vm535 = vsmask.f32 7424
        %v537 = vshrl.u32 %v503, 16
        %v539 = vshll.u32 %v503, 16
        %v541 = vrot.slane %v539, 1
        %v542 = vor.u32 %v537, %v541
        %v544 = vshll.u32 %v504, 16
        %v546 = vrot.slane %v544, 1
        %v547 = vsel %vm535, %v542, %v546
        %v549 = vshrl.u32 %v505, 16
        %v551 = vshll.u32 %v505, 16
        %v553 = vrot.slane %v551, 1
        %v554 = vor.u32 %v549, %v553
        %v556 = vshll.u32 %v506, 16
        %v558 = vrot.slane %v556, 1
        %v559 = vsel %vm535, %v554, %v558
        %v561 = vshrl.u32 %v507, 16
        %v563 = vshll.u32 %v507, 16
        %v565 = vrot.slane %v563, 1
        %v566 = vor.u32 %v561, %v565
        %v568 = vshll.u32 %v508, 16
        %v570 = vrot.slane %v568, 1
        %v571 = vsel %vm535, %v566, %v570
        %v573 = vshrl.u32 %v509, 16
        %v575 = vshll.u32 %v509, 16
        %v577 = vrot.slane %v575, 1
        %v578 = vor.u32 %v573, %v577
        %v580 = vshll.u32 %v510, 16
        %v582 = vrot.slane %v580, 1
        %v583 = vsel %vm535, %v578, %v582
        %v585 = vshrl.u32 %v511, 16
        %v587 = vshll.u32 %v511, 16
        %v589 = vrot.slane %v587, 1
        %v590 = vor.u32 %v585, %v589
        %v592 = vshll.u32 %v512, 16
        %v594 = vrot.slane %v592, 1
        %v595 = vsel %vm535, %v590, %v594
        %v597 = vshrl.u32 %v513, 16
        %v599 = vshll.u32 %v513, 16
        %v601 = vrot.slane %v599, 1
        %v602 = vor.u32 %v597, %v601
        %v604 = vshll.u32 %v514, 16
        %v606 = vrot.slane %v604, 1
        %v607 = vsel %vm535, %v602, %v606
        %v609 = vshrl.u32 %v515, 16
        %v611 = vshll.u32 %v515, 16
        %v613 = vrot.slane %v611, 1
        %v614 = vor.u32 %v609, %v613
        %v616 = vshll.u32 %v516, 16
        %v618 = vrot.slane %v616, 1
        %v619 = vsel %vm535, %v614, %v618
        %v621 = vshrl.u32 %v517, 16
        %v623 = vshll.u32 %v517, 16
        %v625 = vrot.slane %v623, 1
        %v626 = vor.u32 %v621, %v625
        %v628 = vshll.u32 %v518, 16
        %v630 = vrot.slane %v628, 1
        %v631 = vsel %vm535, %v626, %v630
        %v633 = vshrl.u32 %v519, 16
        %v635 = vshll.u32 %v519, 16
        %v637 = vrot.slane %v635, 1
        %v638 = vor.u32 %v633, %v637
        %v640 = vshll.u32 %v520, 16
        %v642 = vrot.slane %v640, 1
        %v643 = vsel %vm535, %v638, %v642
        %v645 = vshrl.u32 %v521, 16
        %v647 = vshll.u32 %v521, 16
        %v649 = vrot.slane %v647, 1
        %v650 = vor.u32 %v645, %v649
        %v652 = vshll.u32 %v522, 16
        %v654 = vrot.slane %v652, 1
        %v655 = vsel %vm535, %v650, %v654
        %v657 = vshrl.u32 %v523, 16
        %v659 = vshll.u32 %v523, 16
        %v661 = vrot.slane %v659, 1
        %v662 = vor.u32 %v657, %v661
        %v664 = vshll.u32 %v524, 16
        %v666 = vrot.slane %v664, 1
        %v667 = vsel %vm535, %v662, %v666
        %v669 = vshrl.u32 %v525, 16
        %v671 = vshll.u32 %v525, 16
        %v673 = vrot.slane %v671, 1
        %v674 = vor.u32 %v669, %v673
        %v676 = vshll.u32 %v526, 16
        %v678 = vrot.slane %v676, 1
        %v679 = vsel %vm535, %v674, %v678
        %v681 = vshrl.u32 %v527, 16
        %v683 = vshll.u32 %v527, 16
        %v685 = vrot.slane %v683, 1
        %v686 = vor.u32 %v681, %v685
        %v688 = vshll.u32 %v528, 16
        %v690 = vrot.slane %v688, 1
        %v691 = vsel %vm535, %v686, %v690
        %v693 = vshrl.u32 %v529, 16
        %v695 = vshll.u32 %v529, 16
        %v697 = vrot.slane %v695, 1
        %v698 = vor.u32 %v693, %v697
        %v700 = vshll.u32 %v530, 16
        %v702 = vrot.slane %v700, 1
        %v703 = vsel %vm535, %v698, %v702
        %v705 = vshrl.u32 %v531, 16
        %v707 = vshll.u32 %v531, 16
        %v709 = vrot.slane %v707, 1
        %v710 = vor.u32 %v705, %v709
        %v712 = vshll.u32 %v532, 16
        %v714 = vrot.slane %v712, 1
        %v715 = vsel %vm535, %v710, %v714
        %v717 = vshrl.u32 %v533, 16
        %v719 = vshll.u32 %v533, 16
        %v721 = vrot.slane %v719, 1
        %v722 = vor.u32 %v717, %v721
        %v724 = vshll.u32 %v534, 16
        %v726 = vrot.slane %v724, 1
        %v727 = vsel %vm535, %v722, %v726
        %728 = vrot.lane.b32.xlu0 %v547, 4
        %v729 = vpop.permute.xlu0 %728
        %730 = vrot.lane.b32.xlu0 %v559, 4
        %v731 = vpop.permute.xlu0 %730
        %732 = vrot.lane.b32.xlu0 %v571, 4
        %v733 = vpop.permute.xlu0 %732
        %734 = vrot.lane.b32.xlu0 %v583, 4
        %v735 = vpop.permute.xlu0 %734
        %736 = vrot.lane.b32.xlu0 %v595, 4
        %v737 = vpop.permute.xlu0 %736
        %738 = vrot.lane.b32.xlu0 %v607, 4
        %v739 = vpop.permute.xlu0 %738
        %740 = vrot.lane.b32.xlu0 %v619, 4
        %v741 = vpop.permute.xlu0 %740
        %742 = vrot.lane.b32.xlu0 %v631, 4
        %v743 = vpop.permute.xlu0 %742
        %744 = vrot.lane.b32.xlu0 %v643, 4
        %v745 = vpop.permute.xlu0 %744
        %746 = vrot.lane.b32.xlu0 %v655, 4
        %v747 = vpop.permute.xlu0 %746
        %748 = vrot.lane.b32.xlu0 %v667, 4
        %v749 = vpop.permute.xlu0 %748
        %750 = vrot.lane.b32.xlu0 %v679, 4
        %v751 = vpop.permute.xlu0 %750
        %752 = vrot.lane.b32.xlu0 %v691, 4
        %v753 = vpop.permute.xlu0 %752
        %754 = vrot.lane.b32.xlu0 %v703, 4
        %v755 = vpop.permute.xlu0 %754
        %756 = vrot.lane.b32.xlu0 %v715, 4
        %v757 = vpop.permute.xlu0 %756
        %758 = vrot.lane.b32.xlu0 %v727, 4
        %v759 = vpop.permute.xlu0 %758
        %vm776 = vcmask 64544
        %777 = vst.msk [vmem:[#allocation2] sm:$0xff] %vm776, %v729
        %778 = vst.msk [vmem:[#allocation2 + $0x8] sm:$0xff] %vm776, %v731
        %779 = vst.msk [vmem:[#allocation2 + $0x10] sm:$0xff] %vm776, %v733
        %780 = vst.msk [vmem:[#allocation2 + $0x18] sm:$0xff] %vm776, %v735
        %781 = vst.msk [vmem:[#allocation2 + $0x20] sm:$0xff] %vm776, %v737
        %782 = vst.msk [vmem:[#allocation2 + $0x28] sm:$0xff] %vm776, %v739
        %783 = vst.msk [vmem:[#allocation2 + $0x30] sm:$0xff] %vm776, %v741
        %784 = vst.msk [vmem:[#allocation2 + $0x38] sm:$0xff] %vm776, %v743
        %785 = vst.msk [vmem:[#allocation2 + $0x40] sm:$0xff] %vm776, %v745
        %786 = vst.msk [vmem:[#allocation2 + $0x48] sm:$0xff] %vm776, %v747
        %787 = vst.msk [vmem:[#allocation2 + $0x50] sm:$0xff] %vm776, %v749
        %788 = vst.msk [vmem:[#allocation2 + $0x58] sm:$0xff] %vm776, %v751
        %789 = vst.msk [vmem:[#allocation2 + $0x60] sm:$0xff] %vm776, %v753
        %790 = vst.msk [vmem:[#allocation2 + $0x68] sm:$0xff] %vm776, %v755
        %791 = vst.msk [vmem:[#allocation2 + $0x70] sm:$0xff] %vm776, %v757
        %792 = vst.msk [vmem:[#allocation2 + $0x78] sm:$0xff] %vm776, %v759
        %v793 = vld [vmem:[%s209] sm:$0xe]
        %v794 = vld [vmem:[%s209 + $0x4] sm:$0xf]
        %v795 = vld [vmem:[%s209 + $0x8] sm:$0x1]
        %v796 = vld [vmem:[%s209 + $0xc] sm:$0xe]
        %v797 = vld [vmem:[%s209 + $0x10] sm:$0xf]
        %v798 = vld [vmem:[%s209 + $0x14] sm:$0x1]
        %v799 = vld [vmem:[%s209 + $0x18] sm:$0xe]
        %v800 = vld [vmem:[%s209 + $0x1c] sm:$0xf]
        %v801 = vld [vmem:[%s209 + $0x20] sm:$0x1]
        %v802 = vld [vmem:[%s209 + $0x24] sm:$0xe]
        %v803 = vld [vmem:[%s209 + $0x28] sm:$0xf]
        %v804 = vld [vmem:[%s209 + $0x2c] sm:$0x1]
        %v805 = vld [vmem:[%s209 + $0x30] sm:$0xe]
        %v806 = vld [vmem:[%s209 + $0x34] sm:$0xf]
        %v807 = vld [vmem:[%s209 + $0x38] sm:$0x1]
        %v808 = vld [vmem:[%s209 + $0x3c] sm:$0xe]
        %v809 = vld [vmem:[%s209 + $0x40] sm:$0xf]
        %v810 = vld [vmem:[%s209 + $0x44] sm:$0x1]
        %v811 = vld [vmem:[%s209 + $0x48] sm:$0xe]
        %v812 = vld [vmem:[%s209 + $0x4c] sm:$0xf]
        %v813 = vld [vmem:[%s209 + $0x50] sm:$0x1]
        %v814 = vld [vmem:[%s209 + $0x54] sm:$0xe]
        %v815 = vld [vmem:[%s209 + $0x58] sm:$0xf]
        %v816 = vld [vmem:[%s209 + $0x5c] sm:$0x1]
        %v817 = vld [vmem:[%s209 + $0x60] sm:$0xe]
        %v818 = vld [vmem:[%s209 + $0x64] sm:$0xf]
        %v819 = vld [vmem:[%s209 + $0x68] sm:$0x1]
        %v820 = vld [vmem:[%s209 + $0x6c] sm:$0xe]
        %v821 = vld [vmem:[%s209 + $0x70] sm:$0xf]
        %v822 = vld [vmem:[%s209 + $0x74] sm:$0x1]
        %v823 = vld [vmem:[%s209 + $0x78] sm:$0xe]
        %v824 = vld [vmem:[%s209 + $0x7c] sm:$0xf]
        %v825 = vld [vmem:[%s209 + $0x80] sm:$0x1]
        %v826 = vld [vmem:[%s209 + $0x84] sm:$0xe]
        %v827 = vld [vmem:[%s209 + $0x88] sm:$0xf]
        %v828 = vld [vmem:[%s209 + $0x8c] sm:$0x1]
        %v829 = vld [vmem:[%s209 + $0x90] sm:$0xe]
        %v830 = vld [vmem:[%s209 + $0x94] sm:$0xf]
        %v831 = vld [vmem:[%s209 + $0x98] sm:$0x1]
        %v832 = vld [vmem:[%s209 + $0x9c] sm:$0xe]
        %v833 = vld [vmem:[%s209 + $0xa0] sm:$0xf]
        %v834 = vld [vmem:[%s209 + $0xa4] sm:$0x1]
        %v835 = vld [vmem:[%s209 + $0xa8] sm:$0xe]
        %v836 = vld [vmem:[%s209 + $0xac] sm:$0xf]
        %v837 = vld [vmem:[%s209 + $0xb0] sm:$0x1]
        %v838 = vld [vmem:[%s209 + $0xb4] sm:$0xe]
        %v839 = vld [vmem:[%s209 + $0xb8] sm:$0xf]
        %v840 = vld [vmem:[%s209 + $0xbc] sm:$0x1]
        %v889 = vunpack.c.l.b16 %v793
        %v890 = vunpack.c.l.b16 %v794
        %v891 = vunpack.c.l.b16 %v795
        %v892 = vunpack.c.l.b16 %v796
        %v893 = vunpack.c.l.b16 %v797
        %v894 = vunpack.c.l.b16 %v798
        %v895 = vunpack.c.l.b16 %v799
        %v896 = vunpack.c.l.b16 %v800
        %v897 = vunpack.c.l.b16 %v801
        %v898 = vunpack.c.l.b16 %v802
        %v899 = vunpack.c.l.b16 %v803
        %v900 = vunpack.c.l.b16 %v804
        %v901 = vunpack.c.l.b16 %v805
        %v902 = vunpack.c.l.b16 %v806
        %v903 = vunpack.c.l.b16 %v807
        %v904 = vunpack.c.l.b16 %v808
        %v905 = vunpack.c.l.b16 %v809
        %v906 = vunpack.c.l.b16 %v810
        %v907 = vunpack.c.l.b16 %v811
        %v908 = vunpack.c.l.b16 %v812
        %v909 = vunpack.c.l.b16 %v813
        %v910 = vunpack.c.l.b16 %v814
        %v911 = vunpack.c.l.b16 %v815
        %v912 = vunpack.c.l.b16 %v816
        %v913 = vunpack.c.l.b16 %v817
        %v914 = vunpack.c.l.b16 %v818
        %v915 = vunpack.c.l.b16 %v819
        %v916 = vunpack.c.l.b16 %v820
        %v917 = vunpack.c.l.b16 %v821
        %v918 = vunpack.c.l.b16 %v822
        %v919 = vunpack.c.l.b16 %v823
        %v920 = vunpack.c.l.b16 %v824
        %v921 = vunpack.c.l.b16 %v825
        %v922 = vunpack.c.l.b16 %v826
        %v923 = vunpack.c.l.b16 %v827
        %v924 = vunpack.c.l.b16 %v828
        %v925 = vunpack.c.l.b16 %v829
        %v926 = vunpack.c.l.b16 %v830
        %v927 = vunpack.c.l.b16 %v831
        %v928 = vunpack.c.l.b16 %v832
        %v929 = vunpack.c.l.b16 %v833
        %v930 = vunpack.c.l.b16 %v834
        %v931 = vunpack.c.l.b16 %v835
        %v932 = vunpack.c.l.b16 %v836
        %v933 = vunpack.c.l.b16 %v837
        %v934 = vunpack.c.l.b16 %v838
        %v935 = vunpack.c.l.b16 %v839
        %v936 = vunpack.c.l.b16 %v840
        %v937 = vpack.c.b16 %v890, %v889
        %v938 = vpack.c.b16 %v891, %v891
        %v939 = vpack.c.b16 %v893, %v892
        %v940 = vpack.c.b16 %v894, %v894
        %v941 = vpack.c.b16 %v896, %v895
        %v942 = vpack.c.b16 %v897, %v897
        %v943 = vpack.c.b16 %v899, %v898
        %v944 = vpack.c.b16 %v900, %v900
        %v945 = vpack.c.b16 %v902, %v901
        %v946 = vpack.c.b16 %v903, %v903
        %v947 = vpack.c.b16 %v905, %v904
        %v948 = vpack.c.b16 %v906, %v906
        %v949 = vpack.c.b16 %v908, %v907
        %v950 = vpack.c.b16 %v909, %v909
        %v951 = vpack.c.b16 %v911, %v910
        %v952 = vpack.c.b16 %v912, %v912
        %v953 = vpack.c.b16 %v914, %v913
        %v954 = vpack.c.b16 %v915, %v915
        %v955 = vpack.c.b16 %v917, %v916
        %v956 = vpack.c.b16 %v918, %v918
        %v957 = vpack.c.b16 %v920, %v919
        %v958 = vpack.c.b16 %v921, %v921
        %v959 = vpack.c.b16 %v923, %v922
        %v960 = vpack.c.b16 %v924, %v924
        %v961 = vpack.c.b16 %v926, %v925
        %v962 = vpack.c.b16 %v927, %v927
        %v963 = vpack.c.b16 %v929, %v928
        %v964 = vpack.c.b16 %v930, %v930
        %v965 = vpack.c.b16 %v932, %v931
        %v966 = vpack.c.b16 %v933, %v933
        %v967 = vpack.c.b16 %v935, %v934
        %v968 = vpack.c.b16 %v936, %v936
        %vm969 = vcmask 1046528
        %v970 = vrot.slane %v937, 1
        %v971 = vrot.slane %v938, 1
        %v972 = vsel %vm969, %v970, %v971
        %v973 = vrot.slane %v939, 1
        %v974 = vrot.slane %v940, 1
        %v975 = vsel %vm969, %v973, %v974
        %v976 = vrot.slane %v941, 1
        %v977 = vrot.slane %v942, 1
        %v978 = vsel %vm969, %v976, %v977
        %v979 = vrot.slane %v943, 1
        %v980 = vrot.slane %v944, 1
        %v981 = vsel %vm969, %v979, %v980
        %v982 = vrot.slane %v945, 1
        %v983 = vrot.slane %v946, 1
        %v984 = vsel %vm969, %v982, %v983
        %v985 = vrot.slane %v947, 1
        %v986 = vrot.slane %v948, 1
        %v987 = vsel %vm969, %v985, %v986
        %v988 = vrot.slane %v949, 1
        %v989 = vrot.slane %v950, 1
        %v990 = vsel %vm969, %v988, %v989
        %v991 = vrot.slane %v951, 1
        %v992 = vrot.slane %v952, 1
        %v993 = vsel %vm969, %v991, %v992
        %v994 = vrot.slane %v953, 1
        %v995 = vrot.slane %v954, 1
        %v996 = vsel %vm969, %v994, %v995
        %v997 = vrot.slane %v955, 1
        %v998 = vrot.slane %v956, 1
        %v999 = vsel %vm969, %v997, %v998
        %v1000 = vrot.slane %v957, 1
        %v1001 = vrot.slane %v958, 1
        %v1002 = vsel %vm969, %v1000, %v1001
        %v1003 = vrot.slane %v959, 1
        %v1004 = vrot.slane %v960, 1
        %v1005 = vsel %vm969, %v1003, %v1004
        %v1006 = vrot.slane %v961, 1
        %v1007 = vrot.slane %v962, 1
        %v1008 = vsel %vm969, %v1006, %v1007
        %v1009 = vrot.slane %v963, 1
        %v1010 = vrot.slane %v964, 1
        %v1011 = vsel %vm969, %v1009, %v1010
        %v1012 = vrot.slane %v965, 1
        %v1013 = vrot.slane %v966, 1
        %v1014 = vsel %vm969, %v1012, %v1013
        %v1015 = vrot.slane %v967, 1
        %v1016 = vrot.slane %v968, 1
        %v1017 = vsel %vm969, %v1015, %v1016
        %1018 = vrot.lane.b32.xlu0 %v972, 8
        %v1019 = vpop.permute.xlu0 %1018
        %1020 = vrot.lane.b32.xlu0 %v975, 8
        %v1021 = vpop.permute.xlu0 %1020
        %1022 = vrot.lane.b32.xlu0 %v978, 8
        %v1023 = vpop.permute.xlu0 %1022
        %1024 = vrot.lane.b32.xlu0 %v981, 8
        %v1025 = vpop.permute.xlu0 %1024
        %1026 = vrot.lane.b32.xlu0 %v984, 8
        %v1027 = vpop.permute.xlu0 %1026
        %1028 = vrot.lane.b32.xlu0 %v987, 8
        %v1029 = vpop.permute.xlu0 %1028
        %1030 = vrot.lane.b32.xlu0 %v990, 8
        %v1031 = vpop.permute.xlu0 %1030
        %1032 = vrot.lane.b32.xlu0 %v993, 8
        %v1033 = vpop.permute.xlu0 %1032
        %1034 = vrot.lane.b32.xlu0 %v996, 8
        %v1035 = vpop.permute.xlu0 %1034
        %1036 = vrot.lane.b32.xlu0 %v999, 8
        %v1037 = vpop.permute.xlu0 %1036
        %1038 = vrot.lane.b32.xlu0 %v1002, 8
        %v1039 = vpop.permute.xlu0 %1038
        %1040 = vrot.lane.b32.xlu0 %v1005, 8
        %v1041 = vpop.permute.xlu0 %1040
        %1042 = vrot.lane.b32.xlu0 %v1008, 8
        %v1043 = vpop.permute.xlu0 %1042
        %1044 = vrot.lane.b32.xlu0 %v1011, 8
        %v1045 = vpop.permute.xlu0 %1044
        %1046 = vrot.lane.b32.xlu0 %v1014, 8
        %v1047 = vpop.permute.xlu0 %1046
        %1048 = vrot.lane.b32.xlu0 %v1017, 8
        %v1049 = vpop.permute.xlu0 %1048
        %vm1066 = vcmask 97344
        %1067 = vst.msk [vmem:[#allocation2] sm:$0xff] %vm1066, %v1019
        %1068 = vst.msk [vmem:[#allocation2 + $0x8] sm:$0xff] %vm1066, %v1021
        %1069 = vst.msk [vmem:[#allocation2 + $0x10] sm:$0xff] %vm1066, %v1023
        %1070 = vst.msk [vmem:[#allocation2 + $0x18] sm:$0xff] %vm1066, %v1025
        %1071 = vst.msk [vmem:[#allocation2 + $0x20] sm:$0xff] %vm1066, %v1027
        %1072 = vst.msk [vmem:[#allocation2 + $0x28] sm:$0xff] %vm1066, %v1029
        %1073 = vst.msk [vmem:[#allocation2 + $0x30] sm:$0xff] %vm1066, %v1031
        %1074 = vst.msk [vmem:[#allocation2 + $0x38] sm:$0xff] %vm1066, %v1033
        %1075 = vst.msk [vmem:[#allocation2 + $0x40] sm:$0xff] %vm1066, %v1035
        %1076 = vst.msk [vmem:[#allocation2 + $0x48] sm:$0xff] %vm1066, %v1037
        %1077 = vst.msk [vmem:[#allocation2 + $0x50] sm:$0xff] %vm1066, %v1039
        %1078 = vst.msk [vmem:[#allocation2 + $0x58] sm:$0xff] %vm1066, %v1041
        %1079 = vst.msk [vmem:[#allocation2 + $0x60] sm:$0xff] %vm1066, %v1043
        %1080 = vst.msk [vmem:[#allocation2 + $0x68] sm:$0xff] %vm1066, %v1045
        %1081 = vst.msk [vmem:[#allocation2 + $0x70] sm:$0xff] %vm1066, %v1047
        %1082 = vst.msk [vmem:[#allocation2 + $0x78] sm:$0xff] %vm1066, %v1049
        %s1083 = scalar_lea.vmem %s209, 12
        %v1084 = vld [vmem:[%s1083] sm:$0xf]
        %v1085 = vld [vmem:[%s1083 + $0x4] sm:$0xf]
        %v1086 = vld [vmem:[%s1083 + $0xc] sm:$0xf]
        %v1087 = vld [vmem:[%s1083 + $0x10] sm:$0xf]
        %v1088 = vld [vmem:[%s1083 + $0x18] sm:$0xf]
        %v1089 = vld [vmem:[%s1083 + $0x1c] sm:$0xf]
        %v1090 = vld [vmem:[%s1083 + $0x24] sm:$0xf]
        %v1091 = vld [vmem:[%s1083 + $0x28] sm:$0xf]
        %v1092 = vld [vmem:[%s1083 + $0x30] sm:$0xf]
        %v1093 = vld [vmem:[%s1083 + $0x34] sm:$0xf]
        %v1094 = vld [vmem:[%s1083 + $0x3c] sm:$0xf]
        %v1095 = vld [vmem:[%s1083 + $0x40] sm:$0xf]
        %v1096 = vld [vmem:[%s1083 + $0x48] sm:$0xf]
        %v1097 = vld [vmem:[%s1083 + $0x4c] sm:$0xf]
        %v1098 = vld [vmem:[%s1083 + $0x54] sm:$0xf]
        %v1099 = vld [vmem:[%s1083 + $0x58] sm:$0xf]
        %v1100 = vld [vmem:[%s1083 + $0x60] sm:$0xf]
        %v1101 = vld [vmem:[%s1083 + $0x64] sm:$0xf]
        %v1102 = vld [vmem:[%s1083 + $0x6c] sm:$0xf]
        %v1103 = vld [vmem:[%s1083 + $0x70] sm:$0xf]
        %v1104 = vld [vmem:[%s1083 + $0x78] sm:$0xf]
        %v1105 = vld [vmem:[%s1083 + $0x7c] sm:$0xf]
        %v1106 = vld [vmem:[%s1083 + $0x84] sm:$0xf]
        %v1107 = vld [vmem:[%s1083 + $0x88] sm:$0xf]
        %v1108 = vld [vmem:[%s1083 + $0x90] sm:$0xf]
        %v1109 = vld [vmem:[%s1083 + $0x94] sm:$0xf]
        %v1110 = vld [vmem:[%s1083 + $0x9c] sm:$0xf]
        %v1111 = vld [vmem:[%s1083 + $0xa0] sm:$0xf]
        %v1112 = vld [vmem:[%s1083 + $0xa8] sm:$0xf]
        %v1113 = vld [vmem:[%s1083 + $0xac] sm:$0xf]
        %v1114 = vld [vmem:[%s1083 + $0xb4] sm:$0xf]
        %v1115 = vld [vmem:[%s1083 + $0xb8] sm:$0xf]
        %v1148 = vunpack.c.l.b16 %v1084
        %v1149 = vunpack.c.l.b16 %v1085
        %v1150 = vunpack.c.l.b16 %v1086
        %v1151 = vunpack.c.l.b16 %v1087
        %v1152 = vunpack.c.l.b16 %v1088
        %v1153 = vunpack.c.l.b16 %v1089
        %v1154 = vunpack.c.l.b16 %v1090
        %v1155 = vunpack.c.l.b16 %v1091
        %v1156 = vunpack.c.l.b16 %v1092
        %v1157 = vunpack.c.l.b16 %v1093
        %v1158 = vunpack.c.l.b16 %v1094
        %v1159 = vunpack.c.l.b16 %v1095
        %v1160 = vunpack.c.l.b16 %v1096
        %v1161 = vunpack.c.l.b16 %v1097
        %v1162 = vunpack.c.l.b16 %v1098
        %v1163 = vunpack.c.l.b16 %v1099
        %v1164 = vunpack.c.l.b16 %v1100
        %v1165 = vunpack.c.l.b16 %v1101
        %v1166 = vunpack.c.l.b16 %v1102
        %v1167 = vunpack.c.l.b16 %v1103
        %v1168 = vunpack.c.l.b16 %v1104
        %v1169 = vunpack.c.l.b16 %v1105
        %v1170 = vunpack.c.l.b16 %v1106
        %v1171 = vunpack.c.l.b16 %v1107
        %v1172 = vunpack.c.l.b16 %v1108
        %v1173 = vunpack.c.l.b16 %v1109
        %v1174 = vunpack.c.l.b16 %v1110
        %v1175 = vunpack.c.l.b16 %v1111
        %v1176 = vunpack.c.l.b16 %v1112
        %v1177 = vunpack.c.l.b16 %v1113
        %v1178 = vunpack.c.l.b16 %v1114
        %v1179 = vunpack.c.l.b16 %v1115
        %v1180 = vpack.c.b16 %v1149, %v1148
        %v1181 = vpack.c.b16 %v1151, %v1150
        %v1182 = vpack.c.b16 %v1153, %v1152
        %v1183 = vpack.c.b16 %v1155, %v1154
        %v1184 = vpack.c.b16 %v1157, %v1156
        %v1185 = vpack.c.b16 %v1159, %v1158
        %v1186 = vpack.c.b16 %v1161, %v1160
        %v1187 = vpack.c.b16 %v1163, %v1162
        %v1188 = vpack.c.b16 %v1165, %v1164
        %v1189 = vpack.c.b16 %v1167, %v1166
        %v1190 = vpack.c.b16 %v1169, %v1168
        %v1191 = vpack.c.b16 %v1171, %v1170
        %v1192 = vpack.c.b16 %v1173, %v1172
        %v1193 = vpack.c.b16 %v1175, %v1174
        %v1194 = vpack.c.b16 %v1177, %v1176
        %v1195 = vpack.c.b16 %v1179, %v1178
        %1196 = vrot.lane.b32.xlu0 %v1180, 12
        %v1197 = vpop.permute.xlu0 %1196
        %1198 = vrot.lane.b32.xlu0 %v1181, 12
        %v1199 = vpop.permute.xlu0 %1198
        %1200 = vrot.lane.b32.xlu0 %v1182, 12
        %v1201 = vpop.permute.xlu0 %1200
        %1202 = vrot.lane.b32.xlu0 %v1183, 12
        %v1203 = vpop.permute.xlu0 %1202
        %1204 = vrot.lane.b32.xlu0 %v1184, 12
        %v1205 = vpop.permute.xlu0 %1204
        %1206 = vrot.lane.b32.xlu0 %v1185, 12
        %v1207 = vpop.permute.xlu0 %1206
        %1208 = vrot.lane.b32.xlu0 %v1186, 12
        %v1209 = vpop.permute.xlu0 %1208
        %1210 = vrot.lane.b32.xlu0 %v1187, 12
        %v1211 = vpop.permute.xlu0 %1210
        %1212 = vrot.lane.b32.xlu0 %v1188, 12
        %v1213 = vpop.permute.xlu0 %1212
        %1214 = vrot.lane.b32.xlu0 %v1189, 12
        %v1215 = vpop.permute.xlu0 %1214
        %1216 = vrot.lane.b32.xlu0 %v1190, 12
        %v1217 = vpop.permute.xlu0 %1216
        %1218 = vrot.lane.b32.xlu0 %v1191, 12
        %v1219 = vpop.permute.xlu0 %1218
        %1220 = vrot.lane.b32.xlu0 %v1192, 12
        %v1221 = vpop.permute.xlu0 %1220
        %1222 = vrot.lane.b32.xlu0 %v1193, 12
        %v1223 = vpop.permute.xlu0 %1222
        %1224 = vrot.lane.b32.xlu0 %v1194, 12
        %v1225 = vpop.permute.xlu0 %1224
        %1226 = vrot.lane.b32.xlu0 %v1195, 12
        %v1227 = vpop.permute.xlu0 %1226
        %vm1244 = vcmask 130144
        %1245 = vst.msk [vmem:[#allocation2] sm:$0xff] %vm1244, %v1197
        %1246 = vst.msk [vmem:[#allocation2 + $0x8] sm:$0xff] %vm1244, %v1199
        %1247 = vst.msk [vmem:[#allocation2 + $0x10] sm:$0xff] %vm1244, %v1201
        %1248 = vst.msk [vmem:[#allocation2 + $0x18] sm:$0xff] %vm1244, %v1203
        %1249 = vst.msk [vmem:[#allocation2 + $0x20] sm:$0xff] %vm1244, %v1205
        %1250 = vst.msk [vmem:[#allocation2 + $0x28] sm:$0xff] %vm1244, %v1207
        %1251 = vst.msk [vmem:[#allocation2 + $0x30] sm:$0xff] %vm1244, %v1209
        %1252 = vst.msk [vmem:[#allocation2 + $0x38] sm:$0xff] %vm1244, %v1211
        %1253 = vst.msk [vmem:[#allocation2 + $0x40] sm:$0xff] %vm1244, %v1213
        %1254 = vst.msk [vmem:[#allocation2 + $0x48] sm:$0xff] %vm1244, %v1215
        %1255 = vst.msk [vmem:[#allocation2 + $0x50] sm:$0xff] %vm1244, %v1217
        %1256 = vst.msk [vmem:[#allocation2 + $0x58] sm:$0xff] %vm1244, %v1219
        %1257 = vst.msk [vmem:[#allocation2 + $0x60] sm:$0xff] %vm1244, %v1221
        %1258 = vst.msk [vmem:[#allocation2 + $0x68] sm:$0xff] %vm1244, %v1223
        %1259 = vst.msk [vmem:[#allocation2 + $0x70] sm:$0xff] %vm1244, %v1225
        %1260 = vst.msk [vmem:[#allocation2 + $0x78] sm:$0xff] %vm1244, %v1227
        %v1261 = vld [vmem:[%s1083] sm:$0xf]
        %v1262 = vld [vmem:[%s1083 + $0x4] sm:$0xf]
        %v1263 = vld [vmem:[%s1083 + $0x8] sm:$0x1]
        %v1264 = vld [vmem:[%s1083 + $0xc] sm:$0xf]
        %v1265 = vld [vmem:[%s1083 + $0x10] sm:$0xf]
        %v1266 = vld [vmem:[%s1083 + $0x14] sm:$0x1]
        %v1267 = vld [vmem:[%s1083 + $0x18] sm:$0xf]
        %v1268 = vld [vmem:[%s1083 + $0x1c] sm:$0xf]
        %v1269 = vld [vmem:[%s1083 + $0x20] sm:$0x1]
        %v1270 = vld [vmem:[%s1083 + $0x24] sm:$0xf]
        %v1271 = vld [vmem:[%s1083 + $0x28] sm:$0xf]
        %v1272 = vld [vmem:[%s1083 + $0x2c] sm:$0x1]
        %v1273 = vld [vmem:[%s1083 + $0x30] sm:$0xf]
        %v1274 = vld [vmem:[%s1083 + $0x34] sm:$0xf]
        %v1275 = vld [vmem:[%s1083 + $0x38] sm:$0x1]
        %v1276 = vld [vmem:[%s1083 + $0x3c] sm:$0xf]
        %v1277 = vld [vmem:[%s1083 + $0x40] sm:$0xf]
        %v1278 = vld [vmem:[%s1083 + $0x44] sm:$0x1]
        %v1279 = vld [vmem:[%s1083 + $0x48] sm:$0xf]
        %v1280 = vld [vmem:[%s1083 + $0x4c] sm:$0xf]
        %v1281 = vld [vmem:[%s1083 + $0x50] sm:$0x1]
        %v1282 = vld [vmem:[%s1083 + $0x54] sm:$0xf]
        %v1283 = vld [vmem:[%s1083 + $0x58] sm:$0xf]
        %v1284 = vld [vmem:[%s1083 + $0x5c] sm:$0x1]
        %v1285 = vld [vmem:[%s1083 + $0x60] sm:$0xf]
        %v1286 = vld [vmem:[%s1083 + $0x64] sm:$0xf]
        %v1287 = vld [vmem:[%s1083 + $0x68] sm:$0x1]
        %v1288 = vld [vmem:[%s1083 + $0x6c] sm:$0xf]
        %v1289 = vld [vmem:[%s1083 + $0x70] sm:$0xf]
        %v1290 = vld [vmem:[%s1083 + $0x74] sm:$0x1]
        %v1291 = vld [vmem:[%s1083 + $0x78] sm:$0xf]
        %v1292 = vld [vmem:[%s1083 + $0x7c] sm:$0xf]
        %v1293 = vld [vmem:[%s1083 + $0x80] sm:$0x1]
        %v1294 = vld [vmem:[%s1083 + $0x84] sm:$0xf]
        %v1295 = vld [vmem:[%s1083 + $0x88] sm:$0xf]
        %v1296 = vld [vmem:[%s1083 + $0x8c] sm:$0x1]
        %v1297 = vld [vmem:[%s1083 + $0x90] sm:$0xf]
        %v1298 = vld [vmem:[%s1083 + $0x94] sm:$0xf]
        %v1299 = vld [vmem:[%s1083 + $0x98] sm:$0x1]
        %v1300 = vld [vmem:[%s1083 + $0x9c] sm:$0xf]
        %v1301 = vld [vmem:[%s1083 + $0xa0] sm:$0xf]
        %v1302 = vld [vmem:[%s1083 + $0xa4] sm:$0x1]
        %v1303 = vld [vmem:[%s1083 + $0xa8] sm:$0xf]
        %v1304 = vld [vmem:[%s1083 + $0xac] sm:$0xf]
        %v1305 = vld [vmem:[%s1083 + $0xb0] sm:$0x1]
        %v1306 = vld [vmem:[%s1083 + $0xb4] sm:$0xf]
        %v1307 = vld [vmem:[%s1083 + $0xb8] sm:$0xf]
        %v1308 = vld [vmem:[%s1083 + $0xbc] sm:$0x1]
        %v1357 = vunpack.c.l.b16 %v1261
        %v1358 = vunpack.c.l.b16 %v1262
        %v1359 = vunpack.c.l.b16 %v1263
        %v1360 = vunpack.c.l.b16 %v1264
        %v1361 = vunpack.c.l.b16 %v1265
        %v1362 = vunpack.c.l.b16 %v1266
        %v1363 = vunpack.c.l.b16 %v1267
        %v1364 = vunpack.c.l.b16 %v1268
        %v1365 = vunpack.c.l.b16 %v1269
        %v1366 = vunpack.c.l.b16 %v1270
        %v1367 = vunpack.c.l.b16 %v1271
        %v1368 = vunpack.c.l.b16 %v1272
        %v1369 = vunpack.c.l.b16 %v1273
        %v1370 = vunpack.c.l.b16 %v1274
        %v1371 = vunpack.c.l.b16 %v1275
        %v1372 = vunpack.c.l.b16 %v1276
        %v1373 = vunpack.c.l.b16 %v1277
        %v1374 = vunpack.c.l.b16 %v1278
        %v1375 = vunpack.c.l.b16 %v1279
        %v1376 = vunpack.c.l.b16 %v1280
        %v1377 = vunpack.c.l.b16 %v1281
        %v1378 = vunpack.c.l.b16 %v1282
        %v1379 = vunpack.c.l.b16 %v1283
        %v1380 = vunpack.c.l.b16 %v1284
        %v1381 = vunpack.c.l.b16 %v1285
        %v1382 = vunpack.c.l.b16 %v1286
        %v1383 = vunpack.c.l.b16 %v1287
        %v1384 = vunpack.c.l.b16 %v1288
        %v1385 = vunpack.c.l.b16 %v1289
        %v1386 = vunpack.c.l.b16 %v1290
        %v1387 = vunpack.c.l.b16 %v1291
        %v1388 = vunpack.c.l.b16 %v1292
        %v1389 = vunpack.c.l.b16 %v1293
        %v1390 = vunpack.c.l.b16 %v1294
        %v1391 = vunpack.c.l.b16 %v1295
        %v1392 = vunpack.c.l.b16 %v1296
        %v1393 = vunpack.c.l.b16 %v1297
        %v1394 = vunpack.c.l.b16 %v1298
        %v1395 = vunpack.c.l.b16 %v1299
        %v1396 = vunpack.c.l.b16 %v1300
        %v1397 = vunpack.c.l.b16 %v1301
        %v1398 = vunpack.c.l.b16 %v1302
        %v1399 = vunpack.c.l.b16 %v1303
        %v1400 = vunpack.c.l.b16 %v1304
        %v1401 = vunpack.c.l.b16 %v1305
        %v1402 = vunpack.c.l.b16 %v1306
        %v1403 = vunpack.c.l.b16 %v1307
        %v1404 = vunpack.c.l.b16 %v1308
        %v1405 = vpack.c.b16 %v1358, %v1357
        %v1406 = vpack.c.b16 %v1359, %v1359
        %v1407 = vpack.c.b16 %v1361, %v1360
        %v1408 = vpack.c.b16 %v1362, %v1362
        %v1409 = vpack.c.b16 %v1364, %v1363
        %v1410 = vpack.c.b16 %v1365, %v1365
        %v1411 = vpack.c.b16 %v1367, %v1366
        %v1412 = vpack.c.b16 %v1368, %v1368
        %v1413 = vpack.c.b16 %v1370, %v1369
        %v1414 = vpack.c.b16 %v1371, %v1371
        %v1415 = vpack.c.b16 %v1373, %v1372
        %v1416 = vpack.c.b16 %v1374, %v1374
        %v1417 = vpack.c.b16 %v1376, %v1375
        %v1418 = vpack.c.b16 %v1377, %v1377
        %v1419 = vpack.c.b16 %v1379, %v1378
        %v1420 = vpack.c.b16 %v1380, %v1380
        %v1421 = vpack.c.b16 %v1382, %v1381
        %v1422 = vpack.c.b16 %v1383, %v1383
        %v1423 = vpack.c.b16 %v1385, %v1384
        %v1424 = vpack.c.b16 %v1386, %v1386
        %v1425 = vpack.c.b16 %v1388, %v1387
        %v1426 = vpack.c.b16 %v1389, %v1389
        %v1427 = vpack.c.b16 %v1391, %v1390
        %v1428 = vpack.c.b16 %v1392, %v1392
        %v1429 = vpack.c.b16 %v1394, %v1393
        %v1430 = vpack.c.b16 %v1395, %v1395
        %v1431 = vpack.c.b16 %v1397, %v1396
        %v1432 = vpack.c.b16 %v1398, %v1398
        %v1433 = vpack.c.b16 %v1400, %v1399
        %v1434 = vpack.c.b16 %v1401, %v1401
        %v1435 = vpack.c.b16 %v1403, %v1402
        %v1436 = vpack.c.b16 %v1404, %v1404
        %v1438 = vshrl.u32 %v1405, 16
        %v1440 = vshll.u32 %v1405, 16
        %v1442 = vrot.slane %v1440, 1
        %v1443 = vor.u32 %v1438, %v1442
        %v1445 = vshll.u32 %v1406, 16
        %v1447 = vrot.slane %v1445, 1
        %v1448 = vsel %vm535, %v1443, %v1447
        %v1450 = vshrl.u32 %v1407, 16
        %v1452 = vshll.u32 %v1407, 16
        %v1454 = vrot.slane %v1452, 1
        %v1455 = vor.u32 %v1450, %v1454
        %v1457 = vshll.u32 %v1408, 16
        %v1459 = vrot.slane %v1457, 1
        %v1460 = vsel %vm535, %v1455, %v1459
        %v1462 = vshrl.u32 %v1409, 16
        %v1464 = vshll.u32 %v1409, 16
        %v1466 = vrot.slane %v1464, 1
        %v1467 = vor.u32 %v1462, %v1466
        %v1469 = vshll.u32 %v1410, 16
        %v1471 = vrot.slane %v1469, 1
        %v1472 = vsel %vm535, %v1467, %v1471
        %v1474 = vshrl.u32 %v1411, 16
        %v1476 = vshll.u32 %v1411, 16
        %v1478 = vrot.slane %v1476, 1
        %v1479 = vor.u32 %v1474, %v1478
        %v1481 = vshll.u32 %v1412, 16
        %v1483 = vrot.slane %v1481, 1
        %v1484 = vsel %vm535, %v1479, %v1483
        %v1486 = vshrl.u32 %v1413, 16
        %v1488 = vshll.u32 %v1413, 16
        %v1490 = vrot.slane %v1488, 1
        %v1491 = vor.u32 %v1486, %v1490
        %v1493 = vshll.u32 %v1414, 16
        %v1495 = vrot.slane %v1493, 1
        %v1496 = vsel %vm535, %v1491, %v1495
        %v1498 = vshrl.u32 %v1415, 16
        %v1500 = vshll.u32 %v1415, 16
        %v1502 = vrot.slane %v1500, 1
        %v1503 = vor.u32 %v1498, %v1502
        %v1505 = vshll.u32 %v1416, 16
        %v1507 = vrot.slane %v1505, 1
        %v1508 = vsel %vm535, %v1503, %v1507
        %v1510 = vshrl.u32 %v1417, 16
        %v1512 = vshll.u32 %v1417, 16
        %v1514 = vrot.slane %v1512, 1
        %v1515 = vor.u32 %v1510, %v1514
        %v1517 = vshll.u32 %v1418, 16
        %v1519 = vrot.slane %v1517, 1
        %v1520 = vsel %vm535, %v1515, %v1519
        %v1522 = vshrl.u32 %v1419, 16
        %v1524 = vshll.u32 %v1419, 16
        %v1526 = vrot.slane %v1524, 1
        %v1527 = vor.u32 %v1522, %v1526
        %v1529 = vshll.u32 %v1420, 16
        %v1531 = vrot.slane %v1529, 1
        %v1532 = vsel %vm535, %v1527, %v1531
        %v1534 = vshrl.u32 %v1421, 16
        %v1536 = vshll.u32 %v1421, 16
        %v1538 = vrot.slane %v1536, 1
        %v1539 = vor.u32 %v1534, %v1538
        %v1541 = vshll.u32 %v1422, 16
        %v1543 = vrot.slane %v1541, 1
        %v1544 = vsel %vm535, %v1539, %v1543
        %v1546 = vshrl.u32 %v1423, 16
        %v1548 = vshll.u32 %v1423, 16
        %v1550 = vrot.slane %v1548, 1
        %v1551 = vor.u32 %v1546, %v1550
        %v1553 = vshll.u32 %v1424, 16
        %v1555 = vrot.slane %v1553, 1
        %v1556 = vsel %vm535, %v1551, %v1555
        %v1558 = vshrl.u32 %v1425, 16
        %v1560 = vshll.u32 %v1425, 16
        %v1562 = vrot.slane %v1560, 1
        %v1563 = vor.u32 %v1558, %v1562
        %v1565 = vshll.u32 %v1426, 16
        %v1567 = vrot.slane %v1565, 1
        %v1568 = vsel %vm535, %v1563, %v1567
        %v1570 = vshrl.u32 %v1427, 16
        %v1572 = vshll.u32 %v1427, 16
        %v1574 = vrot.slane %v1572, 1
        %v1575 = vor.u32 %v1570, %v1574
        %v1577 = vshll.u32 %v1428, 16
        %v1579 = vrot.slane %v1577, 1
        %v1580 = vsel %vm535, %v1575, %v1579
        %v1582 = vshrl.u32 %v1429, 16
        %v1584 = vshll.u32 %v1429, 16
        %v1586 = vrot.slane %v1584, 1
        %v1587 = vor.u32 %v1582, %v1586
        %v1589 = vshll.u32 %v1430, 16
        %v1591 = vrot.slane %v1589, 1
        %v1592 = vsel %vm535, %v1587, %v1591
        %v1594 = vshrl.u32 %v1431, 16
        %v1596 = vshll.u32 %v1431, 16
        %v1598 = vrot.slane %v1596, 1
        %v1599 = vor.u32 %v1594, %v1598
        %v1601 = vshll.u32 %v1432, 16
        %v1603 = vrot.slane %v1601, 1
        %v1604 = vsel %vm535, %v1599, %v1603
        %v1606 = vshrl.u32 %v1433, 16
        %v1608 = vshll.u32 %v1433, 16
        %v1610 = vrot.slane %v1608, 1
        %v1611 = vor.u32 %v1606, %v1610
        %v1613 = vshll.u32 %v1434, 16
        %v1615 = vrot.slane %v1613, 1
        %v1616 = vsel %vm535, %v1611, %v1615
        %v1618 = vshrl.u32 %v1435, 16
        %v1620 = vshll.u32 %v1435, 16
        %v1622 = vrot.slane %v1620, 1
        %v1623 = vor.u32 %v1618, %v1622
        %v1625 = vshll.u32 %v1436, 16
        %v1627 = vrot.slane %v1625, 1
        %v1628 = vsel %vm535, %v1623, %v1627
        %1629 = vrot.lane.b32.xlu0 %v1448, 16
        %v1630 = vpop.permute.xlu0 %1629
        %1631 = vrot.lane.b32.xlu0 %v1460, 16
        %v1632 = vpop.permute.xlu0 %1631
        %1633 = vrot.lane.b32.xlu0 %v1472, 16
        %v1634 = vpop.permute.xlu0 %1633
        %1635 = vrot.lane.b32.xlu0 %v1484, 16
        %v1636 = vpop.permute.xlu0 %1635
        %1637 = vrot.lane.b32.xlu0 %v1496, 16
        %v1638 = vpop.permute.xlu0 %1637
        %1639 = vrot.lane.b32.xlu0 %v1508, 16
        %v1640 = vpop.permute.xlu0 %1639
        %1641 = vrot.lane.b32.xlu0 %v1520, 16
        %v1642 = vpop.permute.xlu0 %1641
        %1643 = vrot.lane.b32.xlu0 %v1532, 16
        %v1644 = vpop.permute.xlu0 %1643
        %1645 = vrot.lane.b32.xlu0 %v1544, 16
        %v1646 = vpop.permute.xlu0 %1645
        %1647 = vrot.lane.b32.xlu0 %v1556, 16
        %v1648 = vpop.permute.xlu0 %1647
        %1649 = vrot.lane.b32.xlu0 %v1568, 16
        %v1650 = vpop.permute.xlu0 %1649
        %1651 = vrot.lane.b32.xlu0 %v1580, 16
        %v1652 = vpop.permute.xlu0 %1651
        %1653 = vrot.lane.b32.xlu0 %v1592, 16
        %v1654 = vpop.permute.xlu0 %1653
        %1655 = vrot.lane.b32.xlu0 %v1604, 16
        %v1656 = vpop.permute.xlu0 %1655
        %1657 = vrot.lane.b32.xlu0 %v1616, 16
        %v1658 = vpop.permute.xlu0 %1657
        %1659 = vrot.lane.b32.xlu0 %v1628, 16
        %v1660 = vpop.permute.xlu0 %1659
        %vm1677 = vcmask 162944
        %1678 = vst.msk [vmem:[#allocation2] sm:$0xff] %vm1677, %v1630
        %1679 = vst.msk [vmem:[#allocation2 + $0x8] sm:$0xff] %vm1677, %v1632
        %1680 = vst.msk [vmem:[#allocation2 + $0x10] sm:$0xff] %vm1677, %v1634
        %1681 = vst.msk [vmem:[#allocation2 + $0x18] sm:$0xff] %vm1677, %v1636
        %1682 = vst.msk [vmem:[#allocation2 + $0x20] sm:$0xff] %vm1677, %v1638
        %1683 = vst.msk [vmem:[#allocation2 + $0x28] sm:$0xff] %vm1677, %v1640
        %1684 = vst.msk [vmem:[#allocation2 + $0x30] sm:$0xff] %vm1677, %v1642
        %1685 = vst.msk [vmem:[#allocation2 + $0x38] sm:$0xff] %vm1677, %v1644
        %1686 = vst.msk [vmem:[#allocation2 + $0x40] sm:$0xff] %vm1677, %v1646
        %1687 = vst.msk [vmem:[#allocation2 + $0x48] sm:$0xff] %vm1677, %v1648
        %1688 = vst.msk [vmem:[#allocation2 + $0x50] sm:$0xff] %vm1677, %v1650
        %1689 = vst.msk [vmem:[#allocation2 + $0x58] sm:$0xff] %vm1677, %v1652
        %1690 = vst.msk [vmem:[#allocation2 + $0x60] sm:$0xff] %vm1677, %v1654
        %1691 = vst.msk [vmem:[#allocation2 + $0x68] sm:$0xff] %vm1677, %v1656
        %1692 = vst.msk [vmem:[#allocation2 + $0x70] sm:$0xff] %vm1677, %v1658
        %1693 = vst.msk [vmem:[#allocation2 + $0x78] sm:$0xff] %vm1677, %v1660
        %v1694 = vld [vmem:[%s1083] sm:$0xe]
        %v1695 = vld [vmem:[%s1083 + $0x4] sm:$0xf]
        %v1696 = vld [vmem:[%s1083 + $0x8] sm:$0x1]
        %v1697 = vld [vmem:[%s1083 + $0xc] sm:$0xe]
        %v1698 = vld [vmem:[%s1083 + $0x10] sm:$0xf]
        %v1699 = vld [vmem:[%s1083 + $0x14] sm:$0x1]
        %v1700 = vld [vmem:[%s1083 + $0x18] sm:$0xe]
        %v1701 = vld [vmem:[%s1083 + $0x1c] sm:$0xf]
        %v1702 = vld [vmem:[%s1083 + $0x20] sm:$0x1]
        %v1703 = vld [vmem:[%s1083 + $0x24] sm:$0xe]
        %v1704 = vld [vmem:[%s1083 + $0x28] sm:$0xf]
        %v1705 = vld [vmem:[%s1083 + $0x2c] sm:$0x1]
        %v1706 = vld [vmem:[%s1083 + $0x30] sm:$0xe]
        %v1707 = vld [vmem:[%s1083 + $0x34] sm:$0xf]
        %v1708 = vld [vmem:[%s1083 + $0x38] sm:$0x1]
        %v1709 = vld [vmem:[%s1083 + $0x3c] sm:$0xe]
        %v1710 = vld [vmem:[%s1083 + $0x40] sm:$0xf]
        %v1711 = vld [vmem:[%s1083 + $0x44] sm:$0x1]
        %v1712 = vld [vmem:[%s1083 + $0x48] sm:$0xe]
        %v1713 = vld [vmem:[%s1083 + $0x4c] sm:$0xf]
        %v1714 = vld [vmem:[%s1083 + $0x50] sm:$0x1]
        %v1715 = vld [vmem:[%s1083 + $0x54] sm:$0xe]
        %v1716 = vld [vmem:[%s1083 + $0x58] sm:$0xf]
        %v1717 = vld [vmem:[%s1083 + $0x5c] sm:$0x1]
        %v1718 = vld [vmem:[%s1083 + $0x60] sm:$0xe]
        %v1719 = vld [vmem:[%s1083 + $0x64] sm:$0xf]
        %v1720 = vld [vmem:[%s1083 + $0x68] sm:$0x1]
        %v1721 = vld [vmem:[%s1083 + $0x6c] sm:$0xe]
        %v1722 = vld [vmem:[%s1083 + $0x70] sm:$0xf]
        %v1723 = vld [vmem:[%s1083 + $0x74] sm:$0x1]
        %v1724 = vld [vmem:[%s1083 + $0x78] sm:$0xe]
        %v1725 = vld [vmem:[%s1083 + $0x7c] sm:$0xf]
        %v1726 = vld [vmem:[%s1083 + $0x80] sm:$0x1]
        %v1727 = vld [vmem:[%s1083 + $0x84] sm:$0xe]
        %v1728 = vld [vmem:[%s1083 + $0x88] sm:$0xf]
        %v1729 = vld [vmem:[%s1083 + $0x8c] sm:$0x1]
        %v1730 = vld [vmem:[%s1083 + $0x90] sm:$0xe]
        %v1731 = vld [vmem:[%s1083 + $0x94] sm:$0xf]
        %v1732 = vld [vmem:[%s1083 + $0x98] sm:$0x1]
        %v1733 = vld [vmem:[%s1083 + $0x9c] sm:$0xe]
        %v1734 = vld [vmem:[%s1083 + $0xa0] sm:$0xf]
        %v1735 = vld [vmem:[%s1083 + $0xa4] sm:$0x1]
        %v1736 = vld [vmem:[%s1083 + $0xa8] sm:$0xe]
        %v1737 = vld [vmem:[%s1083 + $0xac] sm:$0xf]
        %v1738 = vld [vmem:[%s1083 + $0xb0] sm:$0x1]
        %v1739 = vld [vmem:[%s1083 + $0xb4] sm:$0xe]
        %v1740 = vld [vmem:[%s1083 + $0xb8] sm:$0xf]
        %v1741 = vld [vmem:[%s1083 + $0xbc] sm:$0x1]
        %v1790 = vunpack.c.l.b16 %v1694
        %v1791 = vunpack.c.l.b16 %v1695
        %v1792 = vunpack.c.l.b16 %v1696
        %v1793 = vunpack.c.l.b16 %v1697
        %v1794 = vunpack.c.l.b16 %v1698
        %v1795 = vunpack.c.l.b16 %v1699
        %v1796 = vunpack.c.l.b16 %v1700
        %v1797 = vunpack.c.l.b16 %v1701
        %v1798 = vunpack.c.l.b16 %v1702
        %v1799 = vunpack.c.l.b16 %v1703
        %v1800 = vunpack.c.l.b16 %v1704
        %v1801 = vunpack.c.l.b16 %v1705
        %v1802 = vunpack.c.l.b16 %v1706
        %v1803 = vunpack.c.l.b16 %v1707
        %v1804 = vunpack.c.l.b16 %v1708
        %v1805 = vunpack.c.l.b16 %v1709
        %v1806 = vunpack.c.l.b16 %v1710
        %v1807 = vunpack.c.l.b16 %v1711
        %v1808 = vunpack.c.l.b16 %v1712
        %v1809 = vunpack.c.l.b16 %v1713
        %v1810 = vunpack.c.l.b16 %v1714
        %v1811 = vunpack.c.l.b16 %v1715
        %v1812 = vunpack.c.l.b16 %v1716
        %v1813 = vunpack.c.l.b16 %v1717
        %v1814 = vunpack.c.l.b16 %v1718
        %v1815 = vunpack.c.l.b16 %v1719
        %v1816 = vunpack.c.l.b16 %v1720
        %v1817 = vunpack.c.l.b16 %v1721
        %v1818 = vunpack.c.l.b16 %v1722
        %v1819 = vunpack.c.l.b16 %v1723
        %v1820 = vunpack.c.l.b16 %v1724
        %v1821 = vunpack.c.l.b16 %v1725
        %v1822 = vunpack.c.l.b16 %v1726
        %v1823 = vunpack.c.l.b16 %v1727
        %v1824 = vunpack.c.l.b16 %v1728
        %v1825 = vunpack.c.l.b16 %v1729
        %v1826 = vunpack.c.l.b16 %v1730
        %v1827 = vunpack.c.l.b16 %v1731
        %v1828 = vunpack.c.l.b16 %v1732
        %v1829 = vunpack.c.l.b16 %v1733
        %v1830 = vunpack.c.l.b16 %v1734
        %v1831 = vunpack.c.l.b16 %v1735
        %v1832 = vunpack.c.l.b16 %v1736
        %v1833 = vunpack.c.l.b16 %v1737
        %v1834 = vunpack.c.l.b16 %v1738
        %v1835 = vunpack.c.l.b16 %v1739
        %v1836 = vunpack.c.l.b16 %v1740
        %v1837 = vunpack.c.l.b16 %v1741
        %v1838 = vpack.c.b16 %v1791, %v1790
        %v1839 = vpack.c.b16 %v1792, %v1792
        %v1840 = vpack.c.b16 %v1794, %v1793
        %v1841 = vpack.c.b16 %v1795, %v1795
        %v1842 = vpack.c.b16 %v1797, %v1796
        %v1843 = vpack.c.b16 %v1798, %v1798
        %v1844 = vpack.c.b16 %v1800, %v1799
        %v1845 = vpack.c.b16 %v1801, %v1801
        %v1846 = vpack.c.b16 %v1803, %v1802
        %v1847 = vpack.c.b16 %v1804, %v1804
        %v1848 = vpack.c.b16 %v1806, %v1805
        %v1849 = vpack.c.b16 %v1807, %v1807
        %v1850 = vpack.c.b16 %v1809, %v1808
        %v1851 = vpack.c.b16 %v1810, %v1810
        %v1852 = vpack.c.b16 %v1812, %v1811
        %v1853 = vpack.c.b16 %v1813, %v1813
        %v1854 = vpack.c.b16 %v1815, %v1814
        %v1855 = vpack.c.b16 %v1816, %v1816
        %v1856 = vpack.c.b16 %v1818, %v1817
        %v1857 = vpack.c.b16 %v1819, %v1819
        %v1858 = vpack.c.b16 %v1821, %v1820
        %v1859 = vpack.c.b16 %v1822, %v1822
        %v1860 = vpack.c.b16 %v1824, %v1823
        %v1861 = vpack.c.b16 %v1825, %v1825
        %v1862 = vpack.c.b16 %v1827, %v1826
        %v1863 = vpack.c.b16 %v1828, %v1828
        %v1864 = vpack.c.b16 %v1830, %v1829
        %v1865 = vpack.c.b16 %v1831, %v1831
        %v1866 = vpack.c.b16 %v1833, %v1832
        %v1867 = vpack.c.b16 %v1834, %v1834
        %v1868 = vpack.c.b16 %v1836, %v1835
        %v1869 = vpack.c.b16 %v1837, %v1837
        %v1870 = vrot.slane %v1838, 1
        %v1871 = vrot.slane %v1839, 1
        %v1872 = vsel %vm969, %v1870, %v1871
        %v1873 = vrot.slane %v1840, 1
        %v1874 = vrot.slane %v1841, 1
        %v1875 = vsel %vm969, %v1873, %v1874
        %v1876 = vrot.slane %v1842, 1
        %v1877 = vrot.slane %v1843, 1
        %v1878 = vsel %vm969, %v1876, %v1877
        %v1879 = vrot.slane %v1844, 1
        %v1880 = vrot.slane %v1845, 1
        %v1881 = vsel %vm969, %v1879, %v1880
        %v1882 = vrot.slane %v1846, 1
        %v1883 = vrot.slane %v1847, 1
        %v1884 = vsel %vm969, %v1882, %v1883
        %v1885 = vrot.slane %v1848, 1
        %v1886 = vrot.slane %v1849, 1
        %v1887 = vsel %vm969, %v1885, %v1886
        %v1888 = vrot.slane %v1850, 1
        %v1889 = vrot.slane %v1851, 1
        %v1890 = vsel %vm969, %v1888, %v1889
        %v1891 = vrot.slane %v1852, 1
        %v1892 = vrot.slane %v1853, 1
        %v1893 = vsel %vm969, %v1891, %v1892
        %v1894 = vrot.slane %v1854, 1
        %v1895 = vrot.slane %v1855, 1
        %v1896 = vsel %vm969, %v1894, %v1895
        %v1897 = vrot.slane %v1856, 1
        %v1898 = vrot.slane %v1857, 1
        %v1899 = vsel %vm969, %v1897, %v1898
        %v1900 = vrot.slane %v1858, 1
        %v1901 = vrot.slane %v1859, 1
        %v1902 = vsel %vm969, %v1900, %v1901
        %v1903 = vrot.slane %v1860, 1
        %v1904 = vrot.slane %v1861, 1
        %v1905 = vsel %vm969, %v1903, %v1904
        %v1906 = vrot.slane %v1862, 1
        %v1907 = vrot.slane %v1863, 1
        %v1908 = vsel %vm969, %v1906, %v1907
        %v1909 = vrot.slane %v1864, 1
        %v1910 = vrot.slane %v1865, 1
        %v1911 = vsel %vm969, %v1909, %v1910
        %v1912 = vrot.slane %v1866, 1
        %v1913 = vrot.slane %v1867, 1
        %v1914 = vsel %vm969, %v1912, %v1913
        %v1915 = vrot.slane %v1868, 1
        %v1916 = vrot.slane %v1869, 1
        %v1917 = vsel %vm969, %v1915, %v1916
        %1918 = vrot.lane.b32.xlu0 %v1872, 20
        %v1919 = vpop.permute.xlu0 %1918
        %1920 = vrot.lane.b32.xlu0 %v1875, 20
        %v1921 = vpop.permute.xlu0 %1920
        %1922 = vrot.lane.b32.xlu0 %v1878, 20
        %v1923 = vpop.permute.xlu0 %1922
        %1924 = vrot.lane.b32.xlu0 %v1881, 20
        %v1925 = vpop.permute.xlu0 %1924
        %1926 = vrot.lane.b32.xlu0 %v1884, 20
        %v1927 = vpop.permute.xlu0 %1926
        %1928 = vrot.lane.b32.xlu0 %v1887, 20
        %v1929 = vpop.permute.xlu0 %1928
        %1930 = vrot.lane.b32.xlu0 %v1890, 20
        %v1931 = vpop.permute.xlu0 %1930
        %1932 = vrot.lane.b32.xlu0 %v1893, 20
        %v1933 = vpop.permute.xlu0 %1932
        %1934 = vrot.lane.b32.xlu0 %v1896, 20
        %v1935 = vpop.permute.xlu0 %1934
        %1936 = vrot.lane.b32.xlu0 %v1899, 20
        %v1937 = vpop.permute.xlu0 %1936
        %1938 = vrot.lane.b32.xlu0 %v1902, 20
        %v1939 = vpop.permute.xlu0 %1938
        %1940 = vrot.lane.b32.xlu0 %v1905, 20
        %v1941 = vpop.permute.xlu0 %1940
        %1942 = vrot.lane.b32.xlu0 %v1908, 20
        %v1943 = vpop.permute.xlu0 %1942
        %1944 = vrot.lane.b32.xlu0 %v1911, 20
        %v1945 = vpop.permute.xlu0 %1944
        %1946 = vrot.lane.b32.xlu0 %v1914, 20
        %v1947 = vpop.permute.xlu0 %1946
        %1948 = vrot.lane.b32.xlu0 %v1917, 20
        %v1949 = vpop.permute.xlu0 %1948
        %vm1966 = vcmask 195744
        %1967 = vst.msk [vmem:[#allocation2] sm:$0xff] %vm1966, %v1919
        %1968 = vst.msk [vmem:[#allocation2 + $0x8] sm:$0xff] %vm1966, %v1921
        %1969 = vst.msk [vmem:[#allocation2 + $0x10] sm:$0xff] %vm1966, %v1923
        %1970 = vst.msk [vmem:[#allocation2 + $0x18] sm:$0xff] %vm1966, %v1925
        %1971 = vst.msk [vmem:[#allocation2 + $0x20] sm:$0xff] %vm1966, %v1927
        %1972 = vst.msk [vmem:[#allocation2 + $0x28] sm:$0xff] %vm1966, %v1929
        %1973 = vst.msk [vmem:[#allocation2 + $0x30] sm:$0xff] %vm1966, %v1931
        %1974 = vst.msk [vmem:[#allocation2 + $0x38] sm:$0xff] %vm1966, %v1933
        %1975 = vst.msk [vmem:[#allocation2 + $0x40] sm:$0xff] %vm1966, %v1935
        %1976 = vst.msk [vmem:[#allocation2 + $0x48] sm:$0xff] %vm1966, %v1937
        %1977 = vst.msk [vmem:[#allocation2 + $0x50] sm:$0xff] %vm1966, %v1939
        %1978 = vst.msk [vmem:[#allocation2 + $0x58] sm:$0xff] %vm1966, %v1941
        %1979 = vst.msk [vmem:[#allocation2 + $0x60] sm:$0xff] %vm1966, %v1943
        %1980 = vst.msk [vmem:[#allocation2 + $0x68] sm:$0xff] %vm1966, %v1945
        %1981 = vst.msk [vmem:[#allocation2 + $0x70] sm:$0xff] %vm1966, %v1947
        %1982 = vst.msk [vmem:[#allocation2 + $0x78] sm:$0xff] %vm1966, %v1949
        %s1983 = scalar_lea.vmem %s209, 24
        %v1984 = vld [vmem:[%s1983] sm:$0xf]
        %v1985 = vld [vmem:[%s1983 + $0x4] sm:$0xf]
        %v1986 = vld [vmem:[%s1983 + $0xc] sm:$0xf]
        %v1987 = vld [vmem:[%s1983 + $0x10] sm:$0xf]
        %v1988 = vld [vmem:[%s1983 + $0x18] sm:$0xf]
        %v1989 = vld [vmem:[%s1983 + $0x1c] sm:$0xf]
        %v1990 = vld [vmem:[%s1983 + $0x24] sm:$0xf]
        %v1991 = vld [vmem:[%s1983 + $0x28] sm:$0xf]
        %v1992 = vld [vmem:[%s1983 + $0x30] sm:$0xf]
        %v1993 = vld [vmem:[%s1983 + $0x34] sm:$0xf]
        %v1994 = vld [vmem:[%s1983 + $0x3c] sm:$0xf]
        %v1995 = vld [vmem:[%s1983 + $0x40] sm:$0xf]
        %v1996 = vld [vmem:[%s1983 + $0x48] sm:$0xf]
        %v1997 = vld [vmem:[%s1983 + $0x4c] sm:$0xf]
        %v1998 = vld [vmem:[%s1983 + $0x54] sm:$0xf]
        %v1999 = vld [vmem:[%s1983 + $0x58] sm:$0xf]
        %v2000 = vld [vmem:[%s1983 + $0x60] sm:$0xf]
        %v2001 = vld [vmem:[%s1983 + $0x64] sm:$0xf]
        %v2002 = vld [vmem:[%s1983 + $0x6c] sm:$0xf]
        %v2003 = vld [vmem:[%s1983 + $0x70] sm:$0xf]
        %v2004 = vld [vmem:[%s1983 + $0x78] sm:$0xf]
        %v2005 = vld [vmem:[%s1983 + $0x7c] sm:$0xf]
        %v2006 = vld [vmem:[%s1983 + $0x84] sm:$0xf]
        %v2007 = vld [vmem:[%s1983 + $0x88] sm:$0xf]
        %v2008 = vld [vmem:[%s1983 + $0x90] sm:$0xf]
        %v2009 = vld [vmem:[%s1983 + $0x94] sm:$0xf]
        %v2010 = vld [vmem:[%s1983 + $0x9c] sm:$0xf]
        %v2011 = vld [vmem:[%s1983 + $0xa0] sm:$0xf]
        %v2012 = vld [vmem:[%s1983 + $0xa8] sm:$0xf]
        %v2013 = vld [vmem:[%s1983 + $0xac] sm:$0xf]
        %v2014 = vld [vmem:[%s1983 + $0xb4] sm:$0xf]
        %v2015 = vld [vmem:[%s1983 + $0xb8] sm:$0xf]
        %v2048 = vunpack.c.l.b16 %v1984
        %v2049 = vunpack.c.l.b16 %v1985
        %v2050 = vunpack.c.l.b16 %v1986
        %v2051 = vunpack.c.l.b16 %v1987
        %v2052 = vunpack.c.l.b16 %v1988
        %v2053 = vunpack.c.l.b16 %v1989
        %v2054 = vunpack.c.l.b16 %v1990
        %v2055 = vunpack.c.l.b16 %v1991
        %v2056 = vunpack.c.l.b16 %v1992
        %v2057 = vunpack.c.l.b16 %v1993
        %v2058 = vunpack.c.l.b16 %v1994
        %v2059 = vunpack.c.l.b16 %v1995
        %v2060 = vunpack.c.l.b16 %v1996
        %v2061 = vunpack.c.l.b16 %v1997
        %v2062 = vunpack.c.l.b16 %v1998
        %v2063 = vunpack.c.l.b16 %v1999
        %v2064 = vunpack.c.l.b16 %v2000
        %v2065 = vunpack.c.l.b16 %v2001
        %v2066 = vunpack.c.l.b16 %v2002
        %v2067 = vunpack.c.l.b16 %v2003
        %v2068 = vunpack.c.l.b16 %v2004
        %v2069 = vunpack.c.l.b16 %v2005
        %v2070 = vunpack.c.l.b16 %v2006
        %v2071 = vunpack.c.l.b16 %v2007
        %v2072 = vunpack.c.l.b16 %v2008
        %v2073 = vunpack.c.l.b16 %v2009
        %v2074 = vunpack.c.l.b16 %v2010
        %v2075 = vunpack.c.l.b16 %v2011
        %v2076 = vunpack.c.l.b16 %v2012
        %v2077 = vunpack.c.l.b16 %v2013
        %v2078 = vunpack.c.l.b16 %v2014
        %v2079 = vunpack.c.l.b16 %v2015
        %v2080 = vpack.c.b16 %v2049, %v2048
        %v2081 = vpack.c.b16 %v2051, %v2050
        %v2082 = vpack.c.b16 %v2053, %v2052
        %v2083 = vpack.c.b16 %v2055, %v2054
        %v2084 = vpack.c.b16 %v2057, %v2056
        %v2085 = vpack.c.b16 %v2059, %v2058
        %v2086 = vpack.c.b16 %v2061, %v2060
        %v2087 = vpack.c.b16 %v2063, %v2062
        %v2088 = vpack.c.b16 %v2065, %v2064
        %v2089 = vpack.c.b16 %v2067, %v2066
        %v2090 = vpack.c.b16 %v2069, %v2068
        %v2091 = vpack.c.b16 %v2071, %v2070
        %v2092 = vpack.c.b16 %v2073, %v2072
        %v2093 = vpack.c.b16 %v2075, %v2074
        %v2094 = vpack.c.b16 %v2077, %v2076
        %v2095 = vpack.c.b16 %v2079, %v2078
        %2096 = vrot.lane.b32.xlu0 %v2080, 24
        %v2097 = vpop.permute.xlu0 %2096
        %2098 = vrot.lane.b32.xlu0 %v2081, 24
        %v2099 = vpop.permute.xlu0 %2098
        %2100 = vrot.lane.b32.xlu0 %v2082, 24
        %v2101 = vpop.permute.xlu0 %2100
        %2102 = vrot.lane.b32.xlu0 %v2083, 24
        %v2103 = vpop.permute.xlu0 %2102
        %2104 = vrot.lane.b32.xlu0 %v2084, 24
        %v2105 = vpop.permute.xlu0 %2104
        %2106 = vrot.lane.b32.xlu0 %v2085, 24
        %v2107 = vpop.permute.xlu0 %2106
        %2108 = vrot.lane.b32.xlu0 %v2086, 24
        %v2109 = vpop.permute.xlu0 %2108
        %2110 = vrot.lane.b32.xlu0 %v2087, 24
        %v2111 = vpop.permute.xlu0 %2110
        %2112 = vrot.lane.b32.xlu0 %v2088, 24
        %v2113 = vpop.permute.xlu0 %2112
        %2114 = vrot.lane.b32.xlu0 %v2089, 24
        %v2115 = vpop.permute.xlu0 %2114
        %2116 = vrot.lane.b32.xlu0 %v2090, 24
        %v2117 = vpop.permute.xlu0 %2116
        %2118 = vrot.lane.b32.xlu0 %v2091, 24
        %v2119 = vpop.permute.xlu0 %2118
        %2120 = vrot.lane.b32.xlu0 %v2092, 24
        %v2121 = vpop.permute.xlu0 %2120
        %2122 = vrot.lane.b32.xlu0 %v2093, 24
        %v2123 = vpop.permute.xlu0 %2122
        %2124 = vrot.lane.b32.xlu0 %v2094, 24
        %v2125 = vpop.permute.xlu0 %2124
        %2126 = vrot.lane.b32.xlu0 %v2095, 24
        %v2127 = vpop.permute.xlu0 %2126
        %vm2144 = vcmask 228544
        %2145 = vst.msk [vmem:[#allocation2] sm:$0xff] %vm2144, %v2097
        %2146 = vst.msk [vmem:[#allocation2 + $0x8] sm:$0xff] %vm2144, %v2099
        %2147 = vst.msk [vmem:[#allocation2 + $0x10] sm:$0xff] %vm2144, %v2101
        %2148 = vst.msk [vmem:[#allocation2 + $0x18] sm:$0xff] %vm2144, %v2103
        %2149 = vst.msk [vmem:[#allocation2 + $0x20] sm:$0xff] %vm2144, %v2105
        %2150 = vst.msk [vmem:[#allocation2 + $0x28] sm:$0xff] %vm2144, %v2107
        %2151 = vst.msk [vmem:[#allocation2 + $0x30] sm:$0xff] %vm2144, %v2109
        %2152 = vst.msk [vmem:[#allocation2 + $0x38] sm:$0xff] %vm2144, %v2111
        %2153 = vst.msk [vmem:[#allocation2 + $0x40] sm:$0xff] %vm2144, %v2113
        %2154 = vst.msk [vmem:[#allocation2 + $0x48] sm:$0xff] %vm2144, %v2115
        %2155 = vst.msk [vmem:[#allocation2 + $0x50] sm:$0xff] %vm2144, %v2117
        %2156 = vst.msk [vmem:[#allocation2 + $0x58] sm:$0xff] %vm2144, %v2119
        %2157 = vst.msk [vmem:[#allocation2 + $0x60] sm:$0xff] %vm2144, %v2121
        %2158 = vst.msk [vmem:[#allocation2 + $0x68] sm:$0xff] %vm2144, %v2123
        %2159 = vst.msk [vmem:[#allocation2 + $0x70] sm:$0xff] %vm2144, %v2125
        %2160 = vst.msk [vmem:[#allocation2 + $0x78] sm:$0xff] %vm2144, %v2127
        %v2161 = vld [vmem:[%s1983] sm:$0xf]
        %v2162 = vld [vmem:[%s1983 + $0x4] sm:$0xf]
        %v2163 = vld [vmem:[%s1983 + $0x8] sm:$0x1]
        %v2164 = vld [vmem:[%s1983 + $0xc] sm:$0xf]
        %v2165 = vld [vmem:[%s1983 + $0x10] sm:$0xf]
        %v2166 = vld [vmem:[%s1983 + $0x14] sm:$0x1]
        %v2167 = vld [vmem:[%s1983 + $0x18] sm:$0xf]
        %v2168 = vld [vmem:[%s1983 + $0x1c] sm:$0xf]
        %v2169 = vld [vmem:[%s1983 + $0x20] sm:$0x1]
        %v2170 = vld [vmem:[%s1983 + $0x24] sm:$0xf]
        %v2171 = vld [vmem:[%s1983 + $0x28] sm:$0xf]
        %v2172 = vld [vmem:[%s1983 + $0x2c] sm:$0x1]
        %v2173 = vld [vmem:[%s1983 + $0x30] sm:$0xf]
        %v2174 = vld [vmem:[%s1983 + $0x34] sm:$0xf]
        %v2175 = vld [vmem:[%s1983 + $0x38] sm:$0x1]
        %v2176 = vld [vmem:[%s1983 + $0x3c] sm:$0xf]
        %v2177 = vld [vmem:[%s1983 + $0x40] sm:$0xf]
        %v2178 = vld [vmem:[%s1983 + $0x44] sm:$0x1]
        %v2179 = vld [vmem:[%s1983 + $0x48] sm:$0xf]
        %v2180 = vld [vmem:[%s1983 + $0x4c] sm:$0xf]
        %v2181 = vld [vmem:[%s1983 + $0x50] sm:$0x1]
        %v2182 = vld [vmem:[%s1983 + $0x54] sm:$0xf]
        %v2183 = vld [vmem:[%s1983 + $0x58] sm:$0xf]
        %v2184 = vld [vmem:[%s1983 + $0x5c] sm:$0x1]
        %v2185 = vld [vmem:[%s1983 + $0x60] sm:$0xf]
        %v2186 = vld [vmem:[%s1983 + $0x64] sm:$0xf]
        %v2187 = vld [vmem:[%s1983 + $0x68] sm:$0x1]
        %v2188 = vld [vmem:[%s1983 + $0x6c] sm:$0xf]
        %v2189 = vld [vmem:[%s1983 + $0x70] sm:$0xf]
        %v2190 = vld [vmem:[%s1983 + $0x74] sm:$0x1]
        %v2191 = vld [vmem:[%s1983 + $0x78] sm:$0xf]
        %v2192 = vld [vmem:[%s1983 + $0x7c] sm:$0xf]
        %v2193 = vld [vmem:[%s1983 + $0x80] sm:$0x1]
        %v2194 = vld [vmem:[%s1983 + $0x84] sm:$0xf]
        %v2195 = vld [vmem:[%s1983 + $0x88] sm:$0xf]
        %v2196 = vld [vmem:[%s1983 + $0x8c] sm:$0x1]
        %v2197 = vld [vmem:[%s1983 + $0x90] sm:$0xf]
        %v2198 = vld [vmem:[%s1983 + $0x94] sm:$0xf]
        %v2199 = vld [vmem:[%s1983 + $0x98] sm:$0x1]
        %v2200 = vld [vmem:[%s1983 + $0x9c] sm:$0xf]
        %v2201 = vld [vmem:[%s1983 + $0xa0] sm:$0xf]
        %v2202 = vld [vmem:[%s1983 + $0xa4] sm:$0x1]
        %v2203 = vld [vmem:[%s1983 + $0xa8] sm:$0xf]
        %v2204 = vld [vmem:[%s1983 + $0xac] sm:$0xf]
        %v2205 = vld [vmem:[%s1983 + $0xb0] sm:$0x1]
        %v2206 = vld [vmem:[%s1983 + $0xb4] sm:$0xf]
        %v2207 = vld [vmem:[%s1983 + $0xb8] sm:$0xf]
        %v2208 = vld [vmem:[%s1983 + $0xbc] sm:$0x1]
        %v2257 = vunpack.c.l.b16 %v2161
        %v2258 = vunpack.c.l.b16 %v2162
        %v2259 = vunpack.c.l.b16 %v2163
        %v2260 = vunpack.c.l.b16 %v2164
        %v2261 = vunpack.c.l.b16 %v2165
        %v2262 = vunpack.c.l.b16 %v2166
        %v2263 = vunpack.c.l.b16 %v2167
        %v2264 = vunpack.c.l.b16 %v2168
        %v2265 = vunpack.c.l.b16 %v2169
        %v2266 = vunpack.c.l.b16 %v2170
        %v2267 = vunpack.c.l.b16 %v2171
        %v2268 = vunpack.c.l.b16 %v2172
        %v2269 = vunpack.c.l.b16 %v2173
        %v2270 = vunpack.c.l.b16 %v2174
        %v2271 = vunpack.c.l.b16 %v2175
        %v2272 = vunpack.c.l.b16 %v2176
        %v2273 = vunpack.c.l.b16 %v2177
        %v2274 = vunpack.c.l.b16 %v2178
        %v2275 = vunpack.c.l.b16 %v2179
        %v2276 = vunpack.c.l.b16 %v2180
        %v2277 = vunpack.c.l.b16 %v2181
        %v2278 = vunpack.c.l.b16 %v2182
        %v2279 = vunpack.c.l.b16 %v2183
        %v2280 = vunpack.c.l.b16 %v2184
        %v2281 = vunpack.c.l.b16 %v2185
        %v2282 = vunpack.c.l.b16 %v2186
        %v2283 = vunpack.c.l.b16 %v2187
        %v2284 = vunpack.c.l.b16 %v2188
        %v2285 = vunpack.c.l.b16 %v2189
        %v2286 = vunpack.c.l.b16 %v2190
        %v2287 = vunpack.c.l.b16 %v2191
        %v2288 = vunpack.c.l.b16 %v2192
        %v2289 = vunpack.c.l.b16 %v2193
        %v2290 = vunpack.c.l.b16 %v2194
        %v2291 = vunpack.c.l.b16 %v2195
        %v2292 = vunpack.c.l.b16 %v2196
        %v2293 = vunpack.c.l.b16 %v2197
        %v2294 = vunpack.c.l.b16 %v2198
        %v2295 = vunpack.c.l.b16 %v2199
        %v2296 = vunpack.c.l.b16 %v2200
        %v2297 = vunpack.c.l.b16 %v2201
        %v2298 = vunpack.c.l.b16 %v2202
        %v2299 = vunpack.c.l.b16 %v2203
        %v2300 = vunpack.c.l.b16 %v2204
        %v2301 = vunpack.c.l.b16 %v2205
        %v2302 = vunpack.c.l.b16 %v2206
        %v2303 = vunpack.c.l.b16 %v2207
        %v2304 = vunpack.c.l.b16 %v2208
        %v2305 = vpack.c.b16 %v2258, %v2257
        %v2306 = vpack.c.b16 %v2259, %v2259
        %v2307 = vpack.c.b16 %v2261, %v2260
        %v2308 = vpack.c.b16 %v2262, %v2262
        %v2309 = vpack.c.b16 %v2264, %v2263
        %v2310 = vpack.c.b16 %v2265, %v2265
        %v2311 = vpack.c.b16 %v2267, %v2266
        %v2312 = vpack.c.b16 %v2268, %v2268
        %v2313 = vpack.c.b16 %v2270, %v2269
        %v2314 = vpack.c.b16 %v2271, %v2271
        %v2315 = vpack.c.b16 %v2273, %v2272
        %v2316 = vpack.c.b16 %v2274, %v2274
        %v2317 = vpack.c.b16 %v2276, %v2275
        %v2318 = vpack.c.b16 %v2277, %v2277
        %v2319 = vpack.c.b16 %v2279, %v2278
        %v2320 = vpack.c.b16 %v2280, %v2280
        %v2321 = vpack.c.b16 %v2282, %v2281
        %v2322 = vpack.c.b16 %v2283, %v2283
        %v2323 = vpack.c.b16 %v2285, %v2284
        %v2324 = vpack.c.b16 %v2286, %v2286
        %v2325 = vpack.c.b16 %v2288, %v2287
        %v2326 = vpack.c.b16 %v2289, %v2289
        %v2327 = vpack.c.b16 %v2291, %v2290
        %v2328 = vpack.c.b16 %v2292, %v2292
        %v2329 = vpack.c.b16 %v2294, %v2293
        %v2330 = vpack.c.b16 %v2295, %v2295
        %v2331 = vpack.c.b16 %v2297, %v2296
        %v2332 = vpack.c.b16 %v2298, %v2298
        %v2333 = vpack.c.b16 %v2300, %v2299
        %v2334 = vpack.c.b16 %v2301, %v2301
        %v2335 = vpack.c.b16 %v2303, %v2302
        %v2336 = vpack.c.b16 %v2304, %v2304
        %v2338 = vshrl.u32 %v2305, 16
        %v2340 = vshll.u32 %v2305, 16
        %v2342 = vrot.slane %v2340, 1
        %v2343 = vor.u32 %v2338, %v2342
        %v2345 = vshll.u32 %v2306, 16
        %v2347 = vrot.slane %v2345, 1
        %v2348 = vsel %vm535, %v2343, %v2347
        %v2350 = vshrl.u32 %v2307, 16
        %v2352 = vshll.u32 %v2307, 16
        %v2354 = vrot.slane %v2352, 1
        %v2355 = vor.u32 %v2350, %v2354
        %v2357 = vshll.u32 %v2308, 16
        %v2359 = vrot.slane %v2357, 1
        %v2360 = vsel %vm535, %v2355, %v2359
        %v2362 = vshrl.u32 %v2309, 16
        %v2364 = vshll.u32 %v2309, 16
        %v2366 = vrot.slane %v2364, 1
        %v2367 = vor.u32 %v2362, %v2366
        %v2369 = vshll.u32 %v2310, 16
        %v2371 = vrot.slane %v2369, 1
        %v2372 = vsel %vm535, %v2367, %v2371
        %v2374 = vshrl.u32 %v2311, 16
        %v2376 = vshll.u32 %v2311, 16
        %v2378 = vrot.slane %v2376, 1
        %v2379 = vor.u32 %v2374, %v2378
        %v2381 = vshll.u32 %v2312, 16
        %v2383 = vrot.slane %v2381, 1
        %v2384 = vsel %vm535, %v2379, %v2383
        %v2386 = vshrl.u32 %v2313, 16
        %v2388 = vshll.u32 %v2313, 16
        %v2390 = vrot.slane %v2388, 1
        %v2391 = vor.u32 %v2386, %v2390
        %v2393 = vshll.u32 %v2314, 16
        %v2395 = vrot.slane %v2393, 1
        %v2396 = vsel %vm535, %v2391, %v2395
        %v2398 = vshrl.u32 %v2315, 16
        %v2400 = vshll.u32 %v2315, 16
        %v2402 = vrot.slane %v2400, 1
        %v2403 = vor.u32 %v2398, %v2402
        %v2405 = vshll.u32 %v2316, 16
        %v2407 = vrot.slane %v2405, 1
        %v2408 = vsel %vm535, %v2403, %v2407
        %v2410 = vshrl.u32 %v2317, 16
        %v2412 = vshll.u32 %v2317, 16
        %v2414 = vrot.slane %v2412, 1
        %v2415 = vor.u32 %v2410, %v2414
        %v2417 = vshll.u32 %v2318, 16
        %v2419 = vrot.slane %v2417, 1
        %v2420 = vsel %vm535, %v2415, %v2419
        %v2422 = vshrl.u32 %v2319, 16
        %v2424 = vshll.u32 %v2319, 16
        %v2426 = vrot.slane %v2424, 1
        %v2427 = vor.u32 %v2422, %v2426
        %v2429 = vshll.u32 %v2320, 16
        %v2431 = vrot.slane %v2429, 1
        %v2432 = vsel %vm535, %v2427, %v2431
        %v2434 = vshrl.u32 %v2321, 16
        %v2436 = vshll.u32 %v2321, 16
        %v2438 = vrot.slane %v2436, 1
        %v2439 = vor.u32 %v2434, %v2438
        %v2441 = vshll.u32 %v2322, 16
        %v2443 = vrot.slane %v2441, 1
        %v2444 = vsel %vm535, %v2439, %v2443
        %v2446 = vshrl.u32 %v2323, 16
        %v2448 = vshll.u32 %v2323, 16
        %v2450 = vrot.slane %v2448, 1
        %v2451 = vor.u32 %v2446, %v2450
        %v2453 = vshll.u32 %v2324, 16
        %v2455 = vrot.slane %v2453, 1
        %v2456 = vsel %vm535, %v2451, %v2455
        %v2458 = vshrl.u32 %v2325, 16
        %v2460 = vshll.u32 %v2325, 16
        %v2462 = vrot.slane %v2460, 1
        %v2463 = vor.u32 %v2458, %v2462
        %v2465 = vshll.u32 %v2326, 16
        %v2467 = vrot.slane %v2465, 1
        %v2468 = vsel %vm535, %v2463, %v2467
        %v2470 = vshrl.u32 %v2327, 16
        %v2472 = vshll.u32 %v2327, 16
        %v2474 = vrot.slane %v2472, 1
        %v2475 = vor.u32 %v2470, %v2474
        %v2477 = vshll.u32 %v2328, 16
        %v2479 = vrot.slane %v2477, 1
        %v2480 = vsel %vm535, %v2475, %v2479
        %v2482 = vshrl.u32 %v2329, 16
        %v2484 = vshll.u32 %v2329, 16
        %v2486 = vrot.slane %v2484, 1
        %v2487 = vor.u32 %v2482, %v2486
        %v2489 = vshll.u32 %v2330, 16
        %v2491 = vrot.slane %v2489, 1
        %v2492 = vsel %vm535, %v2487, %v2491
        %v2494 = vshrl.u32 %v2331, 16
        %v2496 = vshll.u32 %v2331, 16
        %v2498 = vrot.slane %v2496, 1
        %v2499 = vor.u32 %v2494, %v2498
        %v2501 = vshll.u32 %v2332, 16
        %v2503 = vrot.slane %v2501, 1
        %v2504 = vsel %vm535, %v2499, %v2503
        %v2506 = vshrl.u32 %v2333, 16
        %v2508 = vshll.u32 %v2333, 16
        %v2510 = vrot.slane %v2508, 1
        %v2511 = vor.u32 %v2506, %v2510
        %v2513 = vshll.u32 %v2334, 16
        %v2515 = vrot.slane %v2513, 1
        %v2516 = vsel %vm535, %v2511, %v2515
        %v2518 = vshrl.u32 %v2335, 16
        %v2520 = vshll.u32 %v2335, 16
        %v2522 = vrot.slane %v2520, 1
        %v2523 = vor.u32 %v2518, %v2522
        %v2525 = vshll.u32 %v2336, 16
        %v2527 = vrot.slane %v2525, 1
        %v2528 = vsel %vm535, %v2523, %v2527
        %2529 = vrot.lane.b32.xlu0 %v2348, 28
        %v2530 = vpop.permute.xlu0 %2529
        %2531 = vrot.lane.b32.xlu0 %v2360, 28
        %v2532 = vpop.permute.xlu0 %2531
        %2533 = vrot.lane.b32.xlu0 %v2372, 28
        %v2534 = vpop.permute.xlu0 %2533
        %2535 = vrot.lane.b32.xlu0 %v2384, 28
        %v2536 = vpop.permute.xlu0 %2535
        %2537 = vrot.lane.b32.xlu0 %v2396, 28
        %v2538 = vpop.permute.xlu0 %2537
        %2539 = vrot.lane.b32.xlu0 %v2408, 28
        %v2540 = vpop.permute.xlu0 %2539
        %2541 = vrot.lane.b32.xlu0 %v2420, 28
        %v2542 = vpop.permute.xlu0 %2541
        %2543 = vrot.lane.b32.xlu0 %v2432, 28
        %v2544 = vpop.permute.xlu0 %2543
        %2545 = vrot.lane.b32.xlu0 %v2444, 28
        %v2546 = vpop.permute.xlu0 %2545
        %2547 = vrot.lane.b32.xlu0 %v2456, 28
        %v2548 = vpop.permute.xlu0 %2547
        %2549 = vrot.lane.b32.xlu0 %v2468, 28
        %v2550 = vpop.permute.xlu0 %2549
        %2551 = vrot.lane.b32.xlu0 %v2480, 28
        %v2552 = vpop.permute.xlu0 %2551
        %2553 = vrot.lane.b32.xlu0 %v2492, 28
        %v2554 = vpop.permute.xlu0 %2553
        %2555 = vrot.lane.b32.xlu0 %v2504, 28
        %v2556 = vpop.permute.xlu0 %2555
        %2557 = vrot.lane.b32.xlu0 %v2516, 28
        %v2558 = vpop.permute.xlu0 %2557
        %2559 = vrot.lane.b32.xlu0 %v2528, 28
        %v2560 = vpop.permute.xlu0 %2559
        %vm2577 = vcmask 261344
        %2578 = vst.msk [vmem:[#allocation2] sm:$0xff] %vm2577, %v2530
        %2579 = vst.msk [vmem:[#allocation2 + $0x8] sm:$0xff] %vm2577, %v2532
        %2580 = vst.msk [vmem:[#allocation2 + $0x10] sm:$0xff] %vm2577, %v2534
        %2581 = vst.msk [vmem:[#allocation2 + $0x18] sm:$0xff] %vm2577, %v2536
        %2582 = vst.msk [vmem:[#allocation2 + $0x20] sm:$0xff] %vm2577, %v2538
        %2583 = vst.msk [vmem:[#allocation2 + $0x28] sm:$0xff] %vm2577, %v2540
        %2584 = vst.msk [vmem:[#allocation2 + $0x30] sm:$0xff] %vm2577, %v2542
        %2585 = vst.msk [vmem:[#allocation2 + $0x38] sm:$0xff] %vm2577, %v2544
        %2586 = vst.msk [vmem:[#allocation2 + $0x40] sm:$0xff] %vm2577, %v2546
        %2587 = vst.msk [vmem:[#allocation2 + $0x48] sm:$0xff] %vm2577, %v2548
        %2588 = vst.msk [vmem:[#allocation2 + $0x50] sm:$0xff] %vm2577, %v2550
        %2589 = vst.msk [vmem:[#allocation2 + $0x58] sm:$0xff] %vm2577, %v2552
        %2590 = vst.msk [vmem:[#allocation2 + $0x60] sm:$0xff] %vm2577, %v2554
        %2591 = vst.msk [vmem:[#allocation2 + $0x68] sm:$0xff] %vm2577, %v2556
        %2592 = vst.msk [vmem:[#allocation2 + $0x70] sm:$0xff] %vm2577, %v2558
        %2593 = vst.msk [vmem:[#allocation2 + $0x78] sm:$0xff] %vm2577, %v2560
        %v2594 = vld [vmem:[%s1983] sm:$0xe]
        %v2595 = vld [vmem:[%s1983 + $0x4] sm:$0xf]
        %v2596 = vld [vmem:[%s1983 + $0x8] sm:$0x1]
        %v2597 = vld [vmem:[%s1983 + $0xc] sm:$0xe]
        %v2598 = vld [vmem:[%s1983 + $0x10] sm:$0xf]
        %v2599 = vld [vmem:[%s1983 + $0x14] sm:$0x1]
        %v2600 = vld [vmem:[%s1983 + $0x18] sm:$0xe]
        %v2601 = vld [vmem:[%s1983 + $0x1c] sm:$0xf]
        %v2602 = vld [vmem:[%s1983 + $0x20] sm:$0x1]
        %v2603 = vld [vmem:[%s1983 + $0x24] sm:$0xe]
        %v2604 = vld [vmem:[%s1983 + $0x28] sm:$0xf]
        %v2605 = vld [vmem:[%s1983 + $0x2c] sm:$0x1]
        %v2606 = vld [vmem:[%s1983 + $0x30] sm:$0xe]
        %v2607 = vld [vmem:[%s1983 + $0x34] sm:$0xf]
        %v2608 = vld [vmem:[%s1983 + $0x38] sm:$0x1]
        %v2609 = vld [vmem:[%s1983 + $0x3c] sm:$0xe]
        %v2610 = vld [vmem:[%s1983 + $0x40] sm:$0xf]
        %v2611 = vld [vmem:[%s1983 + $0x44] sm:$0x1]
        %v2612 = vld [vmem:[%s1983 + $0x48] sm:$0xe]
        %v2613 = vld [vmem:[%s1983 + $0x4c] sm:$0xf]
        %v2614 = vld [vmem:[%s1983 + $0x50] sm:$0x1]
        %v2615 = vld [vmem:[%s1983 + $0x54] sm:$0xe]
        %v2616 = vld [vmem:[%s1983 + $0x58] sm:$0xf]
        %v2617 = vld [vmem:[%s1983 + $0x5c] sm:$0x1]
        %v2618 = vld [vmem:[%s1983 + $0x60] sm:$0xe]
        %v2619 = vld [vmem:[%s1983 + $0x64] sm:$0xf]
        %v2620 = vld [vmem:[%s1983 + $0x68] sm:$0x1]
        %v2621 = vld [vmem:[%s1983 + $0x6c] sm:$0xe]
        %v2622 = vld [vmem:[%s1983 + $0x70] sm:$0xf]
        %v2623 = vld [vmem:[%s1983 + $0x74] sm:$0x1]
        %v2624 = vld [vmem:[%s1983 + $0x78] sm:$0xe]
        %v2625 = vld [vmem:[%s1983 + $0x7c] sm:$0xf]
        %v2626 = vld [vmem:[%s1983 + $0x80] sm:$0x1]
        %v2627 = vld [vmem:[%s1983 + $0x84] sm:$0xe]
        %v2628 = vld [vmem:[%s1983 + $0x88] sm:$0xf]
        %v2629 = vld [vmem:[%s1983 + $0x8c] sm:$0x1]
        %v2630 = vld [vmem:[%s1983 + $0x90] sm:$0xe]
        %v2631 = vld [vmem:[%s1983 + $0x94] sm:$0xf]
        %v2632 = vld [vmem:[%s1983 + $0x98] sm:$0x1]
        %v2633 = vld [vmem:[%s1983 + $0x9c] sm:$0xe]
        %v2634 = vld [vmem:[%s1983 + $0xa0] sm:$0xf]
        %v2635 = vld [vmem:[%s1983 + $0xa4] sm:$0x1]
        %v2636 = vld [vmem:[%s1983 + $0xa8] sm:$0xe]
        %v2637 = vld [vmem:[%s1983 + $0xac] sm:$0xf]
        %v2638 = vld [vmem:[%s1983 + $0xb0] sm:$0x1]
        %v2639 = vld [vmem:[%s1983 + $0xb4] sm:$0xe]
        %v2640 = vld [vmem:[%s1983 + $0xb8] sm:$0xf]
        %v2641 = vld [vmem:[%s1983 + $0xbc] sm:$0x1]
        %v2690 = vunpack.c.l.b16 %v2594
        %v2691 = vunpack.c.l.b16 %v2595
        %v2692 = vunpack.c.l.b16 %v2596
        %v2693 = vunpack.c.l.b16 %v2597
        %v2694 = vunpack.c.l.b16 %v2598
        %v2695 = vunpack.c.l.b16 %v2599
        %v2696 = vunpack.c.l.b16 %v2600
        %v2697 = vunpack.c.l.b16 %v2601
        %v2698 = vunpack.c.l.b16 %v2602
        %v2699 = vunpack.c.l.b16 %v2603
        %v2700 = vunpack.c.l.b16 %v2604
        %v2701 = vunpack.c.l.b16 %v2605
        %v2702 = vunpack.c.l.b16 %v2606
        %v2703 = vunpack.c.l.b16 %v2607
        %v2704 = vunpack.c.l.b16 %v2608
        %v2705 = vunpack.c.l.b16 %v2609
        %v2706 = vunpack.c.l.b16 %v2610
        %v2707 = vunpack.c.l.b16 %v2611
        %v2708 = vunpack.c.l.b16 %v2612
        %v2709 = vunpack.c.l.b16 %v2613
        %v2710 = vunpack.c.l.b16 %v2614
        %v2711 = vunpack.c.l.b16 %v2615
        %v2712 = vunpack.c.l.b16 %v2616
        %v2713 = vunpack.c.l.b16 %v2617
        %v2714 = vunpack.c.l.b16 %v2618
        %v2715 = vunpack.c.l.b16 %v2619
        %v2716 = vunpack.c.l.b16 %v2620
        %v2717 = vunpack.c.l.b16 %v2621
        %v2718 = vunpack.c.l.b16 %v2622
        %v2719 = vunpack.c.l.b16 %v2623
        %v2720 = vunpack.c.l.b16 %v2624
        %v2721 = vunpack.c.l.b16 %v2625
        %v2722 = vunpack.c.l.b16 %v2626
        %v2723 = vunpack.c.l.b16 %v2627
        %v2724 = vunpack.c.l.b16 %v2628
        %v2725 = vunpack.c.l.b16 %v2629
        %v2726 = vunpack.c.l.b16 %v2630
        %v2727 = vunpack.c.l.b16 %v2631
        %v2728 = vunpack.c.l.b16 %v2632
        %v2729 = vunpack.c.l.b16 %v2633
        %v2730 = vunpack.c.l.b16 %v2634
        %v2731 = vunpack.c.l.b16 %v2635
        %v2732 = vunpack.c.l.b16 %v2636
        %v2733 = vunpack.c.l.b16 %v2637
        %v2734 = vunpack.c.l.b16 %v2638
        %v2735 = vunpack.c.l.b16 %v2639
        %v2736 = vunpack.c.l.b16 %v2640
        %v2737 = vunpack.c.l.b16 %v2641
        %v2738 = vpack.c.b16 %v2691, %v2690
        %v2739 = vpack.c.b16 %v2692, %v2692
        %v2740 = vpack.c.b16 %v2694, %v2693
        %v2741 = vpack.c.b16 %v2695, %v2695
        %v2742 = vpack.c.b16 %v2697, %v2696
        %v2743 = vpack.c.b16 %v2698, %v2698
        %v2744 = vpack.c.b16 %v2700, %v2699
        %v2745 = vpack.c.b16 %v2701, %v2701
        %v2746 = vpack.c.b16 %v2703, %v2702
        %v2747 = vpack.c.b16 %v2704, %v2704
        %v2748 = vpack.c.b16 %v2706, %v2705
        %v2749 = vpack.c.b16 %v2707, %v2707
        %v2750 = vpack.c.b16 %v2709, %v2708
        %v2751 = vpack.c.b16 %v2710, %v2710
        %v2752 = vpack.c.b16 %v2712, %v2711
        %v2753 = vpack.c.b16 %v2713, %v2713
        %v2754 = vpack.c.b16 %v2715, %v2714
        %v2755 = vpack.c.b16 %v2716, %v2716
        %v2756 = vpack.c.b16 %v2718, %v2717
        %v2757 = vpack.c.b16 %v2719, %v2719
        %v2758 = vpack.c.b16 %v2721, %v2720
        %v2759 = vpack.c.b16 %v2722, %v2722
        %v2760 = vpack.c.b16 %v2724, %v2723
        %v2761 = vpack.c.b16 %v2725, %v2725
        %v2762 = vpack.c.b16 %v2727, %v2726
        %v2763 = vpack.c.b16 %v2728, %v2728
        %v2764 = vpack.c.b16 %v2730, %v2729
        %v2765 = vpack.c.b16 %v2731, %v2731
        %v2766 = vpack.c.b16 %v2733, %v2732
        %v2767 = vpack.c.b16 %v2734, %v2734
        %v2768 = vpack.c.b16 %v2736, %v2735
        %v2769 = vpack.c.b16 %v2737, %v2737
        %v2770 = vrot.slane %v2738, 1
        %v2771 = vrot.slane %v2739, 1
        %v2772 = vsel %vm969, %v2770, %v2771
        %v2773 = vrot.slane %v2740, 1
        %v2774 = vrot.slane %v2741, 1
        %v2775 = vsel %vm969, %v2773, %v2774
        %v2776 = vrot.slane %v2742, 1
        %v2777 = vrot.slane %v2743, 1
        %v2778 = vsel %vm969, %v2776, %v2777
        %v2779 = vrot.slane %v2744, 1
        %v2780 = vrot.slane %v2745, 1
        %v2781 = vsel %vm969, %v2779, %v2780
        %v2782 = vrot.slane %v2746, 1
        %v2783 = vrot.slane %v2747, 1
        %v2784 = vsel %vm969, %v2782, %v2783
        %v2785 = vrot.slane %v2748, 1
        %v2786 = vrot.slane %v2749, 1
        %v2787 = vsel %vm969, %v2785, %v2786
        %v2788 = vrot.slane %v2750, 1
        %v2789 = vrot.slane %v2751, 1
        %v2790 = vsel %vm969, %v2788, %v2789
        %v2791 = vrot.slane %v2752, 1
        %v2792 = vrot.slane %v2753, 1
        %v2793 = vsel %vm969, %v2791, %v2792
        %v2794 = vrot.slane %v2754, 1
        %v2795 = vrot.slane %v2755, 1
        %v2796 = vsel %vm969, %v2794, %v2795
        %v2797 = vrot.slane %v2756, 1
        %v2798 = vrot.slane %v2757, 1
        %v2799 = vsel %vm969, %v2797, %v2798
        %v2800 = vrot.slane %v2758, 1
        %v2801 = vrot.slane %v2759, 1
        %v2802 = vsel %vm969, %v2800, %v2801
        %v2803 = vrot.slane %v2760, 1
        %v2804 = vrot.slane %v2761, 1
        %v2805 = vsel %vm969, %v2803, %v2804
        %v2806 = vrot.slane %v2762, 1
        %v2807 = vrot.slane %v2763, 1
        %v2808 = vsel %vm969, %v2806, %v2807
        %v2809 = vrot.slane %v2764, 1
        %v2810 = vrot.slane %v2765, 1
        %v2811 = vsel %vm969, %v2809, %v2810
        %v2812 = vrot.slane %v2766, 1
        %v2813 = vrot.slane %v2767, 1
        %v2814 = vsel %vm969, %v2812, %v2813
        %v2815 = vrot.slane %v2768, 1
        %v2816 = vrot.slane %v2769, 1
        %v2817 = vsel %vm969, %v2815, %v2816
        %2818 = vrot.lane.b32.xlu0 %v2772, 32
        %v2819 = vpop.permute.xlu0 %2818
        %2820 = vrot.lane.b32.xlu0 %v2775, 32
        %v2821 = vpop.permute.xlu0 %2820
        %2822 = vrot.lane.b32.xlu0 %v2778, 32
        %v2823 = vpop.permute.xlu0 %2822
        %2824 = vrot.lane.b32.xlu0 %v2781, 32
        %v2825 = vpop.permute.xlu0 %2824
        %2826 = vrot.lane.b32.xlu0 %v2784, 32
        %v2827 = vpop.permute.xlu0 %2826
        %2828 = vrot.lane.b32.xlu0 %v2787, 32
        %v2829 = vpop.permute.xlu0 %2828
        %2830 = vrot.lane.b32.xlu0 %v2790, 32
        %v2831 = vpop.permute.xlu0 %2830
        %2832 = vrot.lane.b32.xlu0 %v2793, 32
        %v2833 = vpop.permute.xlu0 %2832
        %2834 = vrot.lane.b32.xlu0 %v2796, 32
        %v2835 = vpop.permute.xlu0 %2834
        %2836 = vrot.lane.b32.xlu0 %v2799, 32
        %v2837 = vpop.permute.xlu0 %2836
        %2838 = vrot.lane.b32.xlu0 %v2802, 32
        %v2839 = vpop.permute.xlu0 %2838
        %2840 = vrot.lane.b32.xlu0 %v2805, 32
        %v2841 = vpop.permute.xlu0 %2840
        %2842 = vrot.lane.b32.xlu0 %v2808, 32
        %v2843 = vpop.permute.xlu0 %2842
        %2844 = vrot.lane.b32.xlu0 %v2811, 32
        %v2845 = vpop.permute.xlu0 %2844
        %2846 = vrot.lane.b32.xlu0 %v2814, 32
        %v2847 = vpop.permute.xlu0 %2846
        %2848 = vrot.lane.b32.xlu0 %v2817, 32
        %v2849 = vpop.permute.xlu0 %2848
        %vm2866 = vcmask 294144
        %2867 = vst.msk [vmem:[#allocation2] sm:$0xff] %vm2866, %v2819
        %2868 = vst.msk [vmem:[#allocation2 + $0x8] sm:$0xff] %vm2866, %v2821
        %2869 = vst.msk [vmem:[#allocation2 + $0x10] sm:$0xff] %vm2866, %v2823
        %2870 = vst.msk [vmem:[#allocation2 + $0x18] sm:$0xff] %vm2866, %v2825
        %2871 = vst.msk [vmem:[#allocation2 + $0x20] sm:$0xff] %vm2866, %v2827
        %2872 = vst.msk [vmem:[#allocation2 + $0x28] sm:$0xff] %vm2866, %v2829
        %2873 = vst.msk [vmem:[#allocation2 + $0x30] sm:$0xff] %vm2866, %v2831
        %2874 = vst.msk [vmem:[#allocation2 + $0x38] sm:$0xff] %vm2866, %v2833
        %2875 = vst.msk [vmem:[#allocation2 + $0x40] sm:$0xff] %vm2866, %v2835
        %2876 = vst.msk [vmem:[#allocation2 + $0x48] sm:$0xff] %vm2866, %v2837
        %2877 = vst.msk [vmem:[#allocation2 + $0x50] sm:$0xff] %vm2866, %v2839
        %2878 = vst.msk [vmem:[#allocation2 + $0x58] sm:$0xff] %vm2866, %v2841
        %2879 = vst.msk [vmem:[#allocation2 + $0x60] sm:$0xff] %vm2866, %v2843
        %2880 = vst.msk [vmem:[#allocation2 + $0x68] sm:$0xff] %vm2866, %v2845
        %2881 = vst.msk [vmem:[#allocation2 + $0x70] sm:$0xff] %vm2866, %v2847
        %2882 = vst.msk [vmem:[#allocation2 + $0x78] sm:$0xff] %vm2866, %v2849
        %v2883 = vld [vmem:[#allocation2] sm:$0xff]
        %v2884 = vld [vmem:[#allocation2 + $0x8] sm:$0xff]
        %v2885 = vld [vmem:[#allocation2 + $0x10] sm:$0xff]
        %v2886 = vld [vmem:[#allocation2 + $0x18] sm:$0xff]
        %v2887 = vld [vmem:[#allocation2 + $0x20] sm:$0xff]
        %v2888 = vld [vmem:[#allocation2 + $0x28] sm:$0xff]
        %v2889 = vld [vmem:[#allocation2 + $0x30] sm:$0xff]
        %v2890 = vld [vmem:[#allocation2 + $0x38] sm:$0xff]
        %v2891 = vld [vmem:[#allocation2 + $0x40] sm:$0xff]
        %v2892 = vld [vmem:[#allocation2 + $0x48] sm:$0xff]
        %v2893 = vld [vmem:[#allocation2 + $0x50] sm:$0xff]
        %v2894 = vld [vmem:[#allocation2 + $0x58] sm:$0xff]
        %v2895 = vld [vmem:[#allocation2 + $0x60] sm:$0xff]
        %v2896 = vld [vmem:[#allocation2 + $0x68] sm:$0xff]
        %v2897 = vld [vmem:[#allocation2 + $0x70] sm:$0xff]
        %v2898 = vld [vmem:[#allocation2 + $0x78] sm:$0xff]
        %v2899 = vld [vmem:[%s1] sm:$0xf]
        %v2900 = vld [vmem:[%s1 + $0x4] sm:$0xf]
        %v2901 = vld [vmem:[%s1 + $0x8] sm:$0xf]
        %v2902 = vld [vmem:[%s1 + $0xc] sm:$0xf]
        %v2903 = vld [vmem:[%s1 + $0x10] sm:$0x3]
        %v2909 = vunpack.c.l.b16 %v2899
        %v2910 = vunpack.c.l.b16 %v2900
        %v2911 = vunpack.c.l.b16 %v2901
        %v2912 = vunpack.c.l.b16 %v2902
        %v2913 = vunpack.c.l.b16 %v2903
        %v2914 = vpack.c.b16 %v2910, %v2909
        %v2915 = vpack.c.b16 %v2912, %v2911
        %v2916 = vpack.c.b16 %v2913, %v2913
        %vm2919 = vcmask 293888
        %v2921 = vsel %vm2919, %v2883, 0
        %v2924 = vsel %vm2919, %v2884, 0
        %v2927 = vsel %vm2919, %v2885, 0
        %v2930 = vsel %vm2919, %v2886, 0
        %v2933 = vsel %vm2919, %v2887, 0
        %v2936 = vsel %vm2919, %v2888, 0
        %v2939 = vsel %vm2919, %v2889, 0
        %v2942 = vsel %vm2919, %v2890, 0
        %v2945 = vsel %vm2919, %v2891, 0
        %v2948 = vsel %vm2919, %v2892, 0
        %v2951 = vsel %vm2919, %v2893, 0
        %v2954 = vsel %vm2919, %v2894, 0
        %v2957 = vsel %vm2919, %v2895, 0
        %v2960 = vsel %vm2919, %v2896, 0
        %v2963 = vsel %vm2919, %v2897, 0
        %v2966 = vsel %vm2919, %v2898, 0
        %vm2968 = vcmask 1041408
        %v2970 = vsel %vm2968, %v2916, 0
        %2972 = vmatprep.subr.bf16.mxu0 0
        %2973 = vmatpush1.bf16.msra.mxu0 %v2914
        %2974 = vmatprep.subr.bf16.mxu0 0
        %2975 = vmatpush1.bf16.msra.mxu0 %v2915
        %2976 = vmatprep.subr.bf16.mxu0 0
        %2977 = vmatpush1.bf16.msra.mxu0 %v2970
        %2978 = vmatprep.subr.bf16.mxu0 0
        %2979 = vmatpush1.bf16.msra.mxu0 0
        %2980 = vmatprep.subr.bf16.mxu0 0
        %2981 = vmatpush1.bf16.msra.mxu0 0
        %2982 = vmatprep.subr.bf16.mxu0 0
        %2983 = vmatpush1.bf16.msra.mxu0 0
        %2984 = vmatprep.subr.bf16.mxu0 0
        %2985 = vmatpush1.bf16.msra.mxu0 0
        %2986 = vmatprep.subr.bf16.mxu0 0
        %2987 = vmatpush1.bf16.msra.mxu0 0
        %2988 = vmatprep.subr.bf16.mxu0 0
        %2989 = vmatpush1.bf16.msra.mxu0 0
        %2990 = vmatprep.subr.bf16.mxu0 0
        %2991 = vmatpush1.bf16.msra.mxu0 0
        %2992 = vmatprep.subr.bf16.mxu0 0
        %2993 = vmatpush1.bf16.msra.mxu0 0
        %2994 = vmatprep.subr.bf16.mxu0 0
        %2995 = vmatpush1.bf16.msra.mxu0 0
        %2996 = vmatprep.subr.bf16.mxu0 0
        %2997 = vmatpush1.bf16.msra.mxu0 0
        %2998 = vmatprep.subr.bf16.mxu0 0
        %2999 = vmatpush1.bf16.msra.mxu0 0
        %3000 = vmatprep.subr.bf16.mxu0 0
        %3001 = vmatpush1.bf16.msra.mxu0 0
        %3002 = vmatprep.subr.bf16.mxu0 0
        %3003 = vmatpush1.bf16.msra.mxu0 0
        %3004 = vmatprep.mubr.bf16.mxu0 0
        %3005 = vmatmul.mubr.bf16.gmra.mrb[0].mxu0 %v2921
        %v3006 = vpop.f32.mrb[0].mxu0
        %v3007 = vadd.f32 0.0, %v3006
        %v3008 = vpop.f32.mrb[0].mxu0
        %v3009 = vpop.f32.mrb[0].mxu0
        %v3010 = vadd.f32 0.0, %v3009
        %v3011 = vpop.f32.mrb[0].mxu0
        %3012 = vmatprep.mubr.bf16.mxu0 0
        %3013 = vmatmul.mubr.bf16.gmra.mrb[0].mxu0 %v2924
        %v3014 = vpop.f32.mrb[0].mxu0
        %v3015 = vadd.f32 0.0, %v3014
        %v3016 = vpop.f32.mrb[0].mxu0
        %v3017 = vpop.f32.mrb[0].mxu0
        %v3018 = vadd.f32 0.0, %v3017
        %v3019 = vpop.f32.mrb[0].mxu0
        %3020 = vmatprep.mubr.bf16.mxu0 0
        %3021 = vmatmul.mubr.bf16.gmra.mrb[0].mxu0 %v2927
        %v3022 = vpop.f32.mrb[0].mxu0
        %v3023 = vadd.f32 0.0, %v3022
        %v3024 = vpop.f32.mrb[0].mxu0
        %v3025 = vpop.f32.mrb[0].mxu0
        %v3026 = vadd.f32 0.0, %v3025
        %v3027 = vpop.f32.mrb[0].mxu0
        %3028 = vmatprep.mubr.bf16.mxu0 0
        %3029 = vmatmul.mubr.bf16.gmra.mrb[0].mxu0 %v2930
        %v3030 = vpop.f32.mrb[0].mxu0
        %v3031 = vadd.f32 0.0, %v3030
        %v3032 = vpop.f32.mrb[0].mxu0
        %v3033 = vpop.f32.mrb[0].mxu0
        %v3034 = vadd.f32 0.0, %v3033
        %v3035 = vpop.f32.mrb[0].mxu0
        %3036 = vmatprep.mubr.bf16.mxu0 0
        %3037 = vmatmul.mubr.bf16.gmra.mrb[0].mxu0 %v2933
        %v3038 = vpop.f32.mrb[0].mxu0
        %v3039 = vadd.f32 0.0, %v3038
        %v3040 = vpop.f32.mrb[0].mxu0
        %v3041 = vpop.f32.mrb[0].mxu0
        %v3042 = vadd.f32 0.0, %v3041
        %v3043 = vpop.f32.mrb[0].mxu0
        %3044 = vmatprep.mubr.bf16.mxu0 0
        %3045 = vmatmul.mubr.bf16.gmra.mrb[0].mxu0 %v2936
        %v3046 = vpop.f32.mrb[0].mxu0
        %v3047 = vadd.f32 0.0, %v3046
        %v3048 = vpop.f32.mrb[0].mxu0
        %v3049 = vpop.f32.mrb[0].mxu0
        %v3050 = vadd.f32 0.0, %v3049
        %v3051 = vpop.f32.mrb[0].mxu0
        %3052 = vmatprep.mubr.bf16.mxu0 0
        %3053 = vmatmul.mubr.bf16.gmra.mrb[0].mxu0 %v2939
        %v3054 = vpop.f32.mrb[0].mxu0
        %v3055 = vadd.f32 0.0, %v3054
        %v3056 = vpop.f32.mrb[0].mxu0
        %v3057 = vpop.f32.mrb[0].mxu0
        %v3058 = vadd.f32 0.0, %v3057
        %v3059 = vpop.f32.mrb[0].mxu0
        %3060 = vmatprep.mubr.bf16.mxu0 0
        %3061 = vmatmul.mubr.bf16.gmra.mrb[0].mxu0 %v2942
        %v3062 = vpop.f32.mrb[0].mxu0
        %v3063 = vadd.f32 0.0, %v3062
        %v3064 = vpop.f32.mrb[0].mxu0
        %v3065 = vpop.f32.mrb[0].mxu0
        %v3066 = vadd.f32 0.0, %v3065
        %v3067 = vpop.f32.mrb[0].mxu0
        %3068 = vmatprep.mubr.bf16.mxu0 0
        %3069 = vmatmul.mubr.bf16.gmra.mrb[0].mxu0 %v2945
        %v3070 = vpop.f32.mrb[0].mxu0
        %v3071 = vadd.f32 0.0, %v3070
        %v3072 = vpop.f32.mrb[0].mxu0
        %v3073 = vpop.f32.mrb[0].mxu0
        %v3074 = vadd.f32 0.0, %v3073
        %v3075 = vpop.f32.mrb[0].mxu0
        %3076 = vmatprep.mubr.bf16.mxu0 0
        %3077 = vmatmul.mubr.bf16.gmra.mrb[0].mxu0 %v2948
        %v3078 = vpop.f32.mrb[0].mxu0
        %v3079 = vadd.f32 0.0, %v3078
        %v3080 = vpop.f32.mrb[0].mxu0
        %v3081 = vpop.f32.mrb[0].mxu0
        %v3082 = vadd.f32 0.0, %v3081
        %v3083 = vpop.f32.mrb[0].mxu0
        %3084 = vmatprep.mubr.bf16.mxu0 0
        %3085 = vmatmul.mubr.bf16.gmra.mrb[0].mxu0 %v2951
        %v3086 = vpop.f32.mrb[0].mxu0
        %v3087 = vadd.f32 0.0, %v3086
        %v3088 = vpop.f32.mrb[0].mxu0
        %v3089 = vpop.f32.mrb[0].mxu0
        %v3090 = vadd.f32 0.0, %v3089
        %v3091 = vpop.f32.mrb[0].mxu0
        %3092 = vmatprep.mubr.bf16.mxu0 0
        %3093 = vmatmul.mubr.bf16.gmra.mrb[0].mxu0 %v2954
        %v3094 = vpop.f32.mrb[0].mxu0
        %v3095 = vadd.f32 0.0, %v3094
        %v3096 = vpop.f32.mrb[0].mxu0
        %v3097 = vpop.f32.mrb[0].mxu0
        %v3098 = vadd.f32 0.0, %v3097
        %v3099 = vpop.f32.mrb[0].mxu0
        %3100 = vmatprep.mubr.bf16.mxu0 0
        %3101 = vmatmul.mubr.bf16.gmra.mrb[0].mxu0 %v2957
        %v3102 = vpop.f32.mrb[0].mxu0
        %v3103 = vadd.f32 0.0, %v3102
        %v3104 = vpop.f32.mrb[0].mxu0
        %v3105 = vpop.f32.mrb[0].mxu0
        %v3106 = vadd.f32 0.0, %v3105
        %v3107 = vpop.f32.mrb[0].mxu0
        %3108 = vmatprep.mubr.bf16.mxu0 0
        %3109 = vmatmul.mubr.bf16.gmra.mrb[0].mxu0 %v2960
        %v3110 = vpop.f32.mrb[0].mxu0
        %v3111 = vadd.f32 0.0, %v3110
        %v3112 = vpop.f32.mrb[0].mxu0
        %v3113 = vpop.f32.mrb[0].mxu0
        %v3114 = vadd.f32 0.0, %v3113
        %v3115 = vpop.f32.mrb[0].mxu0
        %3116 = vmatprep.mubr.bf16.mxu0 0
        %3117 = vmatmul.mubr.bf16.gmra.mrb[0].mxu0 %v2963
        %v3118 = vpop.f32.mrb[0].mxu0
        %v3119 = vadd.f32 0.0, %v3118
        %v3120 = vpop.f32.mrb[0].mxu0
        %v3121 = vpop.f32.mrb[0].mxu0
        %v3122 = vadd.f32 0.0, %v3121
        %v3123 = vpop.f32.mrb[0].mxu0
        %3124 = vmatprep.mubr.bf16.mxu0 0
        %3125 = vmatmul.mubr.bf16.gmra.mrb[0].mxu0 %v2966
        %v3126 = vpop.f32.mrb[0].mxu0
        %v3127 = vadd.f32 0.0, %v3126
        %v3128 = vpop.f32.mrb[0].mxu0
        %v3129 = vpop.f32.mrb[0].mxu0
        %v3130 = vadd.f32 0.0, %v3129
        %v3131 = vpop.f32.mrb[0].mxu0
        %3132 = vdwg.mxu0
        %s3133 = smul.u32 %s26, 16
        %s3134 = ssub.s32 16, %s3133
        %s3135 = smul.u32 %s3134, 16
        %v3136 = vlaneseq
        %v3137 = vshrl.u32 %v3136, 7
        %v3138 = vadd.s32 %v3137, 8
        %v3139 = vadd.s32 %v3137, 16
        %v3140 = vadd.s32 %v3137, 24
        %v3141 = vadd.s32 %v3137, 32
        %v3142 = vadd.s32 %v3137, 40
        %v3143 = vadd.s32 %v3137, 48
        %v3144 = vadd.s32 %v3137, 56
        %v3145 = vadd.s32 %v3137, 64
        %v3146 = vadd.s32 %v3137, 72
        %v3147 = vadd.s32 %v3137, 80
        %v3148 = vadd.s32 %v3137, 88
        %v3149 = vadd.s32 %v3137, 96
        %v3150 = vadd.s32 %v3137, 104
        %v3151 = vadd.s32 %v3137, 112
        %v3152 = vadd.s32 %v3137, 120
        %v3153 = vadd.s32 %v3137, 128
        %v3154 = vadd.s32 %v3137, 136
        %v3155 = vadd.s32 %v3137, 144
        %v3156 = vadd.s32 %v3137, 152
        %v3157 = vadd.s32 %v3137, 160
        %v3158 = vadd.s32 %v3137, 168
        %v3159 = vadd.s32 %v3137, 176
        %v3160 = vadd.s32 %v3137, 184
        %v3161 = vadd.s32 %v3137, 192
        %v3162 = vadd.s32 %v3137, 200
        %v3163 = vadd.s32 %v3137, 208
        %v3164 = vadd.s32 %v3137, 216
        %v3165 = vadd.s32 %v3137, 224
        %v3166 = vadd.s32 %v3137, 232
        %v3167 = vadd.s32 %v3137, 240
        %v3168 = vadd.s32 %v3137, 248
        %v3169 = vstv %s3135
        %vm3170 = vcmp.lt.s32.totalorder %v3137, %v3169
        %vm3171 = vcmp.lt.s32.totalorder %v3138, %v3169
        %vm3172 = vcmp.lt.s32.totalorder %v3139, %v3169
        %vm3173 = vcmp.lt.s32.totalorder %v3140, %v3169
        %vm3174 = vcmp.lt.s32.totalorder %v3141, %v3169
        %vm3175 = vcmp.lt.s32.totalorder %v3142, %v3169
        %vm3176 = vcmp.lt.s32.totalorder %v3143, %v3169
        %vm3177 = vcmp.lt.s32.totalorder %v3144, %v3169
        %vm3178 = vcmp.lt.s32.totalorder %v3145, %v3169
        %vm3179 = vcmp.lt.s32.totalorder %v3146, %v3169
        %vm3180 = vcmp.lt.s32.totalorder %v3147, %v3169
        %vm3181 = vcmp.lt.s32.totalorder %v3148, %v3169
        %vm3182 = vcmp.lt.s32.totalorder %v3149, %v3169
        %vm3183 = vcmp.lt.s32.totalorder %v3150, %v3169
        %vm3184 = vcmp.lt.s32.totalorder %v3151, %v3169
        %vm3185 = vcmp.lt.s32.totalorder %v3152, %v3169
        %vm3186 = vcmp.lt.s32.totalorder %v3153, %v3169
        %vm3187 = vcmp.lt.s32.totalorder %v3154, %v3169
        %vm3188 = vcmp.lt.s32.totalorder %v3155, %v3169
        %vm3189 = vcmp.lt.s32.totalorder %v3156, %v3169
        %vm3190 = vcmp.lt.s32.totalorder %v3157, %v3169
        %vm3191 = vcmp.lt.s32.totalorder %v3158, %v3169
        %vm3192 = vcmp.lt.s32.totalorder %v3159, %v3169
        %vm3193 = vcmp.lt.s32.totalorder %v3160, %v3169
        %vm3194 = vcmp.lt.s32.totalorder %v3161, %v3169
        %vm3195 = vcmp.lt.s32.totalorder %v3162, %v3169
        %vm3196 = vcmp.lt.s32.totalorder %v3163, %v3169
        %vm3197 = vcmp.lt.s32.totalorder %v3164, %v3169
        %vm3198 = vcmp.lt.s32.totalorder %v3165, %v3169
        %vm3199 = vcmp.lt.s32.totalorder %v3166, %v3169
        %vm3200 = vcmp.lt.s32.totalorder %v3167, %v3169
        %vm3201 = vcmp.lt.s32.totalorder %v3168, %v3169
        %v3202 = vsel %vm3170, 1, 0
        %v3203 = vsel %vm3171, 1, 0
        %v3204 = vsel %vm3172, 1, 0
        %v3205 = vsel %vm3173, 1, 0
        %v3206 = vsel %vm3174, 1, 0
        %v3207 = vsel %vm3175, 1, 0
        %v3208 = vsel %vm3176, 1, 0
        %v3209 = vsel %vm3177, 1, 0
        %v3210 = vsel %vm3178, 1, 0
        %v3211 = vsel %vm3179, 1, 0
        %v3212 = vsel %vm3180, 1, 0
        %v3213 = vsel %vm3181, 1, 0
        %v3214 = vsel %vm3182, 1, 0
        %v3215 = vsel %vm3183, 1, 0
        %v3216 = vsel %vm3184, 1, 0
        %v3217 = vsel %vm3185, 1, 0
        %v3218 = vsel %vm3186, 1, 0
        %v3219 = vsel %vm3187, 1, 0
        %v3220 = vsel %vm3188, 1, 0
        %v3221 = vsel %vm3189, 1, 0
        %v3222 = vsel %vm3190, 1, 0
        %v3223 = vsel %vm3191, 1, 0
        %v3224 = vsel %vm3192, 1, 0
        %v3225 = vsel %vm3193, 1, 0
        %v3226 = vsel %vm3194, 1, 0
        %v3227 = vsel %vm3195, 1, 0
        %v3228 = vsel %vm3196, 1, 0
        %v3229 = vsel %vm3197, 1, 0
        %v3230 = vsel %vm3198, 1, 0
        %v3231 = vsel %vm3199, 1, 0
        %v3232 = vsel %vm3200, 1, 0
        %v3233 = vsel %vm3201, 1, 0
        %vm3234 = vcmp.eq.s32.totalorder %v3202, 1
        %vm3235 = vcmp.eq.s32.totalorder %v3203, 1
        %vm3236 = vcmp.eq.s32.totalorder %v3204, 1
        %vm3237 = vcmp.eq.s32.totalorder %v3205, 1
        %vm3238 = vcmp.eq.s32.totalorder %v3206, 1
        %vm3239 = vcmp.eq.s32.totalorder %v3207, 1
        %vm3240 = vcmp.eq.s32.totalorder %v3208, 1
        %vm3241 = vcmp.eq.s32.totalorder %v3209, 1
        %vm3242 = vcmp.eq.s32.totalorder %v3210, 1
        %vm3243 = vcmp.eq.s32.totalorder %v3211, 1
        %vm3244 = vcmp.eq.s32.totalorder %v3212, 1
        %vm3245 = vcmp.eq.s32.totalorder %v3213, 1
        %vm3246 = vcmp.eq.s32.totalorder %v3214, 1
        %vm3247 = vcmp.eq.s32.totalorder %v3215, 1
        %vm3248 = vcmp.eq.s32.totalorder %v3216, 1
        %vm3249 = vcmp.eq.s32.totalorder %v3217, 1
        %vm3250 = vcmp.eq.s32.totalorder %v3218, 1
        %vm3251 = vcmp.eq.s32.totalorder %v3219, 1
        %vm3252 = vcmp.eq.s32.totalorder %v3220, 1
        %vm3253 = vcmp.eq.s32.totalorder %v3221, 1
        %vm3254 = vcmp.eq.s32.totalorder %v3222, 1
        %vm3255 = vcmp.eq.s32.totalorder %v3223, 1
        %vm3256 = vcmp.eq.s32.totalorder %v3224, 1
        %vm3257 = vcmp.eq.s32.totalorder %v3225, 1
        %vm3258 = vcmp.eq.s32.totalorder %v3226, 1
        %vm3259 = vcmp.eq.s32.totalorder %v3227, 1
        %vm3260 = vcmp.eq.s32.totalorder %v3228, 1
        %vm3261 = vcmp.eq.s32.totalorder %v3229, 1
        %vm3262 = vcmp.eq.s32.totalorder %v3230, 1
        %vm3263 = vcmp.eq.s32.totalorder %v3231, 1
        %vm3264 = vcmp.eq.s32.totalorder %v3232, 1
        %vm3265 = vcmp.eq.s32.totalorder %v3233, 1
        %v3266 = vsel %vm3234, %v3007, 0.0
        %v3267 = vsel %vm3235, %v3010, 0.0
        %v3268 = vsel %vm3236, %v3015, 0.0
        %v3269 = vsel %vm3237, %v3018, 0.0
        %v3270 = vsel %vm3238, %v3023, 0.0
        %v3271 = vsel %vm3239, %v3026, 0.0
        %v3272 = vsel %vm3240, %v3031, 0.0
        %v3273 = vsel %vm3241, %v3034, 0.0
        %v3274 = vsel %vm3242, %v3039, 0.0
        %v3275 = vsel %vm3243, %v3042, 0.0
        %v3276 = vsel %vm3244, %v3047, 0.0
        %v3277 = vsel %vm3245, %v3050, 0.0
        %v3278 = vsel %vm3246, %v3055, 0.0
        %v3279 = vsel %vm3247, %v3058, 0.0
        %v3280 = vsel %vm3248, %v3063, 0.0
        %v3281 = vsel %vm3249, %v3066, 0.0
        %v3282 = vsel %vm3250, %v3071, 0.0
        %v3283 = vsel %vm3251, %v3074, 0.0
        %v3284 = vsel %vm3252, %v3079, 0.0
        %v3285 = vsel %vm3253, %v3082, 0.0
        %v3286 = vsel %vm3254, %v3087, 0.0
        %v3287 = vsel %vm3255, %v3090, 0.0
        %v3288 = vsel %vm3256, %v3095, 0.0
        %v3289 = vsel %vm3257, %v3098, 0.0
        %v3290 = vsel %vm3258, %v3103, 0.0
        %v3291 = vsel %vm3259, %v3106, 0.0
        %v3292 = vsel %vm3260, %v3111, 0.0
        %v3293 = vsel %vm3261, %v3114, 0.0
        %v3294 = vsel %vm3262, %v3119, 0.0
        %v3295 = vsel %vm3263, %v3122, 0.0
        %v3296 = vsel %vm3264, %v3127, 0.0
        %v3297 = vsel %vm3265, %v3130, 0.0
        %v3298 = vpack.c.bf16 %v3267, %v3266
        %v3299 = vpack.c.bf16 %v3269, %v3268
        %v3300 = vpack.c.bf16 %v3271, %v3270
        %v3301 = vpack.c.bf16 %v3273, %v3272
        %v3302 = vpack.c.bf16 %v3275, %v3274
        %v3303 = vpack.c.bf16 %v3277, %v3276
        %v3304 = vpack.c.bf16 %v3279, %v3278
        %v3305 = vpack.c.bf16 %v3281, %v3280
        %v3306 = vpack.c.bf16 %v3283, %v3282
        %v3307 = vpack.c.bf16 %v3285, %v3284
        %v3308 = vpack.c.bf16 %v3287, %v3286
        %v3309 = vpack.c.bf16 %v3289, %v3288
        %v3310 = vpack.c.bf16 %v3291, %v3290
        %v3311 = vpack.c.bf16 %v3293, %v3292
        %v3312 = vpack.c.bf16 %v3295, %v3294
        %v3313 = vpack.c.bf16 %v3297, %v3296
        %v3330 = vunpack.c.l.b16 %v3298
        %v3331 = vunpack.c.h.b16 %v3298
        %v3332 = vunpack.c.l.b16 %v3299
        %v3333 = vunpack.c.h.b16 %v3299
        %v3334 = vunpack.c.l.b16 %v3300
        %v3335 = vunpack.c.h.b16 %v3300
        %v3336 = vunpack.c.l.b16 %v3301
        %v3337 = vunpack.c.h.b16 %v3301
        %v3338 = vunpack.c.l.b16 %v3302
        %v3339 = vunpack.c.h.b16 %v3302
        %v3340 = vunpack.c.l.b16 %v3303
        %v3341 = vunpack.c.h.b16 %v3303
        %v3342 = vunpack.c.l.b16 %v3304
        %v3343 = vunpack.c.h.b16 %v3304
        %v3344 = vunpack.c.l.b16 %v3305
        %v3345 = vunpack.c.h.b16 %v3305
        %v3346 = vunpack.c.l.b16 %v3306
        %v3347 = vunpack.c.h.b16 %v3306
        %v3348 = vunpack.c.l.b16 %v3307
        %v3349 = vunpack.c.h.b16 %v3307
        %v3350 = vunpack.c.l.b16 %v3308
        %v3351 = vunpack.c.h.b16 %v3308
        %v3352 = vunpack.c.l.b16 %v3309
        %v3353 = vunpack.c.h.b16 %v3309
        %v3354 = vunpack.c.l.b16 %v3310
        %v3355 = vunpack.c.h.b16 %v3310
        %v3356 = vunpack.c.l.b16 %v3311
        %v3357 = vunpack.c.h.b16 %v3311
        %v3358 = vunpack.c.l.b16 %v3312
        %v3359 = vunpack.c.h.b16 %v3312
        %v3360 = vunpack.c.l.b16 %v3313
        %v3361 = vunpack.c.h.b16 %v3313
        %v3362 = vpack.c.b16 %v3330, %v3330
        %v3363 = vpack.c.b16 %v3331, %v3331
        %v3364 = vpack.c.b16 %v3332, %v3332
        %v3365 = vpack.c.b16 %v3333, %v3333
        %v3366 = vpack.c.b16 %v3334, %v3334
        %v3367 = vpack.c.b16 %v3335, %v3335
        %v3368 = vpack.c.b16 %v3336, %v3336
        %v3369 = vpack.c.b16 %v3337, %v3337
        %v3370 = vpack.c.b16 %v3338, %v3338
        %v3371 = vpack.c.b16 %v3339, %v3339
        %v3372 = vpack.c.b16 %v3340, %v3340
        %v3373 = vpack.c.b16 %v3341, %v3341
        %v3374 = vpack.c.b16 %v3342, %v3342
        %v3375 = vpack.c.b16 %v3343, %v3343
        %v3376 = vpack.c.b16 %v3344, %v3344
        %v3377 = vpack.c.b16 %v3345, %v3345
        %v3378 = vpack.c.b16 %v3346, %v3346
        %v3379 = vpack.c.b16 %v3347, %v3347
        %v3380 = vpack.c.b16 %v3348, %v3348
        %v3381 = vpack.c.b16 %v3349, %v3349
        %v3382 = vpack.c.b16 %v3350, %v3350
        %v3383 = vpack.c.b16 %v3351, %v3351
        %v3384 = vpack.c.b16 %v3352, %v3352
        %v3385 = vpack.c.b16 %v3353, %v3353
        %v3386 = vpack.c.b16 %v3354, %v3354
        %v3387 = vpack.c.b16 %v3355, %v3355
        %v3388 = vpack.c.b16 %v3356, %v3356
        %v3389 = vpack.c.b16 %v3357, %v3357
        %v3390 = vpack.c.b16 %v3358, %v3358
        %v3391 = vpack.c.b16 %v3359, %v3359
        %v3392 = vpack.c.b16 %v3360, %v3360
        %v3393 = vpack.c.b16 %v3361, %v3361
        %3426 = vst [vmem:[%s193] sm:$0xf] %v3362
        %3427 = vst [vmem:[%s193 + $0x4] sm:$0xf] %v3363
        %3428 = vst [vmem:[%s193 + $0x8] sm:$0xf] %v3364
        %3429 = vst [vmem:[%s193 + $0xc] sm:$0xf] %v3365
        %3430 = vst [vmem:[%s193 + $0x10] sm:$0xf] %v3366
        %3431 = vst [vmem:[%s193 + $0x14] sm:$0xf] %v3367
        %3432 = vst [vmem:[%s193 + $0x18] sm:$0xf] %v3368
        %3433 = vst [vmem:[%s193 + $0x1c] sm:$0xf] %v3369
        %3434 = vst [vmem:[%s193 + $0x20] sm:$0xf] %v3370
        %3435 = vst [vmem:[%s193 + $0x24] sm:$0xf] %v3371
        %3436 = vst [vmem:[%s193 + $0x28] sm:$0xf] %v3372
        %3437 = vst [vmem:[%s193 + $0x2c] sm:$0xf] %v3373
        %3438 = vst [vmem:[%s193 + $0x30] sm:$0xf] %v3374
        %3439 = vst [vmem:[%s193 + $0x34] sm:$0xf] %v3375
        %3440 = vst [vmem:[%s193 + $0x38] sm:$0xf] %v3376
        %3441 = vst [vmem:[%s193 + $0x3c] sm:$0xf] %v3377
        %3442 = vst [vmem:[%s193 + $0x40] sm:$0xf] %v3378
        %3443 = vst [vmem:[%s193 + $0x44] sm:$0xf] %v3379
        %3444 = vst [vmem:[%s193 + $0x48] sm:$0xf] %v3380
        %3445 = vst [vmem:[%s193 + $0x4c] sm:$0xf] %v3381
        %3446 = vst [vmem:[%s193 + $0x50] sm:$0xf] %v3382
        %3447 = vst [vmem:[%s193 + $0x54] sm:$0xf] %v3383
        %3448 = vst [vmem:[%s193 + $0x58] sm:$0xf] %v3384
        %3449 = vst [vmem:[%s193 + $0x5c] sm:$0xf] %v3385
        %3450 = vst [vmem:[%s193 + $0x60] sm:$0xf] %v3386
        %3451 = vst [vmem:[%s193 + $0x64] sm:$0xf] %v3387
        %3452 = vst [vmem:[%s193 + $0x68] sm:$0xf] %v3388
        %3453 = vst [vmem:[%s193 + $0x6c] sm:$0xf] %v3389
        %3454 = vst [vmem:[%s193 + $0x70] sm:$0xf] %v3390
        %3455 = vst [vmem:[%s193 + $0x74] sm:$0xf] %v3391
        %3456 = vst [vmem:[%s193 + $0x78] sm:$0xf] %v3392
        %3457 = vst [vmem:[%s193 + $0x7c] sm:$0xf] %v3393
        %v3458 = vadd.f32 %v3266, %v3267
        %v3459 = vadd.f32 %v3458, %v3268
        %v3460 = vadd.f32 %v3459, %v3269
        %v3461 = vadd.f32 %v3460, %v3270
        %v3462 = vadd.f32 %v3461, %v3271
        %v3463 = vadd.f32 %v3462, %v3272
        %v3464 = vadd.f32 %v3463, %v3273
        %v3465 = vadd.f32 %v3464, %v3274
        %v3466 = vadd.f32 %v3465, %v3275
        %v3467 = vadd.f32 %v3466, %v3276
        %v3468 = vadd.f32 %v3467, %v3277
        %v3469 = vadd.f32 %v3468, %v3278
        %v3470 = vadd.f32 %v3469, %v3279
        %v3471 = vadd.f32 %v3470, %v3280
        %v3472 = vadd.f32 %v3471, %v3281
        %v3473 = vadd.f32 %v3472, %v3282
        %v3474 = vadd.f32 %v3473, %v3283
        %v3475 = vadd.f32 %v3474, %v3284
        %v3476 = vadd.f32 %v3475, %v3285
        %v3477 = vadd.f32 %v3476, %v3286
        %v3478 = vadd.f32 %v3477, %v3287
        %v3479 = vadd.f32 %v3478, %v3288
        %v3480 = vadd.f32 %v3479, %v3289
        %v3481 = vadd.f32 %v3480, %v3290
        %v3482 = vadd.f32 %v3481, %v3291
        %v3483 = vadd.f32 %v3482, %v3292
        %v3484 = vadd.f32 %v3483, %v3293
        %v3485 = vadd.f32 %v3484, %v3294
        %v3486 = vadd.f32 %v3485, %v3295
        %v3487 = vadd.f32 %v3486, %v3296
        %v3488 = vadd.f32 %v3487, %v3297
        %v3489 = vrot.slane %v3488, 4
        %v3490 = vadd.f32 %v3488, %v3489
        %v3491 = vrot.slane %v3490, 2
        %v3492 = vadd.f32 %v3490, %v3491
        %v3493 = vrot.slane %v3492, 1
        %v3494 = vadd.f32 %v3492, %v3493
        %v3495 = vmul.f32 %v3266, %v3266
        %v3496 = vmul.f32 %v3267, %v3267
        %v3497 = vmul.f32 %v3268, %v3268
        %v3498 = vmul.f32 %v3269, %v3269
        %v3499 = vmul.f32 %v3270, %v3270
        %v3500 = vmul.f32 %v3271, %v3271
        %v3501 = vmul.f32 %v3272, %v3272
        %v3502 = vmul.f32 %v3273, %v3273
        %v3503 = vmul.f32 %v3274, %v3274
        %v3504 = vmul.f32 %v3275, %v3275
        %v3505 = vmul.f32 %v3276, %v3276
        %v3506 = vmul.f32 %v3277, %v3277
        %v3507 = vmul.f32 %v3278, %v3278
        %v3508 = vmul.f32 %v3279, %v3279
        %v3509 = vmul.f32 %v3280, %v3280
        %v3510 = vmul.f32 %v3281, %v3281
        %v3511 = vmul.f32 %v3282, %v3282
        %v3512 = vmul.f32 %v3283, %v3283
        %v3513 = vmul.f32 %v3284, %v3284
        %v3514 = vmul.f32 %v3285, %v3285
        %v3515 = vmul.f32 %v3286, %v3286
        %v3516 = vmul.f32 %v3287, %v3287
        %v3517 = vmul.f32 %v3288, %v3288
        %v3518 = vmul.f32 %v3289, %v3289
        %v3519 = vmul.f32 %v3290, %v3290
        %v3520 = vmul.f32 %v3291, %v3291
        %v3521 = vmul.f32 %v3292, %v3292
        %v3522 = vmul.f32 %v3293, %v3293
        %v3523 = vmul.f32 %v3294, %v3294
        %v3524 = vmul.f32 %v3295, %v3295
        %v3525 = vmul.f32 %v3296, %v3296
        %v3526 = vmul.f32 %v3297, %v3297
        %v3527 = vadd.f32 %v3495, %v3496
        %v3528 = vadd.f32 %v3527, %v3497
        %v3529 = vadd.f32 %v3528, %v3498
        %v3530 = vadd.f32 %v3529, %v3499
        %v3531 = vadd.f32 %v3530, %v3500
        %v3532 = vadd.f32 %v3531, %v3501
        %v3533 = vadd.f32 %v3532, %v3502
        %v3534 = vadd.f32 %v3533, %v3503
        %v3535 = vadd.f32 %v3534, %v3504
        %v3536 = vadd.f32 %v3535, %v3505
        %v3537 = vadd.f32 %v3536, %v3506
        %v3538 = vadd.f32 %v3537, %v3507
        %v3539 = vadd.f32 %v3538, %v3508
        %v3540 = vadd.f32 %v3539, %v3509
        %v3541 = vadd.f32 %v3540, %v3510
        %v3542 = vadd.f32 %v3541, %v3511
        %v3543 = vadd.f32 %v3542, %v3512
        %v3544 = vadd.f32 %v3543, %v3513
        %v3545 = vadd.f32 %v3544, %v3514
        %v3546 = vadd.f32 %v3545, %v3515
        %v3547 = vadd.f32 %v3546, %v3516
        %v3548 = vadd.f32 %v3547, %v3517
        %v3549 = vadd.f32 %v3548, %v3518
        %v3550 = vadd.f32 %v3549, %v3519
        %v3551 = vadd.f32 %v3550, %v3520
        %v3552 = vadd.f32 %v3551, %v3521
        %v3553 = vadd.f32 %v3552, %v3522
        %v3554 = vadd.f32 %v3553, %v3523
        %v3555 = vadd.f32 %v3554, %v3524
        %v3556 = vadd.f32 %v3555, %v3525
        %v3557 = vadd.f32 %v3556, %v3526
        %v3558 = vrot.slane %v3557, 4
        %v3559 = vadd.f32 %v3557, %v3558
        %v3560 = vrot.slane %v3559, 2
        %v3561 = vadd.f32 %v3559, %v3560
        %v3562 = vrot.slane %v3561, 1
        %v3563 = vadd.f32 %v3561, %v3562
        %vm3564 = vcmask 1040384
        %v3565 = vsel %vm3564, %v3494, %v3563
        %3566 = vst [vmem:[%s200] sm:$0x3] %v3565
        %s3567 = sand.u32 %s92, 1
        %s3568 = scalar_lea.sflag [#allocation4], %s3567
        %s3569 = sand.u32 %s92, 1
        %s3570 = smul.addr %s3569, 128
        %s3571 = scalar_lea.vmem [#allocation3], %s3570
        %s3572 = sand.u32 %s120, 1
        %s3573 = scalar_lea.sflag [#allocation6], %s3572
        %s3574 = sand.u32 %s120, 1
        %s3575 = smul.addr %s3574, 2
        %s3576 = scalar_lea.vmem [#allocation5], %s3575
        // Predicated region
        $region29: #{tpu_custom_call.1} parent=27 // pred_check
          %p3577 = pneg %p102
        $region30: #{tpu_custom_call.1} parent=27 // pred_check_branch
          %3579 = sbr.rel (%p3577) target = $region32
        $region31: #{tpu_custom_call.1} parent=27 // pred_region
          %s3580 = sadd.s32 %s25, %s26
          %s3581 = smul.u32 32, %s3580
          %s3583 = ssub.s32 2048, 2048
          %3584 = vsyncadd %s3568, %s3583
          %s3585 = smul.addr %s3581, 64
          %s3586 = scalar_lea.hbm %s2, %s3585
          %s3587 = sshll.u32 %s3571, 4
          %s3588 = int_to_ptr.vmem [resolvable:$true] %s3587
          %3593 = dma.vmem_to_hbm [thread:$0]  %s3588, 2048, %s3586, %s3568, 64, 64, 4
        $region32: #{tpu_custom_call.1} parent=27 // pred_fallthru
          _
        // Predicated region
        $region33: #{tpu_custom_call.1} parent=27 // pred_check
          %p3594 = pneg %p130
        $region34: #{tpu_custom_call.1} parent=27 // pred_check_branch
          %3596 = sbr.rel (%p3594) target = $region36
        $region35: #{tpu_custom_call.1} parent=27 // pred_region
          %s3597 = sadd.s32 %s25, %s26
          %s3599 = ssub.s32 32, 32
          %3600 = vsyncadd %s3573, %s3599
          %s3601 = smul.addr %s3597, 32
          %s3602 = scalar_lea.hbm %s3, %s3601
          %s3604 = sshll.u32 %s3576, 4
          %s3605 = int_to_ptr.vmem [resolvable:$true] %s3604
          %3607 = dma.vmem_to_hbm [thread:$0]  %s3605, 32, %s3602, %s3573
        $region36: #{tpu_custom_call.1} parent=27 // pred_fallthru
          _
      $region28: #{tpu_custom_call.1} parent=5 // pred_fallthru
        _
      %p3608 = scmp.le.s32.totalorder 2, %s16
      // Predicated region
      $region37: #{tpu_custom_call.1} parent=5 // pred_check
        %p3609 = pneg %p3608
      $region38: #{tpu_custom_call.1} parent=5 // pred_check_branch
        %3611 = sbr.rel (%p3609) target = $region40
      $region39: #{tpu_custom_call.1} parent=5 // pred_region
        %s3612 = ssub.s32 %s16, 2
        // Predicated region
        $region41: #{tpu_custom_call.1} parent=39 // pred_check
          %p3613 = pneg %p108
        $region42: #{tpu_custom_call.1} parent=39 // pred_check_branch
          %3615 = sbr.rel (%p3613) target = $region44
        $region43: #{tpu_custom_call.1} parent=39 // pred_region
          %s3616 = sand.u32 %s93, 1
          %s3617 = scalar_lea.sflag [#allocation4], %s3616
          %s3618 = sand.u32 %s93, 1
          %s3619 = smul.addr %s3618, 128
          %s3620 = scalar_lea.vmem [#allocation3], %s3619
          %3621 = dma.done %s3617, 2048
        $region44: #{tpu_custom_call.1} parent=39 // pred_fallthru
          _
        // Predicated region
        $region45: #{tpu_custom_call.1} parent=39 // pred_check
          %p3622 = pneg %p136
        $region46: #{tpu_custom_call.1} parent=39 // pred_check_branch
          %3624 = sbr.rel (%p3622) target = $region48
        $region47: #{tpu_custom_call.1} parent=39 // pred_region
          %s3625 = sand.u32 %s121, 1
          %s3626 = scalar_lea.sflag [#allocation6], %s3625
          %s3627 = sand.u32 %s121, 1
          %s3628 = smul.addr %s3627, 2
          %s3629 = scalar_lea.vmem [#allocation5], %s3628
          %3630 = dma.done %s3626, 32
        $region48: #{tpu_custom_call.1} parent=39 // pred_fallthru
          _
      $region40: #{tpu_custom_call.1} parent=5 // pred_fallthru
        _
    $region6: #{tpu_custom_call.1} parent=1 // loop_footer
      %s20 = sadd.s32 1, %s16
    $region7: #{tpu_custom_call.1} parent=1 // loop_footer_branch
      %15 = sbr.rel target = $region3
    $region8: #{tpu_custom_call.1} parent=1 // loop_exit
      _
    %3631 = vsyncpa [#allocation4], 1
    %s3632 = scalar_lea.sflag [#allocation4], 1
    %3633 = vsyncpa %s3632, 1
    %3634 = vsyncpa [#allocation6], 1
    %s3635 = scalar_lea.sflag [#allocation6], 1
    %3636 = vsyncpa %s3635, 1

</llo_original>
